<compile_context>
chip_gen: v5e
topology: v5e:2x2
jax: 0.10.0
libtpu: 0.0.40
codegen_flags: <defaults>
</compile_context>

<pallas_src>
import functools

import jax
import jax.numpy as jnp
import numpy as np
from jax import lax
from jax.experimental import pallas as pl
from jax.experimental.pallas import tpu as pltpu


# --------------------------------------------------------------------------- #
# Pallas kernel
# --------------------------------------------------------------------------- #
def _ghostcsp_kernel(x_ref, m_ref,
                     w_cv1, b_cv1, w_cv2, b_cv2, s_dwc, b_dwc,
                     w_g1, b_g1, w_fc1, b_fc1, w_fc2, b_fc2,
                     w_g2, b_g2, w_c3, b_c3, s_bn2, b_bn2,
                     o_ref, sh1, sh2, *, H, W, bt, reps):
    f32, bf16 = jnp.float32, jnp.bfloat16
    HW = H * W
    L = bt * HW                                          # lanes = bt images * H*W
    x = x_ref[0]                                         # (c1, L) f32

    def mm(w, a):                                        # MXU matmul, f32 accumulate
        return jnp.dot(w, a, preferred_element_type=f32)

    def sig(v):
        return 1.0 / (1.0 + jnp.exp(-v))

    def silu(v):
        return v * sig(v)

    def fill_shifts(src, scr):
        # scr[t*cin:(t+1)*cin, :] = zero-padded shift of src by (di, dj),
        # tap index t = (di+2)*5 + (dj+2).  Masks are tiled per image, so any
        # roll that crosses an image boundary lands on a masked-zero position.
        cin = src.shape[0]
        for di in range(-2, 3):
            for dj in range(-2, 3):
                t = (di + 2) * 5 + (dj + 2)
                if (di, dj) == (0, 0):
                    sh = src
                else:
                    off = di * W + dj
                    sh = pltpu.roll(src, shift=(-off) % L, axis=1)
                    sh = sh * m_ref[t:t + 1, :]
                scr[t * cin:(t + 1) * cin, :] = sh.astype(bf16)

    def ghost(src, scr, w_fused, bias_full):
        # fused ghost module: one (Cout, 25*Cin) @ (25*Cin, L) bf16 matmul
        # covers the dense 3x3 branch AND the grouped 5x5 branch (row-stacked),
        # so torch.cat([cv1(x), cv2(x)], 1) is the natural row order.
        fill_shifts(src, scr)
        return silu(mm(w_fused, scr[...]) + bias_full)

    # cv1 / cv2: 1x1 conv + folded BN + SiLU (bf16 operands)
    x_bf = x.astype(bf16)
    a = silu(mm(w_cv1[...], x_bf) + b_cv1[...])          # (c_, L)
    y = silu(mm(w_cv2[...], x_bf) + b_cv2[...])          # (c_, L)

    cb = w_g1.shape[0]
    c_ = w_g2.shape[0]

    # rep-invariant loads / broadcasts hoisted out of the reps loop
    Wg1 = w_g1[...]
    Wg2 = w_g2[...]
    Wfc1, Bfc1 = w_fc1[...], b_fc1[...]
    Wfc2, Bfc2 = w_fc2[...], b_fc2[...]
    Bg1 = jnp.broadcast_to(b_g1[...], (cb, L))
    Bg2 = jnp.broadcast_to(b_g2[...], (c_, L))
    Sdw = jnp.broadcast_to(s_dwc[...], (c_, L))
    Bdw = jnp.broadcast_to(b_dwc[...], (c_, L))

    cur = a
    acc = None
    for _ in range(reps):                                # n = 3 * reps, shared weights
        # ghost_dwconv: depthwise 1x1 conv + BN + ReLU == per-channel affine
        d = jnp.maximum(cur * Sdw + Bdw, 0.0)
        acc = d if acc is None else acc + d

        # ghostbottleneck2: ghostmodule -> SeBlock -> Identity -> ghostmodule
        g1 = ghost(cur, sh1, Wg1, Bg1)                   # (cb, L)

        # SeBlock: reduce first (per-image mean over HW), then two tiny FCs
        means = jnp.concatenate(
            [jnp.mean(g1[:, b * HW:(b + 1) * HW], axis=1, keepdims=True)
             for b in range(bt)], axis=1)                # (cb, bt)
        h = jnp.maximum(mm(Wfc1, means) + Bfc1, 0.0)     # (cse, bt)
        sg = sig(mm(Wfc2, h) + Bfc2)                     # (cb, bt)
        gate = jnp.concatenate(
            [jnp.broadcast_to(sg[:, b:b + 1], (cb, HW)) for b in range(bt)],
            axis=1)                                      # (cb, L)

        cur = ghost(g1 * gate, sh2, Wg2, Bg2)            # (c_, L)

    x_in = cur + acc

    # cv3 on the channel concat [x_input, y] (single matmul) + BN + SiLU,
    # then the trailing bn + ReLU
    z = jnp.concatenate([x_in, y], axis=0).astype(bf16)  # (2*c_, L)
    t = silu(mm(w_c3[...], z) + b_c3[...])
    o_ref[0] = jnp.maximum(t * s_bn2[...] + b_bn2[...], 0.0).astype(o_ref.dtype)


# --------------------------------------------------------------------------- #
# Wrapper
# --------------------------------------------------------------------------- #
_W_NAMES = ["w_cv1", "b_cv1", "w_cv2", "b_cv2", "s_dwc", "b_dwc",
            "w_g1", "b_g1", "w_fc1", "b_fc1", "w_fc2", "b_fc2",
            "w_g2", "b_g2", "w_c3", "b_c3", "s_bn2", "b_bn2"]


def _pick_bt(batch, min_steps=2):
    """Images folded into the lane axis per grid step, keeping at least
    `min_steps` parallel grid steps so v7x's two TensorCores stay busy."""
    best = 1
    for bt in range(1, batch + 1):
        if batch % bt == 0 and batch // bt >= min(min_steps, batch):
            best = bt
    return best


def none_dense_ghostcsp_forward(x_nchw, kp, *, n=3, images_per_step=None):
    assert n in (3, 6, 9)
    B, c1, H, W = x_nchw.shape
    HW = H * W
    c2 = kp["s_bn2"].shape[0]
    c_ = kp["w_cv1"].shape[0]
    cb = kp["w_g1"].shape[0]

    bt = images_per_step or _pick_bt(B)
    assert B % bt == 0
    G = B // bt
    L = bt * HW

    # channel-major with batch folded into the lane axis: (G, c1, bt*HW)
    x = x_nchw.astype(jnp.float32).reshape(G, bt, c1, HW)
    x = x.transpose(0, 2, 1, 3).reshape(G, c1, L)

    # per-image zero-pad masks tiled across the bt images in each block
    masks = jnp.tile(jnp.asarray(kp["masks"], jnp.float32), (1, bt))   # (25, L)

    consts = [masks] + [kp[k] for k in _W_NAMES]

    def const_spec(arr):
        nd = arr.ndim
        return pl.BlockSpec(arr.shape, lambda g, nd=nd: (0,) * nd)

    kern = functools.partial(_ghostcsp_kernel, H=H, W=W, bt=bt, reps=n // 3)
    out = pl.pallas_call(
        kern,
        out_shape=jax.ShapeDtypeStruct((G, c2, L), jnp.float32),
        grid=(G,),
        in_specs=[pl.BlockSpec((1, c1, L), lambda g: (g, 0, 0))]
                 + [const_spec(a) for a in consts],
        out_specs=pl.BlockSpec((1, c2, L), lambda g: (g, 0, 0)),
        scratch_shapes=[pltpu.VMEM((25 * c_, L), jnp.bfloat16),   # gm1 shifted copies
                        pltpu.VMEM((25 * cb, L), jnp.bfloat16)],  # gm2 shifted copies
        compiler_params=pltpu.CompilerParams(
            dimension_semantics=("parallel",)),
    )(x, *consts)

    out = out.reshape(G, c2, bt, HW).transpose(0, 2, 1, 3)
    return out.reshape(B, c2, H, W)


# --------------------------------------------------------------------------- #
# Parameter construction (raw torch-style params + folding/fusing for kernel)
# --------------------------------------------------------------------------- #
def init_params(key, c1, c2):
    assert c2 % 16 == 0, "need c2 % 16 == 0 so every sub-module has >= 1 channel"
    c_ = c2 // 2          # cv1/cv2 width
    cb = c_ // 2          # ghostbottleneck inner width
    cg = cb // 2          # first ghostmodule half-width
    cse = cb // 4         # SeBlock squeeze width
    ipg = c_ // cg        # in-channels per group for gm1.cv2

    ks = iter(jax.random.split(key, 64))

    def w(shape, fan_in):
        return jax.random.normal(next(ks), shape, jnp.float32) / np.sqrt(fan_in)

    def bn(c):
        return (1.0 + 0.1 * jax.random.normal(next(ks), (c,), jnp.float32),
                0.1 * jax.random.normal(next(ks), (c,), jnp.float32),
                0.1 * jax.random.normal(next(ks), (c,), jnp.float32),
                jax.random.uniform(next(ks), (c,), jnp.float32,
                                   minval=0.5, maxval=1.5))

    return dict(
        cv1_w=w((c_, c1), c1), cv1_bn=bn(c_),
        cv2_w=w((c_, c1), c1), cv2_bn=bn(c_),
        cv3_w=w((c2, 2 * c_), 2 * c_), cv3_bn=bn(c2),
        dwc_w=w((c_,), 1), dwc_bn=bn(c_),
        g1a_w=w((cg, c_, 3, 3), c_ * 9), g1a_bn=bn(cg),
        g1b_w=w((cg, ipg, 5, 5), ipg * 25), g1b_bn=bn(cg),
        fc1_w=w((cse, cb), cb),
        fc1_b=0.1 * jax.random.normal(next(ks), (cse,), jnp.float32),
        fc2_w=w((cb, cse), cse),
        fc2_b=0.1 * jax.random.normal(next(ks), (cb,), jnp.float32),
        g2a_w=w((cb, cb, 3, 3), cb * 9), g2a_bn=bn(cb),
        g2b_w=w((cb, 1, 5, 5), 25), g2b_bn=bn(cb),
        bn2=bn(c2),
    )


def _fold_bn(bnp, eps=1e-5):
    g, b, m, v = bnp
    s = g / jnp.sqrt(v + eps)
    return s, b - m * s


def _shift_masks(H, W):
    h = np.arange(H)[:, None]
    w = np.arange(W)[None, :]
    masks = []
    for di in range(-2, 3):
        for dj in range(-2, 3):
            m = ((h + di >= 0) & (h + di < H) & (w + dj >= 0) & (w + dj < W))
            masks.append(m.astype(np.float32).reshape(-1))
    return jnp.asarray(np.stack(masks))          # (25, H*W)


def prepare_kernel_params(P, H, W):
    bf16 = jnp.bfloat16
    c_ = P["cv1_w"].shape[0]
    cg = P["g1a_w"].shape[0]
    cb = P["g2a_w"].shape[0]
    ipg = P["g1b_w"].shape[1]

    def fold1x1(w2d, bnp):
        s, bshift = _fold_bn(bnp)
        return (w2d * s[:, None]).astype(bf16), bshift[:, None]

    def embed3(w3):                    # (O,I,3,3) -> zero-padded (O,I,5,5)
        O, I = w3.shape[:2]
        return jnp.zeros((O, I, 5, 5), jnp.float32).at[:, :, 1:4, 1:4].set(w3)

    def fuse(w55, scale):              # (O,I,5,5) -> (O, 25*I), tap-major columns
        O, I = w55.shape[:2]
        wf = w55 * scale[:, None, None, None]
        return wf.transpose(0, 2, 3, 1).reshape(O, 25 * I)

    # ghost module 1: dense 3x3 (c_ -> cg)  ||  grouped 5x5 (c_ -> cg, groups=cg)
    s1, bias1 = _fold_bn(P["g1a_bn"])
    s2, bias2 = _fold_bn(P["g1b_bn"])
    dense1 = jnp.zeros((cg, c_, 5, 5), jnp.float32)
    for o in range(cg):
        dense1 = dense1.at[o, o * ipg:(o + 1) * ipg].set(P["g1b_w"][o])
    w_g1 = jnp.concatenate([fuse(embed3(P["g1a_w"]), s1), fuse(dense1, s2)], axis=0)
    b_g1 = jnp.concatenate([bias1, bias2])[:, None]

    # ghost module 2: dense 3x3 (cb -> cb)  ||  depthwise 5x5 (cb -> cb)
    s3, bias3 = _fold_bn(P["g2a_bn"])
    s4, bias4 = _fold_bn(P["g2b_bn"])
    dense2 = jnp.zeros((cb, cb, 5, 5), jnp.float32)
    for o in range(cb):
        dense2 = dense2.at[o, o].set(P["g2b_w"][o, 0])
    w_g2 = jnp.concatenate([fuse(embed3(P["g2a_w"]), s3), fuse(dense2, s4)], axis=0)
    b_g2 = jnp.concatenate([bias3, bias4])[:, None]

    w_cv1, b_cv1 = fold1x1(P["cv1_w"], P["cv1_bn"])
    w_cv2, b_cv2 = fold1x1(P["cv2_w"], P["cv2_bn"])
    w_c3, b_c3 = fold1x1(P["cv3_w"], P["cv3_bn"])
    sd, bd = _fold_bn(P["dwc_bn"])
    s_bn2, b_bn2 = _fold_bn(P["bn2"])

    return dict(
        masks=_shift_masks(H, W),                       # (25, H*W) f32
        w_cv1=w_cv1, b_cv1=b_cv1, w_cv2=w_cv2, b_cv2=b_cv2,
        s_dwc=(P["dwc_w"] * sd)[:, None], b_dwc=bd[:, None],
        w_g1=w_g1.astype(bf16), b_g1=b_g1,
        w_fc1=P["fc1_w"], b_fc1=P["fc1_b"][:, None],
        w_fc2=P["fc2_w"], b_fc2=P["fc2_b"][:, None],
        w_g2=w_g2.astype(bf16), b_g2=b_g2,
        w_c3=w_c3, b_c3=b_c3,
        s_bn2=s_bn2[:, None], b_bn2=b_bn2[:, None],
    )


# --------------------------------------------------------------------------- #
# Pure-JAX reference of the PyTorch forward (inference-mode BN)
# --------------------------------------------------------------------------- #
def ref_forward(x, P, n):
    eps = 1e-5
    relu, silu = jax.nn.relu, jax.nn.silu

    def bn(v, p):
        g, b, m, var = p
        s = g / jnp.sqrt(var + eps)
        return v * s[None, :, None, None] + (b - m * s)[None, :, None, None]

    def conv(v, w4, pad, groups=1):
        return lax.conv_general_dilated(
            v, w4, (1, 1), [(pad, pad), (pad, pad)],
            dimension_numbers=("NCHW", "OIHW", "NCHW"),
            feature_group_count=groups, precision=lax.Precision.HIGHEST)

    def cv1x1(v, w2d, bnp):
        return silu(bn(conv(v, w2d[:, :, None, None], 0), bnp))

    a = cv1x1(x, P["cv1_w"], P["cv1_bn"])
    y = cv1x1(x, P["cv2_w"], P["cv2_bn"])

    def dwconv(v):
        w4 = P["dwc_w"][:, None, None, None]
        return relu(bn(conv(v, w4, 0, groups=v.shape[1]), P["dwc_bn"]))

    def ghost1(v):
        u = silu(bn(conv(v, P["g1a_w"], 1), P["g1a_bn"]))
        t = silu(bn(conv(v, P["g1b_w"], 2, groups=P["g1b_w"].shape[0]),
                    P["g1b_bn"]))
        return jnp.concatenate([u, t], axis=1)

    def seblock(v):
        p = jnp.mean(v, axis=(2, 3), keepdims=True)
        h = relu(conv(p, P["fc1_w"][:, :, None, None], 0)
                 + P["fc1_b"][None, :, None, None])
        s = jax.nn.sigmoid(conv(h, P["fc2_w"][:, :, None, None], 0)
                           + P["fc2_b"][None, :, None, None])
        return v * s

    def ghost2(v):
        u = silu(bn(conv(v, P["g2a_w"], 1), P["g2a_bn"]))
        t = silu(bn(conv(v, P["g2b_w"], 2, groups=v.shape[1]), P["g2b_bn"]))
        return jnp.concatenate([u, t], axis=1)

    cur, acc = a, jnp.zeros_like(a)
    for _ in range(n // 3):
        acc = acc + dwconv(cur)
        cur = ghost2(seblock(ghost1(cur)))
    x_input = cur + acc

    z = jnp.concatenate([x_input, y], axis=1)
    t = silu(bn(conv(z, P["cv3_w"][:, :, None, None], 0), P["cv3_bn"]))
    return relu(bn(t, P["bn2"]))


# --------------------------------------------------------------------------- #
if __name__ == "__main__":
    key = jax.random.PRNGKey(0)
    kx, kp = jax.random.split(key)

    B, C, H, W = 4, 16, 16, 16          # NCHW; c1 == c2 == 16 (c2 must be % 16)
    n = 3
    x = jax.random.normal(kx, (B, C, H, W), jnp.float32)

    P = init_params(kp, C, C)
    kparams = prepare_kernel_params(P, H, W)

    # B=4 -> 2 parallel grid steps of 2 images folded into the lane axis each;
    # this exercises rolls crossing image boundaries within a block.
    out = jax.block_until_ready(none_dense_ghostcsp_forward(x, kparams, n=n))
    ref = jax.block_until_ready(ref_forward(x, P, n))

    assert out.shape == ref.shape == (B, C, H, W)
    # Kernel matmuls use bf16 operands (same error profile as default-precision
    # f32 MXU dots); reference uses HIGHEST, so tolerances are set accordingly.
    np.testing.assert_allclose(np.asarray(out), np.asarray(ref),
                               rtol=5e-2, atol=5e-2)
    print("KERNEL_OK")
</pallas_src>

<mosaic_0001>
module attributes {stable_mosaic.version = 11 : i64} {
  func.func @_ghostcsp_kernel(%arg0: i32, %arg1: memref<1x16x512xf32, #tpu.memory_space<vmem>>, %arg2: memref<25x512xf32, #tpu.memory_space<vmem>>, %arg3: memref<8x16xbf16, #tpu.memory_space<vmem>>, %arg4: memref<8x1xf32, #tpu.memory_space<vmem>>, %arg5: memref<8x16xbf16, #tpu.memory_space<vmem>>, %arg6: memref<8x1xf32, #tpu.memory_space<vmem>>, %arg7: memref<8x1xf32, #tpu.memory_space<vmem>>, %arg8: memref<8x1xf32, #tpu.memory_space<vmem>>, %arg9: memref<4x200xbf16, #tpu.memory_space<vmem>>, %arg10: memref<4x1xf32, #tpu.memory_space<vmem>>, %arg11: memref<1x4xf32, #tpu.memory_space<vmem>>, %arg12: memref<1x1xf32, #tpu.memory_space<vmem>>, %arg13: memref<4x1xf32, #tpu.memory_space<vmem>>, %arg14: memref<4x1xf32, #tpu.memory_space<vmem>>, %arg15: memref<8x100xbf16, #tpu.memory_space<vmem>>, %arg16: memref<8x1xf32, #tpu.memory_space<vmem>>, %arg17: memref<16x16xbf16, #tpu.memory_space<vmem>>, %arg18: memref<16x1xf32, #tpu.memory_space<vmem>>, %arg19: memref<16x1xf32, #tpu.memory_space<vmem>>, %arg20: memref<16x1xf32, #tpu.memory_space<vmem>>, %arg21: memref<1x16x512xf32, #tpu.memory_space<vmem>>, %arg22: memref<200x512xbf16, #tpu.memory_space<vmem>>, %arg23: memref<100x512xbf16, #tpu.memory_space<vmem>>) attributes {dimension_semantics = [#tpu.dimension_semantics<parallel>], iteration_bounds = array<i64: 2>, scalar_prefetch = 0 : i64, scratch_operands = 2 : i64, tpu.core_type = #tpu.core_type<tc>, window_params = [{transform_indices = @transform_0, window_bounds = array<i64: 1, 16, 512>}, {pipeline_mode = #tpu.pipeline_mode<synchronous>, transform_indices = @transform_1, window_bounds = array<i64: 25, 512>}, {pipeline_mode = #tpu.pipeline_mode<synchronous>, transform_indices = @transform_2, window_bounds = array<i64: 8, 16>}, {pipeline_mode = #tpu.pipeline_mode<synchronous>, transform_indices = @transform_3, window_bounds = array<i64: 8, 1>}, {pipeline_mode = #tpu.pipeline_mode<synchronous>, transform_indices = @transform_4, window_bounds = array<i64: 8, 16>}, {pipeline_mode = #tpu.pipeline_mode<synchronous>, transform_indices = @transform_5, window_bounds = array<i64: 8, 1>}, {pipeline_mode = #tpu.pipeline_mode<synchronous>, transform_indices = @transform_6, window_bounds = array<i64: 8, 1>}, {pipeline_mode = #tpu.pipeline_mode<synchronous>, transform_indices = @transform_7, window_bounds = array<i64: 8, 1>}, {pipeline_mode = #tpu.pipeline_mode<synchronous>, transform_indices = @transform_8, window_bounds = array<i64: 4, 200>}, {pipeline_mode = #tpu.pipeline_mode<synchronous>, transform_indices = @transform_9, window_bounds = array<i64: 4, 1>}, {pipeline_mode = #tpu.pipeline_mode<synchronous>, transform_indices = @transform_10, window_bounds = array<i64: 1, 4>}, {pipeline_mode = #tpu.pipeline_mode<synchronous>, transform_indices = @transform_11, window_bounds = array<i64: 1, 1>}, {pipeline_mode = #tpu.pipeline_mode<synchronous>, transform_indices = @transform_12, window_bounds = array<i64: 4, 1>}, {pipeline_mode = #tpu.pipeline_mode<synchronous>, transform_indices = @transform_13, window_bounds = array<i64: 4, 1>}, {pipeline_mode = #tpu.pipeline_mode<synchronous>, transform_indices = @transform_14, window_bounds = array<i64: 8, 100>}, {pipeline_mode = #tpu.pipeline_mode<synchronous>, transform_indices = @transform_15, window_bounds = array<i64: 8, 1>}, {pipeline_mode = #tpu.pipeline_mode<synchronous>, transform_indices = @transform_16, window_bounds = array<i64: 16, 16>}, {pipeline_mode = #tpu.pipeline_mode<synchronous>, transform_indices = @transform_17, window_bounds = array<i64: 16, 1>}, {pipeline_mode = #tpu.pipeline_mode<synchronous>, transform_indices = @transform_18, window_bounds = array<i64: 16, 1>}, {pipeline_mode = #tpu.pipeline_mode<synchronous>, transform_indices = @transform_19, window_bounds = array<i64: 16, 1>}, {transform_indices = @transform_20, window_bounds = array<i64: 1, 16, 512>}]} {
    %c0 = arith.constant 0 : index
    %c0_0 = arith.constant 0 : index
    %c0_1 = arith.constant 0 : index
    %0 = vector.load %arg1[%c0, %c0_0, %c0_1] : memref<1x16x512xf32, #tpu.memory_space<vmem>>, vector<1x16x512xf32>
    %1 = vector.shape_cast %0 : vector<1x16x512xf32> to vector<16x512xf32>
    %2 = arith.truncf %1 : vector<16x512xf32> to vector<16x512xbf16>
    %c0_2 = arith.constant 0 : index
    %c0_3 = arith.constant 0 : index
    %3 = vector.load %arg3[%c0_2, %c0_3] : memref<8x16xbf16, #tpu.memory_space<vmem>>, vector<8x16xbf16>
    %cst = arith.constant dense<0.000000e+00> : vector<8x512xf32>
    %4 = tpu.matmul %3, %2, %cst {dimension_numbers = #tpu.dot_dimension_numbers<[1], [0], [0], [1], [0, 0, 1, 1], [], []>} : vector<8x16xbf16>, vector<16x512xbf16>, vector<8x512xf32> -> vector<8x512xf32>
    %c0_4 = arith.constant 0 : index
    %c0_5 = arith.constant 0 : index
    %5 = vector.load %arg4[%c0_4, %c0_5] : memref<8x1xf32, #tpu.memory_space<vmem>>, vector<8x1xf32>
    %6 = vector.broadcast %5 : vector<8x1xf32> to vector<8x512xf32>
    %7 = arith.addf %4, %6 : vector<8x512xf32>
    %cst_6 = arith.constant 0.000000e+00 : f32
    %8 = vector.broadcast %cst_6 : f32 to vector<8x512xf32>
    %9 = arith.subf %8, %7 : vector<8x512xf32>
    %10 = math.exp %9 : vector<8x512xf32>
    %cst_7 = arith.constant 1.000000e+00 : f32
    %11 = vector.broadcast %cst_7 : f32 to vector<8x512xf32>
    %12 = arith.addf %11, %10 : vector<8x512xf32>
    %cst_8 = arith.constant 1.000000e+00 : f32
    %13 = vector.broadcast %cst_8 : f32 to vector<8x512xf32>
    %14 = arith.divf %13, %12 : vector<8x512xf32>
    %15 = arith.mulf %7, %14 : vector<8x512xf32>
    %c0_9 = arith.constant 0 : index
    %c0_10 = arith.constant 0 : index
    %16 = vector.load %arg5[%c0_9, %c0_10] : memref<8x16xbf16, #tpu.memory_space<vmem>>, vector<8x16xbf16>
    %cst_11 = arith.constant dense<0.000000e+00> : vector<8x512xf32>
    %17 = tpu.matmul %16, %2, %cst_11 {dimension_numbers = #tpu.dot_dimension_numbers<[1], [0], [0], [1], [0, 0, 1, 1], [], []>} : vector<8x16xbf16>, vector<16x512xbf16>, vector<8x512xf32> -> vector<8x512xf32>
    %c0_12 = arith.constant 0 : index
    %c0_13 = arith.constant 0 : index
    %18 = vector.load %arg6[%c0_12, %c0_13] : memref<8x1xf32, #tpu.memory_space<vmem>>, vector<8x1xf32>
    %19 = vector.broadcast %18 : vector<8x1xf32> to vector<8x512xf32>
    %20 = arith.addf %17, %19 : vector<8x512xf32>
    %cst_14 = arith.constant 0.000000e+00 : f32
    %21 = vector.broadcast %cst_14 : f32 to vector<8x512xf32>
    %22 = arith.subf %21, %20 : vector<8x512xf32>
    %23 = math.exp %22 : vector<8x512xf32>
    %cst_15 = arith.constant 1.000000e+00 : f32
    %24 = vector.broadcast %cst_15 : f32 to vector<8x512xf32>
    %25 = arith.addf %24, %23 : vector<8x512xf32>
    %cst_16 = arith.constant 1.000000e+00 : f32
    %26 = vector.broadcast %cst_16 : f32 to vector<8x512xf32>
    %27 = arith.divf %26, %25 : vector<8x512xf32>
    %28 = arith.mulf %20, %27 : vector<8x512xf32>
    %c0_17 = arith.constant 0 : index
    %c0_18 = arith.constant 0 : index
    %29 = vector.load %arg9[%c0_17, %c0_18] : memref<4x200xbf16, #tpu.memory_space<vmem>>, vector<4x200xbf16>
    %c0_19 = arith.constant 0 : index
    %c0_20 = arith.constant 0 : index
    %30 = vector.load %arg15[%c0_19, %c0_20] : memref<8x100xbf16, #tpu.memory_space<vmem>>, vector<8x100xbf16>
    %c0_21 = arith.constant 0 : index
    %c0_22 = arith.constant 0 : index
    %31 = vector.load %arg11[%c0_21, %c0_22] : memref<1x4xf32, #tpu.memory_space<vmem>>, vector<1x4xf32>
    %c0_23 = arith.constant 0 : index
    %c0_24 = arith.constant 0 : index
    %32 = vector.load %arg12[%c0_23, %c0_24] : memref<1x1xf32, #tpu.memory_space<vmem>>, vector<1x1xf32>
    %c0_25 = arith.constant 0 : index
    %c0_26 = arith.constant 0 : index
    %33 = vector.load %arg13[%c0_25, %c0_26] : memref<4x1xf32, #tpu.memory_space<vmem>>, vector<4x1xf32>
    %c0_27 = arith.constant 0 : index
    %c0_28 = arith.constant 0 : index
    %34 = vector.load %arg14[%c0_27, %c0_28] : memref<4x1xf32, #tpu.memory_space<vmem>>, vector<4x1xf32>
    %c0_29 = arith.constant 0 : index
    %c0_30 = arith.constant 0 : index
    %35 = vector.load %arg10[%c0_29, %c0_30] : memref<4x1xf32, #tpu.memory_space<vmem>>, vector<4x1xf32>
    %36 = vector.shape_cast %35 : vector<4x1xf32> to vector<4x1xf32>
    %37 = vector.broadcast %36 : vector<4x1xf32> to vector<4x512xf32>
    %c0_31 = arith.constant 0 : index
    %c0_32 = arith.constant 0 : index
    %38 = vector.load %arg16[%c0_31, %c0_32] : memref<8x1xf32, #tpu.memory_space<vmem>>, vector<8x1xf32>
    %39 = vector.shape_cast %38 : vector<8x1xf32> to vector<8x1xf32>
    %40 = vector.broadcast %39 : vector<8x1xf32> to vector<8x512xf32>
    %c0_33 = arith.constant 0 : index
    %c0_34 = arith.constant 0 : index
    %41 = vector.load %arg7[%c0_33, %c0_34] : memref<8x1xf32, #tpu.memory_space<vmem>>, vector<8x1xf32>
    %42 = vector.shape_cast %41 : vector<8x1xf32> to vector<8x1xf32>
    %43 = vector.broadcast %42 : vector<8x1xf32> to vector<8x512xf32>
    %c0_35 = arith.constant 0 : index
    %c0_36 = arith.constant 0 : index
    %44 = vector.load %arg8[%c0_35, %c0_36] : memref<8x1xf32, #tpu.memory_space<vmem>>, vector<8x1xf32>
    %45 = vector.shape_cast %44 : vector<8x1xf32> to vector<8x1xf32>
    %46 = vector.broadcast %45 : vector<8x1xf32> to vector<8x512xf32>
    %47 = arith.mulf %15, %43 : vector<8x512xf32>
    %48 = arith.addf %47, %46 : vector<8x512xf32>
    %cst_37 = arith.constant 0.000000e+00 : f32
    %49 = vector.broadcast %cst_37 : f32 to vector<8x512xf32>
    %50 = arith.maximumf %48, %49 : vector<8x512xf32>
    %c34_i32 = arith.constant 34 : i32
    %51 = tpu.dynamic_rotate %15 by %c34_i32 dim 1 : vector<8x512xf32>, i32 -> vector<8x512xf32>
    %c0_38 = arith.constant 0 : index
    %c0_39 = arith.constant 0 : index
    %52 = vector.load %arg2[%c0_38, %c0_39] : memref<25x512xf32, #tpu.memory_space<vmem>>, vector<1x512xf32>
    %53 = vector.broadcast %52 : vector<1x512xf32> to vector<8x512xf32>
    %54 = arith.mulf %51, %53 : vector<8x512xf32>
    %55 = arith.truncf %54 : vector<8x512xf32> to vector<8x512xbf16>
    %c0_40 = arith.constant 0 : index
    %c0_41 = arith.constant 0 : index
    %56 = vector.load %arg22[%c0_40, %c0_41] : memref<200x512xbf16, #tpu.memory_space<vmem>>, vector<8x512xbf16>
    tpu.vector_store %arg22[%c0_40, %c0_41], %55 {strides = array<i32>} : memref<200x512xbf16, #tpu.memory_space<vmem>>, vector<8x512xbf16>,
    %c33_i32 = arith.constant 33 : i32
    %57 = tpu.dynamic_rotate %15 by %c33_i32 dim 1 : vector<8x512xf32>, i32 -> vector<8x512xf32>
    %c1 = arith.constant 1 : index
    %c0_42 = arith.constant 0 : index
    %58 = vector.load %arg2[%c1, %c0_42] : memref<25x512xf32, #tpu.memory_space<vmem>>, vector<1x512xf32>
    %59 = vector.broadcast %58 : vector<1x512xf32> to vector<8x512xf32>
    %60 = arith.mulf %57, %59 : vector<8x512xf32>
    %61 = arith.truncf %60 : vector<8x512xf32> to vector<8x512xbf16>
    %c8 = arith.constant 8 : index
    %c0_43 = arith.constant 0 : index
    %62 = vector.load %arg22[%c8, %c0_43] : memref<200x512xbf16, #tpu.memory_space<vmem>>, vector<8x512xbf16>
    tpu.vector_store %arg22[%c8, %c0_43], %61 {strides = array<i32>} : memref<200x512xbf16, #tpu.memory_space<vmem>>, vector<8x512xbf16>,
    %c32_i32 = arith.constant 32 : i32
    %63 = tpu.dynamic_rotate %15 by %c32_i32 dim 1 : vector<8x512xf32>, i32 -> vector<8x512xf32>
    %c2 = arith.constant 2 : index
    %c0_44 = arith.constant 0 : index
    %64 = vector.load %arg2[%c2, %c0_44] : memref<25x512xf32, #tpu.memory_space<vmem>>, vector<1x512xf32>
    %65 = vector.broadcast %64 : vector<1x512xf32> to vector<8x512xf32>
    %66 = arith.mulf %63, %65 : vector<8x512xf32>
    %67 = arith.truncf %66 : vector<8x512xf32> to vector<8x512xbf16>
    %c16 = arith.constant 16 : index
    %c0_45 = arith.constant 0 : index
    %68 = vector.load %arg22[%c16, %c0_45] : memref<200x512xbf16, #tpu.memory_space<vmem>>, vector<8x512xbf16>
    tpu.vector_store %arg22[%c16, %c0_45], %67 {strides = array<i32>} : memref<200x512xbf16, #tpu.memory_space<vmem>>, vector<8x512xbf16>,
    %c31_i32 = arith.constant 31 : i32
    %69 = tpu.dynamic_rotate %15 by %c31_i32 dim 1 : vector<8x512xf32>, i32 -> vector<8x512xf32>
    %c3 = arith.constant 3 : index
    %c0_46 = arith.constant 0 : index
    %70 = vector.load %arg2[%c3, %c0_46] : memref<25x512xf32, #tpu.memory_space<vmem>>, vector<1x512xf32>
    %71 = vector.broadcast %70 : vector<1x512xf32> to vector<8x512xf32>
    %72 = arith.mulf %69, %71 : vector<8x512xf32>
    %73 = arith.truncf %72 : vector<8x512xf32> to vector<8x512xbf16>
    %c24 = arith.constant 24 : index
    %c0_47 = arith.constant 0 : index
    %74 = vector.load %arg22[%c24, %c0_47] : memref<200x512xbf16, #tpu.memory_space<vmem>>, vector<8x512xbf16>
    tpu.vector_store %arg22[%c24, %c0_47], %73 {strides = array<i32>} : memref<200x512xbf16, #tpu.memory_space<vmem>>, vector<8x512xbf16>,
    %c30_i32 = arith.constant 30 : i32
    %75 = tpu.dynamic_rotate %15 by %c30_i32 dim 1 : vector<8x512xf32>, i32 -> vector<8x512xf32>
    %c4 = arith.constant 4 : index
    %c0_48 = arith.constant 0 : index
    %76 = vector.load %arg2[%c4, %c0_48] : memref<25x512xf32, #tpu.memory_space<vmem>>, vector<1x512xf32>
    %77 = vector.broadcast %76 : vector<1x512xf32> to vector<8x512xf32>
    %78 = arith.mulf %75, %77 : vector<8x512xf32>
    %79 = arith.truncf %78 : vector<8x512xf32> to vector<8x512xbf16>
    %c32 = arith.constant 32 : index
    %c0_49 = arith.constant 0 : index
    %80 = vector.load %arg22[%c32, %c0_49] : memref<200x512xbf16, #tpu.memory_space<vmem>>, vector<8x512xbf16>
    tpu.vector_store %arg22[%c32, %c0_49], %79 {strides = array<i32>} : memref<200x512xbf16, #tpu.memory_space<vmem>>, vector<8x512xbf16>,
    %c18_i32 = arith.constant 18 : i32
    %81 = tpu.dynamic_rotate %15 by %c18_i32 dim 1 : vector<8x512xf32>, i32 -> vector<8x512xf32>
    %c5 = arith.constant 5 : index
    %c0_50 = arith.constant 0 : index
    %82 = vector.load %arg2[%c5, %c0_50] : memref<25x512xf32, #tpu.memory_space<vmem>>, vector<1x512xf32>
    %83 = vector.broadcast %82 : vector<1x512xf32> to vector<8x512xf32>
    %84 = arith.mulf %81, %83 : vector<8x512xf32>
    %85 = arith.truncf %84 : vector<8x512xf32> to vector<8x512xbf16>
    %c40 = arith.constant 40 : index
    %c0_51 = arith.constant 0 : index
    %86 = vector.load %arg22[%c40, %c0_51] : memref<200x512xbf16, #tpu.memory_space<vmem>>, vector<8x512xbf16>
    tpu.vector_store %arg22[%c40, %c0_51], %85 {strides = array<i32>} : memref<200x512xbf16, #tpu.memory_space<vmem>>, vector<8x512xbf16>,
    %c17_i32 = arith.constant 17 : i32
    %87 = tpu.dynamic_rotate %15 by %c17_i32 dim 1 : vector<8x512xf32>, i32 -> vector<8x512xf32>
    %c6 = arith.constant 6 : index
    %c0_52 = arith.constant 0 : index
    %88 = vector.load %arg2[%c6, %c0_52] : memref<25x512xf32, #tpu.memory_space<vmem>>, vector<1x512xf32>
    %89 = vector.broadcast %88 : vector<1x512xf32> to vector<8x512xf32>
    %90 = arith.mulf %87, %89 : vector<8x512xf32>
    %91 = arith.truncf %90 : vector<8x512xf32> to vector<8x512xbf16>
    %c48 = arith.constant 48 : index
    %c0_53 = arith.constant 0 : index
    %92 = vector.load %arg22[%c48, %c0_53] : memref<200x512xbf16, #tpu.memory_space<vmem>>, vector<8x512xbf16>
    tpu.vector_store %arg22[%c48, %c0_53], %91 {strides = array<i32>} : memref<200x512xbf16, #tpu.memory_space<vmem>>, vector<8x512xbf16>,
    %c16_i32 = arith.constant 16 : i32
    %93 = tpu.dynamic_rotate %15 by %c16_i32 dim 1 : vector<8x512xf32>, i32 -> vector<8x512xf32>
    %c7 = arith.constant 7 : index
    %c0_54 = arith.constant 0 : index
    %94 = vector.load %arg2[%c7, %c0_54] : memref<25x512xf32, #tpu.memory_space<vmem>>, vector<1x512xf32>
    %95 = vector.broadcast %94 : vector<1x512xf32> to vector<8x512xf32>
    %96 = arith.mulf %93, %95 : vector<8x512xf32>
    %97 = arith.truncf %96 : vector<8x512xf32> to vector<8x512xbf16>
    %c56 = arith.constant 56 : index
    %c0_55 = arith.constant 0 : index
    %98 = vector.load %arg22[%c56, %c0_55] : memref<200x512xbf16, #tpu.memory_space<vmem>>, vector<8x512xbf16>
    tpu.vector_store %arg22[%c56, %c0_55], %97 {strides = array<i32>} : memref<200x512xbf16, #tpu.memory_space<vmem>>, vector<8x512xbf16>,
    %c15_i32 = arith.constant 15 : i32
    %99 = tpu.dynamic_rotate %15 by %c15_i32 dim 1 : vector<8x512xf32>, i32 -> vector<8x512xf32>
    %c8_56 = arith.constant 8 : index
    %c0_57 = arith.constant 0 : index
    %100 = vector.load %arg2[%c8_56, %c0_57] : memref<25x512xf32, #tpu.memory_space<vmem>>, vector<1x512xf32>
    %101 = vector.broadcast %100 : vector<1x512xf32> to vector<8x512xf32>
    %102 = arith.mulf %99, %101 : vector<8x512xf32>
    %103 = arith.truncf %102 : vector<8x512xf32> to vector<8x512xbf16>
    %c64 = arith.constant 64 : index
    %c0_58 = arith.constant 0 : index
    %104 = vector.load %arg22[%c64, %c0_58] : memref<200x512xbf16, #tpu.memory_space<vmem>>, vector<8x512xbf16>
    tpu.vector_store %arg22[%c64, %c0_58], %103 {strides = array<i32>} : memref<200x512xbf16, #tpu.memory_space<vmem>>, vector<8x512xbf16>,
    %c14_i32 = arith.constant 14 : i32
    %105 = tpu.dynamic_rotate %15 by %c14_i32 dim 1 : vector<8x512xf32>, i32 -> vector<8x512xf32>
    %c9 = arith.constant 9 : index
    %c0_59 = arith.constant 0 : index
    %106 = vector.load %arg2[%c9, %c0_59] : memref<25x512xf32, #tpu.memory_space<vmem>>, vector<1x512xf32>
    %107 = vector.broadcast %106 : vector<1x512xf32> to vector<8x512xf32>
    %108 = arith.mulf %105, %107 : vector<8x512xf32>
    %109 = arith.truncf %108 : vector<8x512xf32> to vector<8x512xbf16>
    %c72 = arith.constant 72 : index
    %c0_60 = arith.constant 0 : index
    %110 = vector.load %arg22[%c72, %c0_60] : memref<200x512xbf16, #tpu.memory_space<vmem>>, vector<8x512xbf16>
    tpu.vector_store %arg22[%c72, %c0_60], %109 {strides = array<i32>} : memref<200x512xbf16, #tpu.memory_space<vmem>>, vector<8x512xbf16>,
    %c2_i32 = arith.constant 2 : i32
    %111 = tpu.dynamic_rotate %15 by %c2_i32 dim 1 : vector<8x512xf32>, i32 -> vector<8x512xf32>
    %c10 = arith.constant 10 : index
    %c0_61 = arith.constant 0 : index
    %112 = vector.load %arg2[%c10, %c0_61] : memref<25x512xf32, #tpu.memory_space<vmem>>, vector<1x512xf32>
    %113 = vector.broadcast %112 : vector<1x512xf32> to vector<8x512xf32>
    %114 = arith.mulf %111, %113 : vector<8x512xf32>
    %115 = arith.truncf %114 : vector<8x512xf32> to vector<8x512xbf16>
    %c80 = arith.constant 80 : index
    %c0_62 = arith.constant 0 : index
    %116 = vector.load %arg22[%c80, %c0_62] : memref<200x512xbf16, #tpu.memory_space<vmem>>, vector<8x512xbf16>
    tpu.vector_store %arg22[%c80, %c0_62], %115 {strides = array<i32>} : memref<200x512xbf16, #tpu.memory_space<vmem>>, vector<8x512xbf16>,
    %c1_i32 = arith.constant 1 : i32
    %117 = tpu.dynamic_rotate %15 by %c1_i32 dim 1 : vector<8x512xf32>, i32 -> vector<8x512xf32>
    %c11 = arith.constant 11 : index
    %c0_63 = arith.constant 0 : index
    %118 = vector.load %arg2[%c11, %c0_63] : memref<25x512xf32, #tpu.memory_space<vmem>>, vector<1x512xf32>
    %119 = vector.broadcast %118 : vector<1x512xf32> to vector<8x512xf32>
    %120 = arith.mulf %117, %119 : vector<8x512xf32>
    %121 = arith.truncf %120 : vector<8x512xf32> to vector<8x512xbf16>
    %c88 = arith.constant 88 : index
    %c0_64 = arith.constant 0 : index
    %122 = vector.load %arg22[%c88, %c0_64] : memref<200x512xbf16, #tpu.memory_space<vmem>>, vector<8x512xbf16>
    tpu.vector_store %arg22[%c88, %c0_64], %121 {strides = array<i32>} : memref<200x512xbf16, #tpu.memory_space<vmem>>, vector<8x512xbf16>,
    %123 = arith.truncf %15 : vector<8x512xf32> to vector<8x512xbf16>
    %c96 = arith.constant 96 : index
    %c0_65 = arith.constant 0 : index
    %124 = vector.load %arg22[%c96, %c0_65] : memref<200x512xbf16, #tpu.memory_space<vmem>>, vector<8x512xbf16>
    tpu.vector_store %arg22[%c96, %c0_65], %123 {strides = array<i32>} : memref<200x512xbf16, #tpu.memory_space<vmem>>, vector<8x512xbf16>,
    %c511_i32 = arith.constant 511 : i32
    %125 = tpu.dynamic_rotate %15 by %c511_i32 dim 1 : vector<8x512xf32>, i32 -> vector<8x512xf32>
    %c13 = arith.constant 13 : index
    %c0_66 = arith.constant 0 : index
    %126 = vector.load %arg2[%c13, %c0_66] : memref<25x512xf32, #tpu.memory_space<vmem>>, vector<1x512xf32>
    %127 = vector.broadcast %126 : vector<1x512xf32> to vector<8x512xf32>
    %128 = arith.mulf %125, %127 : vector<8x512xf32>
    %129 = arith.truncf %128 : vector<8x512xf32> to vector<8x512xbf16>
    %c104 = arith.constant 104 : index
    %c0_67 = arith.constant 0 : index
    %130 = vector.load %arg22[%c104, %c0_67] : memref<200x512xbf16, #tpu.memory_space<vmem>>, vector<8x512xbf16>
    tpu.vector_store %arg22[%c104, %c0_67], %129 {strides = array<i32>} : memref<200x512xbf16, #tpu.memory_space<vmem>>, vector<8x512xbf16>,
    %c510_i32 = arith.constant 510 : i32
    %131 = tpu.dynamic_rotate %15 by %c510_i32 dim 1 : vector<8x512xf32>, i32 -> vector<8x512xf32>
    %c14 = arith.constant 14 : index
    %c0_68 = arith.constant 0 : index
    %132 = vector.load %arg2[%c14, %c0_68] : memref<25x512xf32, #tpu.memory_space<vmem>>, vector<1x512xf32>
    %133 = vector.broadcast %132 : vector<1x512xf32> to vector<8x512xf32>
    %134 = arith.mulf %131, %133 : vector<8x512xf32>
    %135 = arith.truncf %134 : vector<8x512xf32> to vector<8x512xbf16>
    %c112 = arith.constant 112 : index
    %c0_69 = arith.constant 0 : index
    %136 = vector.load %arg22[%c112, %c0_69] : memref<200x512xbf16, #tpu.memory_space<vmem>>, vector<8x512xbf16>
    tpu.vector_store %arg22[%c112, %c0_69], %135 {strides = array<i32>} : memref<200x512xbf16, #tpu.memory_space<vmem>>, vector<8x512xbf16>,
    %c498_i32 = arith.constant 498 : i32
    %137 = tpu.dynamic_rotate %15 by %c498_i32 dim 1 : vector<8x512xf32>, i32 -> vector<8x512xf32>
    %c15 = arith.constant 15 : index
    %c0_70 = arith.constant 0 : index
    %138 = vector.load %arg2[%c15, %c0_70] : memref<25x512xf32, #tpu.memory_space<vmem>>, vector<1x512xf32>
    %139 = vector.broadcast %138 : vector<1x512xf32> to vector<8x512xf32>
    %140 = arith.mulf %137, %139 : vector<8x512xf32>
    %141 = arith.truncf %140 : vector<8x512xf32> to vector<8x512xbf16>
    %c120 = arith.constant 120 : index
    %c0_71 = arith.constant 0 : index
    %142 = vector.load %arg22[%c120, %c0_71] : memref<200x512xbf16, #tpu.memory_space<vmem>>, vector<8x512xbf16>
    tpu.vector_store %arg22[%c120, %c0_71], %141 {strides = array<i32>} : memref<200x512xbf16, #tpu.memory_space<vmem>>, vector<8x512xbf16>,
    %c497_i32 = arith.constant 497 : i32
    %143 = tpu.dynamic_rotate %15 by %c497_i32 dim 1 : vector<8x512xf32>, i32 -> vector<8x512xf32>
    %c16_72 = arith.constant 16 : index
    %c0_73 = arith.constant 0 : index
    %144 = vector.load %arg2[%c16_72, %c0_73] : memref<25x512xf32, #tpu.memory_space<vmem>>, vector<1x512xf32>
    %145 = vector.broadcast %144 : vector<1x512xf32> to vector<8x512xf32>
    %146 = arith.mulf %143, %145 : vector<8x512xf32>
    %147 = arith.truncf %146 : vector<8x512xf32> to vector<8x512xbf16>
    %c128 = arith.constant 128 : index
    %c0_74 = arith.constant 0 : index
    %148 = vector.load %arg22[%c128, %c0_74] : memref<200x512xbf16, #tpu.memory_space<vmem>>, vector<8x512xbf16>
    tpu.vector_store %arg22[%c128, %c0_74], %147 {strides = array<i32>} : memref<200x512xbf16, #tpu.memory_space<vmem>>, vector<8x512xbf16>,
    %c496_i32 = arith.constant 496 : i32
    %149 = tpu.dynamic_rotate %15 by %c496_i32 dim 1 : vector<8x512xf32>, i32 -> vector<8x512xf32>
    %c17 = arith.constant 17 : index
    %c0_75 = arith.constant 0 : index
    %150 = vector.load %arg2[%c17, %c0_75] : memref<25x512xf32, #tpu.memory_space<vmem>>, vector<1x512xf32>
    %151 = vector.broadcast %150 : vector<1x512xf32> to vector<8x512xf32>
    %152 = arith.mulf %149, %151 : vector<8x512xf32>
    %153 = arith.truncf %152 : vector<8x512xf32> to vector<8x512xbf16>
    %c136 = arith.constant 136 : index
    %c0_76 = arith.constant 0 : index
    %154 = vector.load %arg22[%c136, %c0_76] : memref<200x512xbf16, #tpu.memory_space<vmem>>, vector<8x512xbf16>
    tpu.vector_store %arg22[%c136, %c0_76], %153 {strides = array<i32>} : memref<200x512xbf16, #tpu.memory_space<vmem>>, vector<8x512xbf16>,
    %c495_i32 = arith.constant 495 : i32
    %155 = tpu.dynamic_rotate %15 by %c495_i32 dim 1 : vector<8x512xf32>, i32 -> vector<8x512xf32>
    %c18 = arith.constant 18 : index
    %c0_77 = arith.constant 0 : index
    %156 = vector.load %arg2[%c18, %c0_77] : memref<25x512xf32, #tpu.memory_space<vmem>>, vector<1x512xf32>
    %157 = vector.broadcast %156 : vector<1x512xf32> to vector<8x512xf32>
    %158 = arith.mulf %155, %157 : vector<8x512xf32>
    %159 = arith.truncf %158 : vector<8x512xf32> to vector<8x512xbf16>
    %c144 = arith.constant 144 : index
    %c0_78 = arith.constant 0 : index
    %160 = vector.load %arg22[%c144, %c0_78] : memref<200x512xbf16, #tpu.memory_space<vmem>>, vector<8x512xbf16>
    tpu.vector_store %arg22[%c144, %c0_78], %159 {strides = array<i32>} : memref<200x512xbf16, #tpu.memory_space<vmem>>, vector<8x512xbf16>,
    %c494_i32 = arith.constant 494 : i32
    %161 = tpu.dynamic_rotate %15 by %c494_i32 dim 1 : vector<8x512xf32>, i32 -> vector<8x512xf32>
    %c19 = arith.constant 19 : index
    %c0_79 = arith.constant 0 : index
    %162 = vector.load %arg2[%c19, %c0_79] : memref<25x512xf32, #tpu.memory_space<vmem>>, vector<1x512xf32>
    %163 = vector.broadcast %162 : vector<1x512xf32> to vector<8x512xf32>
    %164 = arith.mulf %161, %163 : vector<8x512xf32>
    %165 = arith.truncf %164 : vector<8x512xf32> to vector<8x512xbf16>
    %c152 = arith.constant 152 : index
    %c0_80 = arith.constant 0 : index
    %166 = vector.load %arg22[%c152, %c0_80] : memref<200x512xbf16, #tpu.memory_space<vmem>>, vector<8x512xbf16>
    tpu.vector_store %arg22[%c152, %c0_80], %165 {strides = array<i32>} : memref<200x512xbf16, #tpu.memory_space<vmem>>, vector<8x512xbf16>,
    %c482_i32 = arith.constant 482 : i32
    %167 = tpu.dynamic_rotate %15 by %c482_i32 dim 1 : vector<8x512xf32>, i32 -> vector<8x512xf32>
    %c20 = arith.constant 20 : index
    %c0_81 = arith.constant 0 : index
    %168 = vector.load %arg2[%c20, %c0_81] : memref<25x512xf32, #tpu.memory_space<vmem>>, vector<1x512xf32>
    %169 = vector.broadcast %168 : vector<1x512xf32> to vector<8x512xf32>
    %170 = arith.mulf %167, %169 : vector<8x512xf32>
    %171 = arith.truncf %170 : vector<8x512xf32> to vector<8x512xbf16>
    %c160 = arith.constant 160 : index
    %c0_82 = arith.constant 0 : index
    %172 = vector.load %arg22[%c160, %c0_82] : memref<200x512xbf16, #tpu.memory_space<vmem>>, vector<8x512xbf16>
    tpu.vector_store %arg22[%c160, %c0_82], %171 {strides = array<i32>} : memref<200x512xbf16, #tpu.memory_space<vmem>>, vector<8x512xbf16>,
    %c481_i32 = arith.constant 481 : i32
    %173 = tpu.dynamic_rotate %15 by %c481_i32 dim 1 : vector<8x512xf32>, i32 -> vector<8x512xf32>
    %c21 = arith.constant 21 : index
    %c0_83 = arith.constant 0 : index
    %174 = vector.load %arg2[%c21, %c0_83] : memref<25x512xf32, #tpu.memory_space<vmem>>, vector<1x512xf32>
    %175 = vector.broadcast %174 : vector<1x512xf32> to vector<8x512xf32>
    %176 = arith.mulf %173, %175 : vector<8x512xf32>
    %177 = arith.truncf %176 : vector<8x512xf32> to vector<8x512xbf16>
    %c168 = arith.constant 168 : index
    %c0_84 = arith.constant 0 : index
    %178 = vector.load %arg22[%c168, %c0_84] : memref<200x512xbf16, #tpu.memory_space<vmem>>, vector<8x512xbf16>
    tpu.vector_store %arg22[%c168, %c0_84], %177 {strides = array<i32>} : memref<200x512xbf16, #tpu.memory_space<vmem>>, vector<8x512xbf16>,
    %c480_i32 = arith.constant 480 : i32
    %179 = tpu.dynamic_rotate %15 by %c480_i32 dim 1 : vector<8x512xf32>, i32 -> vector<8x512xf32>
    %c22 = arith.constant 22 : index
    %c0_85 = arith.constant 0 : index
    %180 = vector.load %arg2[%c22, %c0_85] : memref<25x512xf32, #tpu.memory_space<vmem>>, vector<1x512xf32>
    %181 = vector.broadcast %180 : vector<1x512xf32> to vector<8x512xf32>
    %182 = arith.mulf %179, %181 : vector<8x512xf32>
    %183 = arith.truncf %182 : vector<8x512xf32> to vector<8x512xbf16>
    %c176 = arith.constant 176 : index
    %c0_86 = arith.constant 0 : index
    %184 = vector.load %arg22[%c176, %c0_86] : memref<200x512xbf16, #tpu.memory_space<vmem>>, vector<8x512xbf16>
    tpu.vector_store %arg22[%c176, %c0_86], %183 {strides = array<i32>} : memref<200x512xbf16, #tpu.memory_space<vmem>>, vector<8x512xbf16>,
    %c479_i32 = arith.constant 479 : i32
    %185 = tpu.dynamic_rotate %15 by %c479_i32 dim 1 : vector<8x512xf32>, i32 -> vector<8x512xf32>
    %c23 = arith.constant 23 : index
    %c0_87 = arith.constant 0 : index
    %186 = vector.load %arg2[%c23, %c0_87] : memref<25x512xf32, #tpu.memory_space<vmem>>, vector<1x512xf32>
    %187 = vector.broadcast %186 : vector<1x512xf32> to vector<8x512xf32>
    %188 = arith.mulf %185, %187 : vector<8x512xf32>
    %189 = arith.truncf %188 : vector<8x512xf32> to vector<8x512xbf16>
    %c184 = arith.constant 184 : index
    %c0_88 = arith.constant 0 : index
    %190 = vector.load %arg22[%c184, %c0_88] : memref<200x512xbf16, #tpu.memory_space<vmem>>, vector<8x512xbf16>
    tpu.vector_store %arg22[%c184, %c0_88], %189 {strides = array<i32>} : memref<200x512xbf16, #tpu.memory_space<vmem>>, vector<8x512xbf16>,
    %c478_i32 = arith.constant 478 : i32
    %191 = tpu.dynamic_rotate %15 by %c478_i32 dim 1 : vector<8x512xf32>, i32 -> vector<8x512xf32>
    %c24_89 = arith.constant 24 : index
    %c0_90 = arith.constant 0 : index
    %192 = vector.load %arg2[%c24_89, %c0_90] : memref<25x512xf32, #tpu.memory_space<vmem>>, vector<1x512xf32>
    %193 = vector.broadcast %192 : vector<1x512xf32> to vector<8x512xf32>
    %194 = arith.mulf %191, %193 : vector<8x512xf32>
    %195 = arith.truncf %194 : vector<8x512xf32> to vector<8x512xbf16>
    %c192 = arith.constant 192 : index
    %c0_91 = arith.constant 0 : index
    %196 = vector.load %arg22[%c192, %c0_91] : memref<200x512xbf16, #tpu.memory_space<vmem>>, vector<8x512xbf16>
    tpu.vector_store %arg22[%c192, %c0_91], %195 {strides = array<i32>} : memref<200x512xbf16, #tpu.memory_space<vmem>>, vector<8x512xbf16>,
    %c0_92 = arith.constant 0 : index
    %c0_93 = arith.constant 0 : index
    %197 = vector.load %arg22[%c0_92, %c0_93] : memref<200x512xbf16, #tpu.memory_space<vmem>>, vector<200x512xbf16>
    %cst_94 = arith.constant dense<0.000000e+00> : vector<4x512xf32>
    %198 = tpu.matmul %29, %197, %cst_94 {dimension_numbers = #tpu.dot_dimension_numbers<[1], [0], [0], [1], [0, 0, 1, 1], [], []>} : vector<4x200xbf16>, vector<200x512xbf16>, vector<4x512xf32> -> vector<4x512xf32>
    %199 = arith.addf %198, %37 : vector<4x512xf32>
    %cst_95 = arith.constant 0.000000e+00 : f32
    %200 = vector.broadcast %cst_95 : f32 to vector<4x512xf32>
    %201 = arith.subf %200, %199 : vector<4x512xf32>
    %202 = math.exp %201 : vector<4x512xf32>
    %cst_96 = arith.constant 1.000000e+00 : f32
    %203 = vector.broadcast %cst_96 : f32 to vector<4x512xf32>
    %204 = arith.addf %203, %202 : vector<4x512xf32>
    %cst_97 = arith.constant 1.000000e+00 : f32
    %205 = vector.broadcast %cst_97 : f32 to vector<4x512xf32>
    %206 = arith.divf %205, %204 : vector<4x512xf32>
    %207 = arith.mulf %199, %206 : vector<4x512xf32>
    %208 = vector.extract_strided_slice %207 {offsets = [0, 0], sizes = [4, 256], strides = [1, 1]} : vector<4x512xf32> to vector<4x256xf32>
    %cst_98 = arith.constant dense<0.000000e+00> : vector<4xf32>
    %209 = vector.multi_reduction <add>, %208, %cst_98 [1] : vector<4x256xf32> to vector<4xf32>
    %210 = vector.shape_cast %209 : vector<4xf32> to vector<4x1xf32>
    %cst_99 = arith.constant 2.560000e+02 : f32
    %211 = vector.broadcast %cst_99 : f32 to vector<4x1xf32>
    %212 = arith.divf %210, %211 : vector<4x1xf32>
    %213 = vector.extract_strided_slice %207 {offsets = [0, 256], sizes = [4, 256], strides = [1, 1]} : vector<4x512xf32> to vector<4x256xf32>
    %cst_100 = arith.constant dense<0.000000e+00> : vector<4xf32>
    %214 = vector.multi_reduction <add>, %213, %cst_100 [1] : vector<4x256xf32> to vector<4xf32>
    %215 = vector.shape_cast %214 : vector<4xf32> to vector<4x1xf32>
    %cst_101 = arith.constant 2.560000e+02 : f32
    %216 = vector.broadcast %cst_101 : f32 to vector<4x1xf32>
    %217 = arith.divf %215, %216 : vector<4x1xf32>
    %218 = tpu.concatenate %212, %217 in 1 : vector<4x1xf32>, vector<4x1xf32> -> vector<4x2xf32>
    %cst_102 = arith.constant dense<0.000000e+00> : vector<1x2xf32>
    %219 = tpu.matmul %31, %218, %cst_102 {dimension_numbers = #tpu.dot_dimension_numbers<[1], [0], [0], [1], [0, 0, 1, 1], [], []>} : vector<1x4xf32>, vector<4x2xf32>, vector<1x2xf32> -> vector<1x2xf32>
    %220 = vector.broadcast %32 : vector<1x1xf32> to vector<1x2xf32>
    %221 = arith.addf %219, %220 : vector<1x2xf32>
    %cst_103 = arith.constant 0.000000e+00 : f32
    %222 = vector.broadcast %cst_103 : f32 to vector<1x2xf32>
    %223 = arith.maximumf %221, %222 : vector<1x2xf32>
    %cst_104 = arith.constant dense<0.000000e+00> : vector<4x2xf32>
    %224 = tpu.matmul %33, %223, %cst_104 {dimension_numbers = #tpu.dot_dimension_numbers<[1], [0], [0], [1], [0, 0, 1, 1], [], []>} : vector<4x1xf32>, vector<1x2xf32>, vector<4x2xf32> -> vector<4x2xf32>
    %225 = vector.broadcast %34 : vector<4x1xf32> to vector<4x2xf32>
    %226 = arith.addf %224, %225 : vector<4x2xf32>
    %cst_105 = arith.constant 0.000000e+00 : f32
    %227 = vector.broadcast %cst_105 : f32 to vector<4x2xf32>
    %228 = arith.subf %227, %226 : vector<4x2xf32>
    %229 = math.exp %228 : vector<4x2xf32>
    %cst_106 = arith.constant 1.000000e+00 : f32
    %230 = vector.broadcast %cst_106 : f32 to vector<4x2xf32>
    %231 = arith.addf %230, %229 : vector<4x2xf32>
    %cst_107 = arith.constant 1.000000e+00 : f32
    %232 = vector.broadcast %cst_107 : f32 to vector<4x2xf32>
    %233 = arith.divf %232, %231 : vector<4x2xf32>
    %234 = vector.extract_strided_slice %233 {offsets = [0, 0], sizes = [4, 1], strides = [1, 1]} : vector<4x2xf32> to vector<4x1xf32>
    %235 = vector.shape_cast %234 : vector<4x1xf32> to vector<4x1xf32>
    %236 = vector.broadcast %235 : vector<4x1xf32> to vector<4x256xf32>
    %237 = vector.extract_strided_slice %233 {offsets = [0, 1], sizes = [4, 1], strides = [1, 1]} : vector<4x2xf32> to vector<4x1xf32>
    %238 = vector.shape_cast %237 : vector<4x1xf32> to vector<4x1xf32>
    %239 = vector.broadcast %238 : vector<4x1xf32> to vector<4x256xf32>
    %240 = tpu.concatenate %236, %239 in 1 : vector<4x256xf32>, vector<4x256xf32> -> vector<4x512xf32>
    %241 = arith.mulf %207, %240 : vector<4x512xf32>
    %c34_i32_108 = arith.constant 34 : i32
    %242 = tpu.dynamic_rotate %241 by %c34_i32_108 dim 1 : vector<4x512xf32>, i32 -> vector<4x512xf32>
    %c0_109 = arith.constant 0 : index
    %c0_110 = arith.constant 0 : index
    %243 = vector.load %arg2[%c0_109, %c0_110] : memref<25x512xf32, #tpu.memory_space<vmem>>, vector<1x512xf32>
    %244 = vector.broadcast %243 : vector<1x512xf32> to vector<4x512xf32>
    %245 = arith.mulf %242, %244 : vector<4x512xf32>
    %246 = arith.truncf %245 : vector<4x512xf32> to vector<4x512xbf16>
    %c0_111 = arith.constant 0 : index
    %c0_112 = arith.constant 0 : index
    %247 = vector.load %arg23[%c0_111, %c0_112] : memref<100x512xbf16, #tpu.memory_space<vmem>>, vector<4x512xbf16>
    tpu.vector_store %arg23[%c0_111, %c0_112], %246 {strides = array<i32>} : memref<100x512xbf16, #tpu.memory_space<vmem>>, vector<4x512xbf16>,
    %c33_i32_113 = arith.constant 33 : i32
    %248 = tpu.dynamic_rotate %241 by %c33_i32_113 dim 1 : vector<4x512xf32>, i32 -> vector<4x512xf32>
    %c1_114 = arith.constant 1 : index
    %c0_115 = arith.constant 0 : index
    %249 = vector.load %arg2[%c1_114, %c0_115] : memref<25x512xf32, #tpu.memory_space<vmem>>, vector<1x512xf32>
    %250 = vector.broadcast %249 : vector<1x512xf32> to vector<4x512xf32>
    %251 = arith.mulf %248, %250 : vector<4x512xf32>
    %252 = arith.truncf %251 : vector<4x512xf32> to vector<4x512xbf16>
    %c4_116 = arith.constant 4 : index
    %c0_117 = arith.constant 0 : index
    %253 = vector.load %arg23[%c4_116, %c0_117] : memref<100x512xbf16, #tpu.memory_space<vmem>>, vector<4x512xbf16>
    tpu.vector_store %arg23[%c4_116, %c0_117], %252 {strides = array<i32>} : memref<100x512xbf16, #tpu.memory_space<vmem>>, vector<4x512xbf16>,
    %c32_i32_118 = arith.constant 32 : i32
    %254 = tpu.dynamic_rotate %241 by %c32_i32_118 dim 1 : vector<4x512xf32>, i32 -> vector<4x512xf32>
    %c2_119 = arith.constant 2 : index
    %c0_120 = arith.constant 0 : index
    %255 = vector.load %arg2[%c2_119, %c0_120] : memref<25x512xf32, #tpu.memory_space<vmem>>, vector<1x512xf32>
    %256 = vector.broadcast %255 : vector<1x512xf32> to vector<4x512xf32>
    %257 = arith.mulf %254, %256 : vector<4x512xf32>
    %258 = arith.truncf %257 : vector<4x512xf32> to vector<4x512xbf16>
    %c8_121 = arith.constant 8 : index
    %c0_122 = arith.constant 0 : index
    %259 = vector.load %arg23[%c8_121, %c0_122] : memref<100x512xbf16, #tpu.memory_space<vmem>>, vector<4x512xbf16>
    tpu.vector_store %arg23[%c8_121, %c0_122], %258 {strides = array<i32>} : memref<100x512xbf16, #tpu.memory_space<vmem>>, vector<4x512xbf16>,
    %c31_i32_123 = arith.constant 31 : i32
    %260 = tpu.dynamic_rotate %241 by %c31_i32_123 dim 1 : vector<4x512xf32>, i32 -> vector<4x512xf32>
    %c3_124 = arith.constant 3 : index
    %c0_125 = arith.constant 0 : index
    %261 = vector.load %arg2[%c3_124, %c0_125] : memref<25x512xf32, #tpu.memory_space<vmem>>, vector<1x512xf32>
    %262 = vector.broadcast %261 : vector<1x512xf32> to vector<4x512xf32>
    %263 = arith.mulf %260, %262 : vector<4x512xf32>
    %264 = arith.truncf %263 : vector<4x512xf32> to vector<4x512xbf16>
    %c12 = arith.constant 12 : index
    %c0_126 = arith.constant 0 : index
    %265 = vector.load %arg23[%c12, %c0_126] : memref<100x512xbf16, #tpu.memory_space<vmem>>, vector<4x512xbf16>
    tpu.vector_store %arg23[%c12, %c0_126], %264 {strides = array<i32>} : memref<100x512xbf16, #tpu.memory_space<vmem>>, vector<4x512xbf16>,
    %c30_i32_127 = arith.constant 30 : i32
    %266 = tpu.dynamic_rotate %241 by %c30_i32_127 dim 1 : vector<4x512xf32>, i32 -> vector<4x512xf32>
    %c4_128 = arith.constant 4 : index
    %c0_129 = arith.constant 0 : index
    %267 = vector.load %arg2[%c4_128, %c0_129] : memref<25x512xf32, #tpu.memory_space<vmem>>, vector<1x512xf32>
    %268 = vector.broadcast %267 : vector<1x512xf32> to vector<4x512xf32>
    %269 = arith.mulf %266, %268 : vector<4x512xf32>
    %270 = arith.truncf %269 : vector<4x512xf32> to vector<4x512xbf16>
    %c16_130 = arith.constant 16 : index
    %c0_131 = arith.constant 0 : index
    %271 = vector.load %arg23[%c16_130, %c0_131] : memref<100x512xbf16, #tpu.memory_space<vmem>>, vector<4x512xbf16>
    tpu.vector_store %arg23[%c16_130, %c0_131], %270 {strides = array<i32>} : memref<100x512xbf16, #tpu.memory_space<vmem>>, vector<4x512xbf16>,
    %c18_i32_132 = arith.constant 18 : i32
    %272 = tpu.dynamic_rotate %241 by %c18_i32_132 dim 1 : vector<4x512xf32>, i32 -> vector<4x512xf32>
    %c5_133 = arith.constant 5 : index
    %c0_134 = arith.constant 0 : index
    %273 = vector.load %arg2[%c5_133, %c0_134] : memref<25x512xf32, #tpu.memory_space<vmem>>, vector<1x512xf32>
    %274 = vector.broadcast %273 : vector<1x512xf32> to vector<4x512xf32>
    %275 = arith.mulf %272, %274 : vector<4x512xf32>
    %276 = arith.truncf %275 : vector<4x512xf32> to vector<4x512xbf16>
    %c20_135 = arith.constant 20 : index
    %c0_136 = arith.constant 0 : index
    %277 = vector.load %arg23[%c20_135, %c0_136] : memref<100x512xbf16, #tpu.memory_space<vmem>>, vector<4x512xbf16>
    tpu.vector_store %arg23[%c20_135, %c0_136], %276 {strides = array<i32>} : memref<100x512xbf16, #tpu.memory_space<vmem>>, vector<4x512xbf16>,
    %c17_i32_137 = arith.constant 17 : i32
    %278 = tpu.dynamic_rotate %241 by %c17_i32_137 dim 1 : vector<4x512xf32>, i32 -> vector<4x512xf32>
    %c6_138 = arith.constant 6 : index
    %c0_139 = arith.constant 0 : index
    %279 = vector.load %arg2[%c6_138, %c0_139] : memref<25x512xf32, #tpu.memory_space<vmem>>, vector<1x512xf32>
    %280 = vector.broadcast %279 : vector<1x512xf32> to vector<4x512xf32>
    %281 = arith.mulf %278, %280 : vector<4x512xf32>
    %282 = arith.truncf %281 : vector<4x512xf32> to vector<4x512xbf16>
    %c24_140 = arith.constant 24 : index
    %c0_141 = arith.constant 0 : index
    %283 = vector.load %arg23[%c24_140, %c0_141] : memref<100x512xbf16, #tpu.memory_space<vmem>>, vector<4x512xbf16>
    tpu.vector_store %arg23[%c24_140, %c0_141], %282 {strides = array<i32>} : memref<100x512xbf16, #tpu.memory_space<vmem>>, vector<4x512xbf16>,
    %c16_i32_142 = arith.constant 16 : i32
    %284 = tpu.dynamic_rotate %241 by %c16_i32_142 dim 1 : vector<4x512xf32>, i32 -> vector<4x512xf32>
    %c7_143 = arith.constant 7 : index
    %c0_144 = arith.constant 0 : index
    %285 = vector.load %arg2[%c7_143, %c0_144] : memref<25x512xf32, #tpu.memory_space<vmem>>, vector<1x512xf32>
    %286 = vector.broadcast %285 : vector<1x512xf32> to vector<4x512xf32>
    %287 = arith.mulf %284, %286 : vector<4x512xf32>
    %288 = arith.truncf %287 : vector<4x512xf32> to vector<4x512xbf16>
    %c28 = arith.constant 28 : index
    %c0_145 = arith.constant 0 : index
    %289 = vector.load %arg23[%c28, %c0_145] : memref<100x512xbf16, #tpu.memory_space<vmem>>, vector<4x512xbf16>
    tpu.vector_store %arg23[%c28, %c0_145], %288 {strides = array<i32>} : memref<100x512xbf16, #tpu.memory_space<vmem>>, vector<4x512xbf16>,
    %c15_i32_146 = arith.constant 15 : i32
    %290 = tpu.dynamic_rotate %241 by %c15_i32_146 dim 1 : vector<4x512xf32>, i32 -> vector<4x512xf32>
    %c8_147 = arith.constant 8 : index
    %c0_148 = arith.constant 0 : index
    %291 = vector.load %arg2[%c8_147, %c0_148] : memref<25x512xf32, #tpu.memory_space<vmem>>, vector<1x512xf32>
    %292 = vector.broadcast %291 : vector<1x512xf32> to vector<4x512xf32>
    %293 = arith.mulf %290, %292 : vector<4x512xf32>
    %294 = arith.truncf %293 : vector<4x512xf32> to vector<4x512xbf16>
    %c32_149 = arith.constant 32 : index
    %c0_150 = arith.constant 0 : index
    %295 = vector.load %arg23[%c32_149, %c0_150] : memref<100x512xbf16, #tpu.memory_space<vmem>>, vector<4x512xbf16>
    tpu.vector_store %arg23[%c32_149, %c0_150], %294 {strides = array<i32>} : memref<100x512xbf16, #tpu.memory_space<vmem>>, vector<4x512xbf16>,
    %c14_i32_151 = arith.constant 14 : i32
    %296 = tpu.dynamic_rotate %241 by %c14_i32_151 dim 1 : vector<4x512xf32>, i32 -> vector<4x512xf32>
    %c9_152 = arith.constant 9 : index
    %c0_153 = arith.constant 0 : index
    %297 = vector.load %arg2[%c9_152, %c0_153] : memref<25x512xf32, #tpu.memory_space<vmem>>, vector<1x512xf32>
    %298 = vector.broadcast %297 : vector<1x512xf32> to vector<4x512xf32>
    %299 = arith.mulf %296, %298 : vector<4x512xf32>
    %300 = arith.truncf %299 : vector<4x512xf32> to vector<4x512xbf16>
    %c36 = arith.constant 36 : index
    %c0_154 = arith.constant 0 : index
    %301 = vector.load %arg23[%c36, %c0_154] : memref<100x512xbf16, #tpu.memory_space<vmem>>, vector<4x512xbf16>
    tpu.vector_store %arg23[%c36, %c0_154], %300 {strides = array<i32>} : memref<100x512xbf16, #tpu.memory_space<vmem>>, vector<4x512xbf16>,
    %c2_i32_155 = arith.constant 2 : i32
    %302 = tpu.dynamic_rotate %241 by %c2_i32_155 dim 1 : vector<4x512xf32>, i32 -> vector<4x512xf32>
    %c10_156 = arith.constant 10 : index
    %c0_157 = arith.constant 0 : index
    %303 = vector.load %arg2[%c10_156, %c0_157] : memref<25x512xf32, #tpu.memory_space<vmem>>, vector<1x512xf32>
    %304 = vector.broadcast %303 : vector<1x512xf32> to vector<4x512xf32>
    %305 = arith.mulf %302, %304 : vector<4x512xf32>
    %306 = arith.truncf %305 : vector<4x512xf32> to vector<4x512xbf16>
    %c40_158 = arith.constant 40 : index
    %c0_159 = arith.constant 0 : index
    %307 = vector.load %arg23[%c40_158, %c0_159] : memref<100x512xbf16, #tpu.memory_space<vmem>>, vector<4x512xbf16>
    tpu.vector_store %arg23[%c40_158, %c0_159], %306 {strides = array<i32>} : memref<100x512xbf16, #tpu.memory_space<vmem>>, vector<4x512xbf16>,
    %c1_i32_160 = arith.constant 1 : i32
    %308 = tpu.dynamic_rotate %241 by %c1_i32_160 dim 1 : vector<4x512xf32>, i32 -> vector<4x512xf32>
    %c11_161 = arith.constant 11 : index
    %c0_162 = arith.constant 0 : index
    %309 = vector.load %arg2[%c11_161, %c0_162] : memref<25x512xf32, #tpu.memory_space<vmem>>, vector<1x512xf32>
    %310 = vector.broadcast %309 : vector<1x512xf32> to vector<4x512xf32>
    %311 = arith.mulf %308, %310 : vector<4x512xf32>
    %312 = arith.truncf %311 : vector<4x512xf32> to vector<4x512xbf16>
    %c44 = arith.constant 44 : index
    %c0_163 = arith.constant 0 : index
    %313 = vector.load %arg23[%c44, %c0_163] : memref<100x512xbf16, #tpu.memory_space<vmem>>, vector<4x512xbf16>
    tpu.vector_store %arg23[%c44, %c0_163], %312 {strides = array<i32>} : memref<100x512xbf16, #tpu.memory_space<vmem>>, vector<4x512xbf16>,
    %314 = arith.truncf %241 : vector<4x512xf32> to vector<4x512xbf16>
    %c48_164 = arith.constant 48 : index
    %c0_165 = arith.constant 0 : index
    %315 = vector.load %arg23[%c48_164, %c0_165] : memref<100x512xbf16, #tpu.memory_space<vmem>>, vector<4x512xbf16>
    tpu.vector_store %arg23[%c48_164, %c0_165], %314 {strides = array<i32>} : memref<100x512xbf16, #tpu.memory_space<vmem>>, vector<4x512xbf16>,
    %c511_i32_166 = arith.constant 511 : i32
    %316 = tpu.dynamic_rotate %241 by %c511_i32_166 dim 1 : vector<4x512xf32>, i32 -> vector<4x512xf32>
    %c13_167 = arith.constant 13 : index
    %c0_168 = arith.constant 0 : index
    %317 = vector.load %arg2[%c13_167, %c0_168] : memref<25x512xf32, #tpu.memory_space<vmem>>, vector<1x512xf32>
    %318 = vector.broadcast %317 : vector<1x512xf32> to vector<4x512xf32>
    %319 = arith.mulf %316, %318 : vector<4x512xf32>
    %320 = arith.truncf %319 : vector<4x512xf32> to vector<4x512xbf16>
    %c52 = arith.constant 52 : index
    %c0_169 = arith.constant 0 : index
    %321 = vector.load %arg23[%c52, %c0_169] : memref<100x512xbf16, #tpu.memory_space<vmem>>, vector<4x512xbf16>
    tpu.vector_store %arg23[%c52, %c0_169], %320 {strides = array<i32>} : memref<100x512xbf16, #tpu.memory_space<vmem>>, vector<4x512xbf16>,
    %c510_i32_170 = arith.constant 510 : i32
    %322 = tpu.dynamic_rotate %241 by %c510_i32_170 dim 1 : vector<4x512xf32>, i32 -> vector<4x512xf32>
    %c14_171 = arith.constant 14 : index
    %c0_172 = arith.constant 0 : index
    %323 = vector.load %arg2[%c14_171, %c0_172] : memref<25x512xf32, #tpu.memory_space<vmem>>, vector<1x512xf32>
    %324 = vector.broadcast %323 : vector<1x512xf32> to vector<4x512xf32>
    %325 = arith.mulf %322, %324 : vector<4x512xf32>
    %326 = arith.truncf %325 : vector<4x512xf32> to vector<4x512xbf16>
    %c56_173 = arith.constant 56 : index
    %c0_174 = arith.constant 0 : index
    %327 = vector.load %arg23[%c56_173, %c0_174] : memref<100x512xbf16, #tpu.memory_space<vmem>>, vector<4x512xbf16>
    tpu.vector_store %arg23[%c56_173, %c0_174], %326 {strides = array<i32>} : memref<100x512xbf16, #tpu.memory_space<vmem>>, vector<4x512xbf16>,
    %c498_i32_175 = arith.constant 498 : i32
    %328 = tpu.dynamic_rotate %241 by %c498_i32_175 dim 1 : vector<4x512xf32>, i32 -> vector<4x512xf32>
    %c15_176 = arith.constant 15 : index
    %c0_177 = arith.constant 0 : index
    %329 = vector.load %arg2[%c15_176, %c0_177] : memref<25x512xf32, #tpu.memory_space<vmem>>, vector<1x512xf32>
    %330 = vector.broadcast %329 : vector<1x512xf32> to vector<4x512xf32>
    %331 = arith.mulf %328, %330 : vector<4x512xf32>
    %332 = arith.truncf %331 : vector<4x512xf32> to vector<4x512xbf16>
    %c60 = arith.constant 60 : index
    %c0_178 = arith.constant 0 : index
    %333 = vector.load %arg23[%c60, %c0_178] : memref<100x512xbf16, #tpu.memory_space<vmem>>, vector<4x512xbf16>
    tpu.vector_store %arg23[%c60, %c0_178], %332 {strides = array<i32>} : memref<100x512xbf16, #tpu.memory_space<vmem>>, vector<4x512xbf16>,
    %c497_i32_179 = arith.constant 497 : i32
    %334 = tpu.dynamic_rotate %241 by %c497_i32_179 dim 1 : vector<4x512xf32>, i32 -> vector<4x512xf32>
    %c16_180 = arith.constant 16 : index
    %c0_181 = arith.constant 0 : index
    %335 = vector.load %arg2[%c16_180, %c0_181] : memref<25x512xf32, #tpu.memory_space<vmem>>, vector<1x512xf32>
    %336 = vector.broadcast %335 : vector<1x512xf32> to vector<4x512xf32>
    %337 = arith.mulf %334, %336 : vector<4x512xf32>
    %338 = arith.truncf %337 : vector<4x512xf32> to vector<4x512xbf16>
    %c64_182 = arith.constant 64 : index
    %c0_183 = arith.constant 0 : index
    %339 = vector.load %arg23[%c64_182, %c0_183] : memref<100x512xbf16, #tpu.memory_space<vmem>>, vector<4x512xbf16>
    tpu.vector_store %arg23[%c64_182, %c0_183], %338 {strides = array<i32>} : memref<100x512xbf16, #tpu.memory_space<vmem>>, vector<4x512xbf16>,
    %c496_i32_184 = arith.constant 496 : i32
    %340 = tpu.dynamic_rotate %241 by %c496_i32_184 dim 1 : vector<4x512xf32>, i32 -> vector<4x512xf32>
    %c17_185 = arith.constant 17 : index
    %c0_186 = arith.constant 0 : index
    %341 = vector.load %arg2[%c17_185, %c0_186] : memref<25x512xf32, #tpu.memory_space<vmem>>, vector<1x512xf32>
    %342 = vector.broadcast %341 : vector<1x512xf32> to vector<4x512xf32>
    %343 = arith.mulf %340, %342 : vector<4x512xf32>
    %344 = arith.truncf %343 : vector<4x512xf32> to vector<4x512xbf16>
    %c68 = arith.constant 68 : index
    %c0_187 = arith.constant 0 : index
    %345 = vector.load %arg23[%c68, %c0_187] : memref<100x512xbf16, #tpu.memory_space<vmem>>, vector<4x512xbf16>
    tpu.vector_store %arg23[%c68, %c0_187], %344 {strides = array<i32>} : memref<100x512xbf16, #tpu.memory_space<vmem>>, vector<4x512xbf16>,
    %c495_i32_188 = arith.constant 495 : i32
    %346 = tpu.dynamic_rotate %241 by %c495_i32_188 dim 1 : vector<4x512xf32>, i32 -> vector<4x512xf32>
    %c18_189 = arith.constant 18 : index
    %c0_190 = arith.constant 0 : index
    %347 = vector.load %arg2[%c18_189, %c0_190] : memref<25x512xf32, #tpu.memory_space<vmem>>, vector<1x512xf32>
    %348 = vector.broadcast %347 : vector<1x512xf32> to vector<4x512xf32>
    %349 = arith.mulf %346, %348 : vector<4x512xf32>
    %350 = arith.truncf %349 : vector<4x512xf32> to vector<4x512xbf16>
    %c72_191 = arith.constant 72 : index
    %c0_192 = arith.constant 0 : index
    %351 = vector.load %arg23[%c72_191, %c0_192] : memref<100x512xbf16, #tpu.memory_space<vmem>>, vector<4x512xbf16>
    tpu.vector_store %arg23[%c72_191, %c0_192], %350 {strides = array<i32>} : memref<100x512xbf16, #tpu.memory_space<vmem>>, vector<4x512xbf16>,
    %c494_i32_193 = arith.constant 494 : i32
    %352 = tpu.dynamic_rotate %241 by %c494_i32_193 dim 1 : vector<4x512xf32>, i32 -> vector<4x512xf32>
    %c19_194 = arith.constant 19 : index
    %c0_195 = arith.constant 0 : index
    %353 = vector.load %arg2[%c19_194, %c0_195] : memref<25x512xf32, #tpu.memory_space<vmem>>, vector<1x512xf32>
    %354 = vector.broadcast %353 : vector<1x512xf32> to vector<4x512xf32>
    %355 = arith.mulf %352, %354 : vector<4x512xf32>
    %356 = arith.truncf %355 : vector<4x512xf32> to vector<4x512xbf16>
    %c76 = arith.constant 76 : index
    %c0_196 = arith.constant 0 : index
    %357 = vector.load %arg23[%c76, %c0_196] : memref<100x512xbf16, #tpu.memory_space<vmem>>, vector<4x512xbf16>
    tpu.vector_store %arg23[%c76, %c0_196], %356 {strides = array<i32>} : memref<100x512xbf16, #tpu.memory_space<vmem>>, vector<4x512xbf16>,
    %c482_i32_197 = arith.constant 482 : i32
    %358 = tpu.dynamic_rotate %241 by %c482_i32_197 dim 1 : vector<4x512xf32>, i32 -> vector<4x512xf32>
    %c20_198 = arith.constant 20 : index
    %c0_199 = arith.constant 0 : index
    %359 = vector.load %arg2[%c20_198, %c0_199] : memref<25x512xf32, #tpu.memory_space<vmem>>, vector<1x512xf32>
    %360 = vector.broadcast %359 : vector<1x512xf32> to vector<4x512xf32>
    %361 = arith.mulf %358, %360 : vector<4x512xf32>
    %362 = arith.truncf %361 : vector<4x512xf32> to vector<4x512xbf16>
    %c80_200 = arith.constant 80 : index
    %c0_201 = arith.constant 0 : index
    %363 = vector.load %arg23[%c80_200, %c0_201] : memref<100x512xbf16, #tpu.memory_space<vmem>>, vector<4x512xbf16>
    tpu.vector_store %arg23[%c80_200, %c0_201], %362 {strides = array<i32>} : memref<100x512xbf16, #tpu.memory_space<vmem>>, vector<4x512xbf16>,
    %c481_i32_202 = arith.constant 481 : i32
    %364 = tpu.dynamic_rotate %241 by %c481_i32_202 dim 1 : vector<4x512xf32>, i32 -> vector<4x512xf32>
    %c21_203 = arith.constant 21 : index
    %c0_204 = arith.constant 0 : index
    %365 = vector.load %arg2[%c21_203, %c0_204] : memref<25x512xf32, #tpu.memory_space<vmem>>, vector<1x512xf32>
    %366 = vector.broadcast %365 : vector<1x512xf32> to vector<4x512xf32>
    %367 = arith.mulf %364, %366 : vector<4x512xf32>
    %368 = arith.truncf %367 : vector<4x512xf32> to vector<4x512xbf16>
    %c84 = arith.constant 84 : index
    %c0_205 = arith.constant 0 : index
    %369 = vector.load %arg23[%c84, %c0_205] : memref<100x512xbf16, #tpu.memory_space<vmem>>, vector<4x512xbf16>
    tpu.vector_store %arg23[%c84, %c0_205], %368 {strides = array<i32>} : memref<100x512xbf16, #tpu.memory_space<vmem>>, vector<4x512xbf16>,
    %c480_i32_206 = arith.constant 480 : i32
    %370 = tpu.dynamic_rotate %241 by %c480_i32_206 dim 1 : vector<4x512xf32>, i32 -> vector<4x512xf32>
    %c22_207 = arith.constant 22 : index
    %c0_208 = arith.constant 0 : index
    %371 = vector.load %arg2[%c22_207, %c0_208] : memref<25x512xf32, #tpu.memory_space<vmem>>, vector<1x512xf32>
    %372 = vector.broadcast %371 : vector<1x512xf32> to vector<4x512xf32>
    %373 = arith.mulf %370, %372 : vector<4x512xf32>
    %374 = arith.truncf %373 : vector<4x512xf32> to vector<4x512xbf16>
    %c88_209 = arith.constant 88 : index
    %c0_210 = arith.constant 0 : index
    %375 = vector.load %arg23[%c88_209, %c0_210] : memref<100x512xbf16, #tpu.memory_space<vmem>>, vector<4x512xbf16>
    tpu.vector_store %arg23[%c88_209, %c0_210], %374 {strides = array<i32>} : memref<100x512xbf16, #tpu.memory_space<vmem>>, vector<4x512xbf16>,
    %c479_i32_211 = arith.constant 479 : i32
    %376 = tpu.dynamic_rotate %241 by %c479_i32_211 dim 1 : vector<4x512xf32>, i32 -> vector<4x512xf32>
    %c23_212 = arith.constant 23 : index
    %c0_213 = arith.constant 0 : index
    %377 = vector.load %arg2[%c23_212, %c0_213] : memref<25x512xf32, #tpu.memory_space<vmem>>, vector<1x512xf32>
    %378 = vector.broadcast %377 : vector<1x512xf32> to vector<4x512xf32>
    %379 = arith.mulf %376, %378 : vector<4x512xf32>
    %380 = arith.truncf %379 : vector<4x512xf32> to vector<4x512xbf16>
    %c92 = arith.constant 92 : index
    %c0_214 = arith.constant 0 : index
    %381 = vector.load %arg23[%c92, %c0_214] : memref<100x512xbf16, #tpu.memory_space<vmem>>, vector<4x512xbf16>
    tpu.vector_store %arg23[%c92, %c0_214], %380 {strides = array<i32>} : memref<100x512xbf16, #tpu.memory_space<vmem>>, vector<4x512xbf16>,
    %c478_i32_215 = arith.constant 478 : i32
    %382 = tpu.dynamic_rotate %241 by %c478_i32_215 dim 1 : vector<4x512xf32>, i32 -> vector<4x512xf32>
    %c24_216 = arith.constant 24 : index
    %c0_217 = arith.constant 0 : index
    %383 = vector.load %arg2[%c24_216, %c0_217] : memref<25x512xf32, #tpu.memory_space<vmem>>, vector<1x512xf32>
    %384 = vector.broadcast %383 : vector<1x512xf32> to vector<4x512xf32>
    %385 = arith.mulf %382, %384 : vector<4x512xf32>
    %386 = arith.truncf %385 : vector<4x512xf32> to vector<4x512xbf16>
    %c96_218 = arith.constant 96 : index
    %c0_219 = arith.constant 0 : index
    %387 = vector.load %arg23[%c96_218, %c0_219] : memref<100x512xbf16, #tpu.memory_space<vmem>>, vector<4x512xbf16>
    tpu.vector_store %arg23[%c96_218, %c0_219], %386 {strides = array<i32>} : memref<100x512xbf16, #tpu.memory_space<vmem>>, vector<4x512xbf16>,
    %c0_220 = arith.constant 0 : index
    %c0_221 = arith.constant 0 : index
    %388 = vector.load %arg23[%c0_220, %c0_221] : memref<100x512xbf16, #tpu.memory_space<vmem>>, vector<100x512xbf16>
    %cst_222 = arith.constant dense<0.000000e+00> : vector<8x512xf32>
    %389 = tpu.matmul %30, %388, %cst_222 {dimension_numbers = #tpu.dot_dimension_numbers<[1], [0], [0], [1], [0, 0, 1, 1], [], []>} : vector<8x100xbf16>, vector<100x512xbf16>, vector<8x512xf32> -> vector<8x512xf32>
    %390 = arith.addf %389, %40 : vector<8x512xf32>
    %cst_223 = arith.constant 0.000000e+00 : f32
    %391 = vector.broadcast %cst_223 : f32 to vector<8x512xf32>
    %392 = arith.subf %391, %390 : vector<8x512xf32>
    %393 = math.exp %392 : vector<8x512xf32>
    %cst_224 = arith.constant 1.000000e+00 : f32
    %394 = vector.broadcast %cst_224 : f32 to vector<8x512xf32>
    %395 = arith.addf %394, %393 : vector<8x512xf32>
    %cst_225 = arith.constant 1.000000e+00 : f32
    %396 = vector.broadcast %cst_225 : f32 to vector<8x512xf32>
    %397 = arith.divf %396, %395 : vector<8x512xf32>
    %398 = arith.mulf %390, %397 : vector<8x512xf32>
    %399 = arith.addf %398, %50 : vector<8x512xf32>
    %400 = tpu.concatenate %399, %28 in 0 : vector<8x512xf32>, vector<8x512xf32> -> vector<16x512xf32>
    %401 = arith.truncf %400 : vector<16x512xf32> to vector<16x512xbf16>
    %c0_226 = arith.constant 0 : index
    %c0_227 = arith.constant 0 : index
    %402 = vector.load %arg17[%c0_226, %c0_227] : memref<16x16xbf16, #tpu.memory_space<vmem>>, vector<16x16xbf16>
    %cst_228 = arith.constant dense<0.000000e+00> : vector<16x512xf32>
    %403 = tpu.matmul %402, %401, %cst_228 {dimension_numbers = #tpu.dot_dimension_numbers<[1], [0], [0], [1], [0, 0, 1, 1], [], []>} : vector<16x16xbf16>, vector<16x512xbf16>, vector<16x512xf32> -> vector<16x512xf32>
    %c0_229 = arith.constant 0 : index
    %c0_230 = arith.constant 0 : index
    %404 = vector.load %arg18[%c0_229, %c0_230] : memref<16x1xf32, #tpu.memory_space<vmem>>, vector<16x1xf32>
    %405 = vector.broadcast %404 : vector<16x1xf32> to vector<16x512xf32>
    %406 = arith.addf %403, %405 : vector<16x512xf32>
    %cst_231 = arith.constant 0.000000e+00 : f32
    %407 = vector.broadcast %cst_231 : f32 to vector<16x512xf32>
    %408 = arith.subf %407, %406 : vector<16x512xf32>
    %409 = math.exp %408 : vector<16x512xf32>
    %cst_232 = arith.constant 1.000000e+00 : f32
    %410 = vector.broadcast %cst_232 : f32 to vector<16x512xf32>
    %411 = arith.addf %410, %409 : vector<16x512xf32>
    %cst_233 = arith.constant 1.000000e+00 : f32
    %412 = vector.broadcast %cst_233 : f32 to vector<16x512xf32>
    %413 = arith.divf %412, %411 : vector<16x512xf32>
    %414 = arith.mulf %406, %413 : vector<16x512xf32>
    %c0_234 = arith.constant 0 : index
    %c0_235 = arith.constant 0 : index
    %415 = vector.load %arg19[%c0_234, %c0_235] : memref<16x1xf32, #tpu.memory_space<vmem>>, vector<16x1xf32>
    %416 = vector.broadcast %415 : vector<16x1xf32> to vector<16x512xf32>
    %417 = arith.mulf %414, %416 : vector<16x512xf32>
    %c0_236 = arith.constant 0 : index
    %c0_237 = arith.constant 0 : index
    %418 = vector.load %arg20[%c0_236, %c0_237] : memref<16x1xf32, #tpu.memory_space<vmem>>, vector<16x1xf32>
    %419 = vector.broadcast %418 : vector<16x1xf32> to vector<16x512xf32>
    %420 = arith.addf %417, %419 : vector<16x512xf32>
    %cst_238 = arith.constant 0.000000e+00 : f32
    %421 = vector.broadcast %cst_238 : f32 to vector<16x512xf32>
    %422 = arith.maximumf %420, %421 : vector<16x512xf32>
    %c0_239 = arith.constant 0 : index
    %c0_240 = arith.constant 0 : index
    %c0_241 = arith.constant 0 : index
    %423 = vector.load %arg21[%c0_239, %c0_240, %c0_241] : memref<1x16x512xf32, #tpu.memory_space<vmem>>, vector<1x16x512xf32>
    %424 = vector.shape_cast %423 : vector<1x16x512xf32> to vector<16x512xf32>
    %425 = vector.shape_cast %422 : vector<16x512xf32> to vector<1x16x512xf32>
    tpu.vector_store %arg21[%c0_239, %c0_240, %c0_241], %425 {strides = array<i32>} : memref<1x16x512xf32, #tpu.memory_space<vmem>>, vector<1x16x512xf32>,
    return
  }
  func.func @transform_0(%arg0: i32) -> (i32, i32, i32) {
    %c0_i32 = arith.constant 0 : i32
    %c0_i32_0 = arith.constant 0 : i32
    %c0_i32_1 = arith.constant 0 : i32
    return %arg0, %c0_i32, %c0_i32_0 : i32, i32, i32
  }
  func.func @transform_1(%arg0: i32) -> (i32, i32) {
    %c0_i32 = arith.constant 0 : i32
    %c0_i32_0 = arith.constant 0 : i32
    %c0_i32_1 = arith.constant 0 : i32
    return %c0_i32, %c0_i32_0 : i32, i32
  }
  func.func @transform_2(%arg0: i32) -> (i32, i32) {
    %c0_i32 = arith.constant 0 : i32
    %c0_i32_0 = arith.constant 0 : i32
    %c0_i32_1 = arith.constant 0 : i32
    return %c0_i32, %c0_i32_0 : i32, i32
  }
  func.func @transform_3(%arg0: i32) -> (i32, i32) {
    %c0_i32 = arith.constant 0 : i32
    %c0_i32_0 = arith.constant 0 : i32
    %c0_i32_1 = arith.constant 0 : i32
    return %c0_i32, %c0_i32_0 : i32, i32
  }
  func.func @transform_4(%arg0: i32) -> (i32, i32) {
    %c0_i32 = arith.constant 0 : i32
    %c0_i32_0 = arith.constant 0 : i32
    %c0_i32_1 = arith.constant 0 : i32
    return %c0_i32, %c0_i32_0 : i32, i32
  }
  func.func @transform_5(%arg0: i32) -> (i32, i32) {
    %c0_i32 = arith.constant 0 : i32
    %c0_i32_0 = arith.constant 0 : i32
    %c0_i32_1 = arith.constant 0 : i32
    return %c0_i32, %c0_i32_0 : i32, i32
  }
  func.func @transform_6(%arg0: i32) -> (i32, i32) {
    %c0_i32 = arith.constant 0 : i32
    %c0_i32_0 = arith.constant 0 : i32
    %c0_i32_1 = arith.constant 0 : i32
    return %c0_i32, %c0_i32_0 : i32, i32
  }
  func.func @transform_7(%arg0: i32) -> (i32, i32) {
    %c0_i32 = arith.constant 0 : i32
    %c0_i32_0 = arith.constant 0 : i32
    %c0_i32_1 = arith.constant 0 : i32
    return %c0_i32, %c0_i32_0 : i32, i32
  }
  func.func @transform_8(%arg0: i32) -> (i32, i32) {
    %c0_i32 = arith.constant 0 : i32
    %c0_i32_0 = arith.constant 0 : i32
    %c0_i32_1 = arith.constant 0 : i32
    return %c0_i32, %c0_i32_0 : i32, i32
  }
  func.func @transform_9(%arg0: i32) -> (i32, i32) {
    %c0_i32 = arith.constant 0 : i32
    %c0_i32_0 = arith.constant 0 : i32
    %c0_i32_1 = arith.constant 0 : i32
    return %c0_i32, %c0_i32_0 : i32, i32
  }
  func.func @transform_10(%arg0: i32) -> (i32, i32) {
    %c0_i32 = arith.constant 0 : i32
    %c0_i32_0 = arith.constant 0 : i32
    %c0_i32_1 = arith.constant 0 : i32
    return %c0_i32, %c0_i32_0 : i32, i32
  }
  func.func @transform_11(%arg0: i32) -> (i32, i32) {
    %c0_i32 = arith.constant 0 : i32
    %c0_i32_0 = arith.constant 0 : i32
    %c0_i32_1 = arith.constant 0 : i32
    return %c0_i32, %c0_i32_0 : i32, i32
  }
  func.func @transform_12(%arg0: i32) -> (i32, i32) {
    %c0_i32 = arith.constant 0 : i32
    %c0_i32_0 = arith.constant 0 : i32
    %c0_i32_1 = arith.constant 0 : i32
    return %c0_i32, %c0_i32_0 : i32, i32
  }
  func.func @transform_13(%arg0: i32) -> (i32, i32) {
    %c0_i32 = arith.constant 0 : i32
    %c0_i32_0 = arith.constant 0 : i32
    %c0_i32_1 = arith.constant 0 : i32
    return %c0_i32, %c0_i32_0 : i32, i32
  }
  func.func @transform_14(%arg0: i32) -> (i32, i32) {
    %c0_i32 = arith.constant 0 : i32
    %c0_i32_0 = arith.constant 0 : i32
    %c0_i32_1 = arith.constant 0 : i32
    return %c0_i32, %c0_i32_0 : i32, i32
  }
  func.func @transform_15(%arg0: i32) -> (i32, i32) {
    %c0_i32 = arith.constant 0 : i32
    %c0_i32_0 = arith.constant 0 : i32
    %c0_i32_1 = arith.constant 0 : i32
    return %c0_i32, %c0_i32_0 : i32, i32
  }
  func.func @transform_16(%arg0: i32) -> (i32, i32) {
    %c0_i32 = arith.constant 0 : i32
    %c0_i32_0 = arith.constant 0 : i32
    %c0_i32_1 = arith.constant 0 : i32
    return %c0_i32, %c0_i32_0 : i32, i32
  }
  func.func @transform_17(%arg0: i32) -> (i32, i32) {
    %c0_i32 = arith.constant 0 : i32
    %c0_i32_0 = arith.constant 0 : i32
    %c0_i32_1 = arith.constant 0 : i32
    return %c0_i32, %c0_i32_0 : i32, i32
  }
  func.func @transform_18(%arg0: i32) -> (i32, i32) {
    %c0_i32 = arith.constant 0 : i32
    %c0_i32_0 = arith.constant 0 : i32
    %c0_i32_1 = arith.constant 0 : i32
    return %c0_i32, %c0_i32_0 : i32, i32
  }
  func.func @transform_19(%arg0: i32) -> (i32, i32) {
    %c0_i32 = arith.constant 0 : i32
    %c0_i32_0 = arith.constant 0 : i32
    %c0_i32_1 = arith.constant 0 : i32
    return %c0_i32, %c0_i32_0 : i32, i32
  }
  func.func @transform_20(%arg0: i32) -> (i32, i32, i32) {
    %c0_i32 = arith.constant 0 : i32
    %c0_i32_0 = arith.constant 0 : i32
    %c0_i32_1 = arith.constant 0 : i32
    return %arg0, %c0_i32, %c0_i32_0 : i32, i32, i32
  }
}

</mosaic_0001>

<llo_original>
// kernel: tpu_custom_call.1
$region0: #{tpu_custom_call.1}
  #allocation0 [shape = 'u32[]', space=smem, size = 0x4, offset = 0x4, fixed_abs, tag = 'smem constant byte address 0x4 - core index']
  #allocation1 [shape = 'u32[72,128]{1,0:T(1,128)}', space=vmem, size = 0x9000, scoped, tag = 'internal scratch']
  #allocation2 [shape = 'bf16[200,512]{1,0:T(8,128)(2,1)}', space=vmem, size = 0x32000, scoped, tag = 'scratch operand']
  #allocation3 [shape = 'bf16[100,512]{1,0:T(8,128)(2,1)}', space=vmem, size = 0x1a000, scoped, tag = 'scratch operand']
  #allocation4 [shape = 'f32[1,1]{1,0:T(1,128)S(1)}', space=vmem, size = 0x200, scoped, tag = 'scoped memory for tpu_custom_call.1']
  %s0 = inlined_call_operand.hbm [shape: f32[2,16,512], index: 0, kind: input, shape index: {}]
  %s1 = inlined_call_operand.hbm [shape: f32[25,512], index: 1, kind: input, shape index: {}]
  %s2 = inlined_call_operand.vmem [shape: bf16[8,16], index: 2, kind: input, shape index: {}]
  %s3 = inlined_call_operand.vmem [shape: f32[8,1], index: 3, kind: input, shape index: {}]
  %s4 = inlined_call_operand.vmem [shape: bf16[8,16], index: 4, kind: input, shape index: {}]
  %s5 = inlined_call_operand.vmem [shape: f32[8,1], index: 5, kind: input, shape index: {}]
  %s6 = inlined_call_operand.vmem [shape: f32[8,1], index: 6, kind: input, shape index: {}]
  %s7 = inlined_call_operand.vmem [shape: f32[8,1], index: 7, kind: input, shape index: {}]
  %s8 = inlined_call_operand.vmem [shape: bf16[4,200], index: 8, kind: input, shape index: {}]
  %s9 = inlined_call_operand.vmem [shape: f32[4,1], index: 9, kind: input, shape index: {}]
  %s10 = inlined_call_operand.vmem [shape: f32[1,4], index: 10, kind: input, shape index: {}]
  %s11 = inlined_call_operand.<no memory space> [shape: f32[1,1], index: 11, kind: input, shape index: {}]
  %s12 = inlined_call_operand.vmem [shape: f32[4,1], index: 12, kind: input, shape index: {}]
  %s13 = inlined_call_operand.vmem [shape: f32[4,1], index: 13, kind: input, shape index: {}]
  %s14 = inlined_call_operand.vmem [shape: bf16[8,100], index: 14, kind: input, shape index: {}]
  %s15 = inlined_call_operand.vmem [shape: f32[8,1], index: 15, kind: input, shape index: {}]
  %s16 = inlined_call_operand.vmem [shape: bf16[16,16], index: 16, kind: input, shape index: {}]
  %s17 = inlined_call_operand.vmem [shape: f32[16,1], index: 17, kind: input, shape index: {}]
  %s18 = inlined_call_operand.vmem [shape: f32[16,1], index: 18, kind: input, shape index: {}]
  %s19 = inlined_call_operand.vmem [shape: f32[16,1], index: 19, kind: input, shape index: {}]
  %s20 = inlined_call_operand.hbm [shape: f32[2,16,512], index: 20, kind: output, shape index: {}]
  %s21 = sld [smem:[#allocation0]]
  $region121: #{tpu_custom_call.1} parent=0
    _
  %s23 = ssub.s32 1, %s21
  %s24 = scalar_select 0, %s23, %s21
  %v25 = vstv %s11
  %26 = vst [vmem:[#allocation4] sm:$0x1] %v25
  $region1: #{tpu_custom_call.1} parent=0
    #allocation5 [shape = 'u8[65536]{0}', space=vmem, size = 0x10000, scoped, tag = 'input window, operand 0']
    #allocation6 [shape = 's32[2]{0}', space=sflag, size = 0x8, scoped, tag = 'scoped memory for tpu_custom_call.1']
    #allocation7 [shape = 's32[2]{0}', space=sflag, size = 0x8, scoped, tag = 'scoped memory for tpu_custom_call.1']
    #allocation8 [shape = 'u8[65536]{0}', space=vmem, size = 0x10000, scoped, tag = 'input window, operand 1, single buffered']
    #allocation9 [shape = 's32[1]{0}', space=sflag, size = 0x4, scoped, tag = 'scoped memory for tpu_custom_call.1']
    #allocation10 [shape = 'u8[65536]{0}', space=vmem, size = 0x10000, scoped, tag = 'output window, operand 0']
    %27 = vsyncpa [#allocation6], 0
    %s28 = scalar_lea.sflag [#allocation6], 1
    %29 = vsyncpa %s28, 0
    %30 = vsyncpa [#allocation9], 0
    %31 = vsyncpa [#allocation7], 0
    %s32 = scalar_lea.sflag [#allocation7], 1
    %33 = vsyncpa %s32, 0
    loop: start=0, step=1, limit=4
    $region2: #{tpu_custom_call.1} parent=1 // loop_pre_header
      _
    $region3: #{tpu_custom_call.1} parent=1 // loop_header
      %s35 = sphi 0, %s39
      %p36 = scmp.ge.s32.totalorder %s35, 4
      %s45 = sphi 0, %s47
      %s48 = sphi 0, %s45
      %s49 = sphi 0, %s48
      %s65 = sphi 0, %s49
      %s69 = sphi 0, %s69
      %s71 = sphi 0, %s69
      %s72 = sphi 0, %s71
      %s86 = sphi 0, %s72
      %s90 = sphi 0, %s90
      %s92 = sphi 0, %s90
      %s93 = sphi 0, %s92
      %s107 = sphi 0, %s93
      %s111 = sphi 0, %s111
      %s113 = sphi 0, %s111
      %s114 = sphi 0, %s113
      %s128 = sphi 0, %s114
      %s132 = sphi 0, %s132
      %s134 = sphi 0, %s132
      %s135 = sphi 0, %s134
      %s149 = sphi 0, %s135
      %s153 = sphi 0, %s153
      %s155 = sphi 0, %s153
      %s156 = sphi 0, %s155
      %s170 = sphi 0, %s156
      %s174 = sphi 0, %s174
      %s176 = sphi 0, %s174
      %s177 = sphi 0, %s176
      %s191 = sphi 0, %s177
      %s195 = sphi 0, %s195
      %s197 = sphi 0, %s195
      %s198 = sphi 0, %s197
      %s212 = sphi 0, %s198
      %s216 = sphi 0, %s216
      %s218 = sphi 0, %s216
      %s219 = sphi 0, %s218
      %s233 = sphi 0, %s219
      %s237 = sphi 0, %s237
      %s239 = sphi 0, %s237
      %s240 = sphi 0, %s239
      %s254 = sphi 0, %s240
      %s258 = sphi 0, %s258
      %s260 = sphi 0, %s258
      %s261 = sphi 0, %s260
      %s275 = sphi 0, %s261
      %s279 = sphi 0, %s279
      %s281 = sphi 0, %s279
      %s282 = sphi 0, %s281
      %s296 = sphi 0, %s282
      %s300 = sphi 0, %s300
      %s302 = sphi 0, %s300
      %s303 = sphi 0, %s302
      %s317 = sphi 0, %s303
      %s321 = sphi 0, %s321
      %s323 = sphi 0, %s321
      %s324 = sphi 0, %s323
      %s338 = sphi 0, %s324
      %s342 = sphi 0, %s342
      %s344 = sphi 0, %s342
      %s345 = sphi 0, %s344
      %s359 = sphi 0, %s345
      %s363 = sphi 0, %s363
      %s365 = sphi 0, %s363
      %s366 = sphi 0, %s365
      %s380 = sphi 0, %s366
      %s384 = sphi 0, %s384
      %s386 = sphi 0, %s384
      %s387 = sphi 0, %s386
      %s401 = sphi 0, %s387
      %s405 = sphi 0, %s405
      %s407 = sphi 0, %s405
      %s408 = sphi 0, %s407
      %s422 = sphi 0, %s408
      %s426 = sphi 0, %s426
      %s428 = sphi 0, %s426
      %s429 = sphi 0, %s428
      %s443 = sphi 0, %s429
      %s447 = sphi 0, %s447
      %s449 = sphi 0, %s447
      %s450 = sphi 0, %s449
      %s464 = sphi 0, %s450
      %s470 = sphi 0, %s472
      %s473 = sphi 0, %s470
      %s474 = sphi 0, %s473
      %s490 = sphi 0, %s474
    $region4: #{tpu_custom_call.1} parent=1 // loop_header_branch
      %38 = sbr.rel (%p36) target = $region8
    $region5: #{tpu_custom_call.1} parent=1 // loop_body
      %s40 = ssub.s32 %s35, 1
      %s41 = ssub.s32 %s35, 2
      %s42 = sadd.s32 %s35, 1
      %s43 = ssub.s32 %s35, %s42
      %p44 = scmp.eq.s32.totalorder %s43, 0
      %s46 = sadd.s32 %s45, 1
      %s47 = scalar_select %p44, %s45, %s46
      %p50 = pneg %p44
      %p51 = scmp.eq.s32.totalorder %s35, 1
      %p52 = por %p50, %p51
      %p53 = scmp.ne.s32.totalorder %s45, %s48
      %p54 = scmp.eq.s32.totalorder %s35, 0
      %p55 = por %p53, %p54
      %p56 = scmp.ne.s32.totalorder %s45, %s48
      %p57 = scmp.eq.s32.totalorder %s40, 1
      %p58 = por %p56, %p57
      %p59 = scmp.ne.s32.totalorder %s48, %s49
      %p60 = scmp.eq.s32.totalorder %s40, 0
      %p61 = por %p59, %p60
      %p62 = scmp.ne.s32.totalorder %s48, %s49
      %p63 = scmp.eq.s32.totalorder %s41, 1
      %p64 = por %p62, %p63
      %p66 = scmp.ne.s32.totalorder %s49, %s65
      %p67 = scmp.eq.s32.totalorder %s41, 0
      %p68 = por %p66, %p67
      %s70 = sadd.s32 %s69, 1
      %p73 = scmp.eq.s32.totalorder %s35, 1
      %p74 = scmp.ne.s32.totalorder %s69, %s71
      %p75 = scmp.eq.s32.totalorder %s35, 0
      %p76 = por %p74, %p75
      %p77 = scmp.ne.s32.totalorder %s69, %s71
      %p78 = scmp.eq.s32.totalorder %s40, 1
      %p79 = por %p77, %p78
      %p80 = scmp.ne.s32.totalorder %s71, %s72
      %p81 = scmp.eq.s32.totalorder %s40, 0
      %p82 = por %p80, %p81
      %p83 = scmp.ne.s32.totalorder %s71, %s72
      %p84 = scmp.eq.s32.totalorder %s41, 1
      %p85 = por %p83, %p84
      %p87 = scmp.ne.s32.totalorder %s72, %s86
      %p88 = scmp.eq.s32.totalorder %s41, 0
      %p89 = por %p87, %p88
      %s91 = sadd.s32 %s90, 1
      %p94 = scmp.eq.s32.totalorder %s35, 1
      %p95 = scmp.ne.s32.totalorder %s90, %s92
      %p96 = scmp.eq.s32.totalorder %s35, 0
      %p97 = por %p95, %p96
      %p98 = scmp.ne.s32.totalorder %s90, %s92
      %p99 = scmp.eq.s32.totalorder %s40, 1
      %p100 = por %p98, %p99
      %p101 = scmp.ne.s32.totalorder %s92, %s93
      %p102 = scmp.eq.s32.totalorder %s40, 0
      %p103 = por %p101, %p102
      %p104 = scmp.ne.s32.totalorder %s92, %s93
      %p105 = scmp.eq.s32.totalorder %s41, 1
      %p106 = por %p104, %p105
      %p108 = scmp.ne.s32.totalorder %s93, %s107
      %p109 = scmp.eq.s32.totalorder %s41, 0
      %p110 = por %p108, %p109
      %s112 = sadd.s32 %s111, 1
      %p115 = scmp.eq.s32.totalorder %s35, 1
      %p116 = scmp.ne.s32.totalorder %s111, %s113
      %p117 = scmp.eq.s32.totalorder %s35, 0
      %p118 = por %p116, %p117
      %p119 = scmp.ne.s32.totalorder %s111, %s113
      %p120 = scmp.eq.s32.totalorder %s40, 1
      %p121 = por %p119, %p120
      %p122 = scmp.ne.s32.totalorder %s113, %s114
      %p123 = scmp.eq.s32.totalorder %s40, 0
      %p124 = por %p122, %p123
      %p125 = scmp.ne.s32.totalorder %s113, %s114
      %p126 = scmp.eq.s32.totalorder %s41, 1
      %p127 = por %p125, %p126
      %p129 = scmp.ne.s32.totalorder %s114, %s128
      %p130 = scmp.eq.s32.totalorder %s41, 0
      %p131 = por %p129, %p130
      %s133 = sadd.s32 %s132, 1
      %p136 = scmp.eq.s32.totalorder %s35, 1
      %p137 = scmp.ne.s32.totalorder %s132, %s134
      %p138 = scmp.eq.s32.totalorder %s35, 0
      %p139 = por %p137, %p138
      %p140 = scmp.ne.s32.totalorder %s132, %s134
      %p141 = scmp.eq.s32.totalorder %s40, 1
      %p142 = por %p140, %p141
      %p143 = scmp.ne.s32.totalorder %s134, %s135
      %p144 = scmp.eq.s32.totalorder %s40, 0
      %p145 = por %p143, %p144
      %p146 = scmp.ne.s32.totalorder %s134, %s135
      %p147 = scmp.eq.s32.totalorder %s41, 1
      %p148 = por %p146, %p147
      %p150 = scmp.ne.s32.totalorder %s135, %s149
      %p151 = scmp.eq.s32.totalorder %s41, 0
      %p152 = por %p150, %p151
      %s154 = sadd.s32 %s153, 1
      %p157 = scmp.eq.s32.totalorder %s35, 1
      %p158 = scmp.ne.s32.totalorder %s153, %s155
      %p159 = scmp.eq.s32.totalorder %s35, 0
      %p160 = por %p158, %p159
      %p161 = scmp.ne.s32.totalorder %s153, %s155
      %p162 = scmp.eq.s32.totalorder %s40, 1
      %p163 = por %p161, %p162
      %p164 = scmp.ne.s32.totalorder %s155, %s156
      %p165 = scmp.eq.s32.totalorder %s40, 0
      %p166 = por %p164, %p165
      %p167 = scmp.ne.s32.totalorder %s155, %s156
      %p168 = scmp.eq.s32.totalorder %s41, 1
      %p169 = por %p167, %p168
      %p171 = scmp.ne.s32.totalorder %s156, %s170
      %p172 = scmp.eq.s32.totalorder %s41, 0
      %p173 = por %p171, %p172
      %s175 = sadd.s32 %s174, 1
      %p178 = scmp.eq.s32.totalorder %s35, 1
      %p179 = scmp.ne.s32.totalorder %s174, %s176
      %p180 = scmp.eq.s32.totalorder %s35, 0
      %p181 = por %p179, %p180
      %p182 = scmp.ne.s32.totalorder %s174, %s176
      %p183 = scmp.eq.s32.totalorder %s40, 1
      %p184 = por %p182, %p183
      %p185 = scmp.ne.s32.totalorder %s176, %s177
      %p186 = scmp.eq.s32.totalorder %s40, 0
      %p187 = por %p185, %p186
      %p188 = scmp.ne.s32.totalorder %s176, %s177
      %p189 = scmp.eq.s32.totalorder %s41, 1
      %p190 = por %p188, %p189
      %p192 = scmp.ne.s32.totalorder %s177, %s191
      %p193 = scmp.eq.s32.totalorder %s41, 0
      %p194 = por %p192, %p193
      %s196 = sadd.s32 %s195, 1
      %p199 = scmp.eq.s32.totalorder %s35, 1
      %p200 = scmp.ne.s32.totalorder %s195, %s197
      %p201 = scmp.eq.s32.totalorder %s35, 0
      %p202 = por %p200, %p201
      %p203 = scmp.ne.s32.totalorder %s195, %s197
      %p204 = scmp.eq.s32.totalorder %s40, 1
      %p205 = por %p203, %p204
      %p206 = scmp.ne.s32.totalorder %s197, %s198
      %p207 = scmp.eq.s32.totalorder %s40, 0
      %p208 = por %p206, %p207
      %p209 = scmp.ne.s32.totalorder %s197, %s198
      %p210 = scmp.eq.s32.totalorder %s41, 1
      %p211 = por %p209, %p210
      %p213 = scmp.ne.s32.totalorder %s198, %s212
      %p214 = scmp.eq.s32.totalorder %s41, 0
      %p215 = por %p213, %p214
      %s217 = sadd.s32 %s216, 1
      %p220 = scmp.eq.s32.totalorder %s35, 1
      %p221 = scmp.ne.s32.totalorder %s216, %s218
      %p222 = scmp.eq.s32.totalorder %s35, 0
      %p223 = por %p221, %p222
      %p224 = scmp.ne.s32.totalorder %s216, %s218
      %p225 = scmp.eq.s32.totalorder %s40, 1
      %p226 = por %p224, %p225
      %p227 = scmp.ne.s32.totalorder %s218, %s219
      %p228 = scmp.eq.s32.totalorder %s40, 0
      %p229 = por %p227, %p228
      %p230 = scmp.ne.s32.totalorder %s218, %s219
      %p231 = scmp.eq.s32.totalorder %s41, 1
      %p232 = por %p230, %p231
      %p234 = scmp.ne.s32.totalorder %s219, %s233
      %p235 = scmp.eq.s32.totalorder %s41, 0
      %p236 = por %p234, %p235
      %s238 = sadd.s32 %s237, 1
      %p241 = scmp.eq.s32.totalorder %s35, 1
      %p242 = scmp.ne.s32.totalorder %s237, %s239
      %p243 = scmp.eq.s32.totalorder %s35, 0
      %p244 = por %p242, %p243
      %p245 = scmp.ne.s32.totalorder %s237, %s239
      %p246 = scmp.eq.s32.totalorder %s40, 1
      %p247 = por %p245, %p246
      %p248 = scmp.ne.s32.totalorder %s239, %s240
      %p249 = scmp.eq.s32.totalorder %s40, 0
      %p250 = por %p248, %p249
      %p251 = scmp.ne.s32.totalorder %s239, %s240
      %p252 = scmp.eq.s32.totalorder %s41, 1
      %p253 = por %p251, %p252
      %p255 = scmp.ne.s32.totalorder %s240, %s254
      %p256 = scmp.eq.s32.totalorder %s41, 0
      %p257 = por %p255, %p256
      %s259 = sadd.s32 %s258, 1
      %p262 = scmp.eq.s32.totalorder %s35, 1
      %p263 = scmp.ne.s32.totalorder %s258, %s260
      %p264 = scmp.eq.s32.totalorder %s35, 0
      %p265 = por %p263, %p264
      %p266 = scmp.ne.s32.totalorder %s258, %s260
      %p267 = scmp.eq.s32.totalorder %s40, 1
      %p268 = por %p266, %p267
      %p269 = scmp.ne.s32.totalorder %s260, %s261
      %p270 = scmp.eq.s32.totalorder %s40, 0
      %p271 = por %p269, %p270
      %p272 = scmp.ne.s32.totalorder %s260, %s261
      %p273 = scmp.eq.s32.totalorder %s41, 1
      %p274 = por %p272, %p273
      %p276 = scmp.ne.s32.totalorder %s261, %s275
      %p277 = scmp.eq.s32.totalorder %s41, 0
      %p278 = por %p276, %p277
      %s280 = sadd.s32 %s279, 1
      %p283 = scmp.eq.s32.totalorder %s35, 1
      %p284 = scmp.ne.s32.totalorder %s279, %s281
      %p285 = scmp.eq.s32.totalorder %s35, 0
      %p286 = por %p284, %p285
      %p287 = scmp.ne.s32.totalorder %s279, %s281
      %p288 = scmp.eq.s32.totalorder %s40, 1
      %p289 = por %p287, %p288
      %p290 = scmp.ne.s32.totalorder %s281, %s282
      %p291 = scmp.eq.s32.totalorder %s40, 0
      %p292 = por %p290, %p291
      %p293 = scmp.ne.s32.totalorder %s281, %s282
      %p294 = scmp.eq.s32.totalorder %s41, 1
      %p295 = por %p293, %p294
      %p297 = scmp.ne.s32.totalorder %s282, %s296
      %p298 = scmp.eq.s32.totalorder %s41, 0
      %p299 = por %p297, %p298
      %s301 = sadd.s32 %s300, 1
      %p304 = scmp.eq.s32.totalorder %s35, 1
      %p305 = scmp.ne.s32.totalorder %s300, %s302
      %p306 = scmp.eq.s32.totalorder %s35, 0
      %p307 = por %p305, %p306
      %p308 = scmp.ne.s32.totalorder %s300, %s302
      %p309 = scmp.eq.s32.totalorder %s40, 1
      %p310 = por %p308, %p309
      %p311 = scmp.ne.s32.totalorder %s302, %s303
      %p312 = scmp.eq.s32.totalorder %s40, 0
      %p313 = por %p311, %p312
      %p314 = scmp.ne.s32.totalorder %s302, %s303
      %p315 = scmp.eq.s32.totalorder %s41, 1
      %p316 = por %p314, %p315
      %p318 = scmp.ne.s32.totalorder %s303, %s317
      %p319 = scmp.eq.s32.totalorder %s41, 0
      %p320 = por %p318, %p319
      %s322 = sadd.s32 %s321, 1
      %p325 = scmp.eq.s32.totalorder %s35, 1
      %p326 = scmp.ne.s32.totalorder %s321, %s323
      %p327 = scmp.eq.s32.totalorder %s35, 0
      %p328 = por %p326, %p327
      %p329 = scmp.ne.s32.totalorder %s321, %s323
      %p330 = scmp.eq.s32.totalorder %s40, 1
      %p331 = por %p329, %p330
      %p332 = scmp.ne.s32.totalorder %s323, %s324
      %p333 = scmp.eq.s32.totalorder %s40, 0
      %p334 = por %p332, %p333
      %p335 = scmp.ne.s32.totalorder %s323, %s324
      %p336 = scmp.eq.s32.totalorder %s41, 1
      %p337 = por %p335, %p336
      %p339 = scmp.ne.s32.totalorder %s324, %s338
      %p340 = scmp.eq.s32.totalorder %s41, 0
      %p341 = por %p339, %p340
      %s343 = sadd.s32 %s342, 1
      %p346 = scmp.eq.s32.totalorder %s35, 1
      %p347 = scmp.ne.s32.totalorder %s342, %s344
      %p348 = scmp.eq.s32.totalorder %s35, 0
      %p349 = por %p347, %p348
      %p350 = scmp.ne.s32.totalorder %s342, %s344
      %p351 = scmp.eq.s32.totalorder %s40, 1
      %p352 = por %p350, %p351
      %p353 = scmp.ne.s32.totalorder %s344, %s345
      %p354 = scmp.eq.s32.totalorder %s40, 0
      %p355 = por %p353, %p354
      %p356 = scmp.ne.s32.totalorder %s344, %s345
      %p357 = scmp.eq.s32.totalorder %s41, 1
      %p358 = por %p356, %p357
      %p360 = scmp.ne.s32.totalorder %s345, %s359
      %p361 = scmp.eq.s32.totalorder %s41, 0
      %p362 = por %p360, %p361
      %s364 = sadd.s32 %s363, 1
      %p367 = scmp.eq.s32.totalorder %s35, 1
      %p368 = scmp.ne.s32.totalorder %s363, %s365
      %p369 = scmp.eq.s32.totalorder %s35, 0
      %p370 = por %p368, %p369
      %p371 = scmp.ne.s32.totalorder %s363, %s365
      %p372 = scmp.eq.s32.totalorder %s40, 1
      %p373 = por %p371, %p372
      %p374 = scmp.ne.s32.totalorder %s365, %s366
      %p375 = scmp.eq.s32.totalorder %s40, 0
      %p376 = por %p374, %p375
      %p377 = scmp.ne.s32.totalorder %s365, %s366
      %p378 = scmp.eq.s32.totalorder %s41, 1
      %p379 = por %p377, %p378
      %p381 = scmp.ne.s32.totalorder %s366, %s380
      %p382 = scmp.eq.s32.totalorder %s41, 0
      %p383 = por %p381, %p382
      %s385 = sadd.s32 %s384, 1
      %p388 = scmp.eq.s32.totalorder %s35, 1
      %p389 = scmp.ne.s32.totalorder %s384, %s386
      %p390 = scmp.eq.s32.totalorder %s35, 0
      %p391 = por %p389, %p390
      %p392 = scmp.ne.s32.totalorder %s384, %s386
      %p393 = scmp.eq.s32.totalorder %s40, 1
      %p394 = por %p392, %p393
      %p395 = scmp.ne.s32.totalorder %s386, %s387
      %p396 = scmp.eq.s32.totalorder %s40, 0
      %p397 = por %p395, %p396
      %p398 = scmp.ne.s32.totalorder %s386, %s387
      %p399 = scmp.eq.s32.totalorder %s41, 1
      %p400 = por %p398, %p399
      %p402 = scmp.ne.s32.totalorder %s387, %s401
      %p403 = scmp.eq.s32.totalorder %s41, 0
      %p404 = por %p402, %p403
      %s406 = sadd.s32 %s405, 1
      %p409 = scmp.eq.s32.totalorder %s35, 1
      %p410 = scmp.ne.s32.totalorder %s405, %s407
      %p411 = scmp.eq.s32.totalorder %s35, 0
      %p412 = por %p410, %p411
      %p413 = scmp.ne.s32.totalorder %s405, %s407
      %p414 = scmp.eq.s32.totalorder %s40, 1
      %p415 = por %p413, %p414
      %p416 = scmp.ne.s32.totalorder %s407, %s408
      %p417 = scmp.eq.s32.totalorder %s40, 0
      %p418 = por %p416, %p417
      %p419 = scmp.ne.s32.totalorder %s407, %s408
      %p420 = scmp.eq.s32.totalorder %s41, 1
      %p421 = por %p419, %p420
      %p423 = scmp.ne.s32.totalorder %s408, %s422
      %p424 = scmp.eq.s32.totalorder %s41, 0
      %p425 = por %p423, %p424
      %s427 = sadd.s32 %s426, 1
      %p430 = scmp.eq.s32.totalorder %s35, 1
      %p431 = scmp.ne.s32.totalorder %s426, %s428
      %p432 = scmp.eq.s32.totalorder %s35, 0
      %p433 = por %p431, %p432
      %p434 = scmp.ne.s32.totalorder %s426, %s428
      %p435 = scmp.eq.s32.totalorder %s40, 1
      %p436 = por %p434, %p435
      %p437 = scmp.ne.s32.totalorder %s428, %s429
      %p438 = scmp.eq.s32.totalorder %s40, 0
      %p439 = por %p437, %p438
      %p440 = scmp.ne.s32.totalorder %s428, %s429
      %p441 = scmp.eq.s32.totalorder %s41, 1
      %p442 = por %p440, %p441
      %p444 = scmp.ne.s32.totalorder %s429, %s443
      %p445 = scmp.eq.s32.totalorder %s41, 0
      %p446 = por %p444, %p445
      %s448 = sadd.s32 %s447, 1
      %p451 = scmp.eq.s32.totalorder %s35, 1
      %p452 = scmp.ne.s32.totalorder %s447, %s449
      %p453 = scmp.eq.s32.totalorder %s35, 0
      %p454 = por %p452, %p453
      %p455 = scmp.ne.s32.totalorder %s447, %s449
      %p456 = scmp.eq.s32.totalorder %s40, 1
      %p457 = por %p455, %p456
      %p458 = scmp.ne.s32.totalorder %s449, %s450
      %p459 = scmp.eq.s32.totalorder %s40, 0
      %p460 = por %p458, %p459
      %p461 = scmp.ne.s32.totalorder %s449, %s450
      %p462 = scmp.eq.s32.totalorder %s41, 1
      %p463 = por %p461, %p462
      %p465 = scmp.ne.s32.totalorder %s450, %s464
      %p466 = scmp.eq.s32.totalorder %s41, 0
      %p467 = por %p465, %p466
      %s468 = ssub.s32 %s35, %s42
      %p469 = scmp.eq.s32.totalorder %s468, 0
      %s471 = sadd.s32 %s470, 1
      %s472 = scalar_select %p469, %s470, %s471
      %p475 = pneg %p469
      %p476 = scmp.eq.s32.totalorder %s35, 1
      %p477 = por %p475, %p476
      %p478 = scmp.ne.s32.totalorder %s470, %s473
      %p479 = scmp.eq.s32.totalorder %s35, 0
      %p480 = por %p478, %p479
      %p481 = scmp.ne.s32.totalorder %s470, %s473
      %p482 = scmp.eq.s32.totalorder %s40, 1
      %p483 = por %p481, %p482
      %p484 = scmp.ne.s32.totalorder %s473, %s474
      %p485 = scmp.eq.s32.totalorder %s40, 0
      %p486 = por %p484, %p485
      %p487 = scmp.ne.s32.totalorder %s473, %s474
      %p488 = scmp.eq.s32.totalorder %s41, 1
      %p489 = por %p487, %p488
      %p491 = scmp.ne.s32.totalorder %s474, %s490
      %p492 = scmp.eq.s32.totalorder %s41, 0
      %p493 = por %p491, %p492
      %p494 = scmp.le.s32.totalorder 1, %s35
      %p495 = scmp.lt.s32.totalorder %s35, 3
      %p496 = pnand %p494, %p495
      %p497 = pneg %p496
      // Predicated region
      $region9: #{tpu_custom_call.1} parent=5 // pred_check
        _
      $region10: #{tpu_custom_call.1} parent=5 // pred_check_branch
        %499 = sbr.rel (%p496) target = $region12
      $region11: #{tpu_custom_call.1} parent=5 // pred_region
        %s500 = ssub.s32 %s35, 1
        // Predicated region
        $region13: #{tpu_custom_call.1} parent=11 // pred_check
          %p501 = pneg %p82
        $region14: #{tpu_custom_call.1} parent=11 // pred_check_branch
          %503 = sbr.rel (%p501) target = $region16
        $region15: #{tpu_custom_call.1} parent=11 // pred_region
          %505 = vsyncadd [#allocation9], 0
          %s506 = sshll.u32 %s1, 4
          %s507 = int_to_ptr.hbm [resolvable:$true] %s506
          %s508 = sshll.u32 [#allocation8], 4
          %s509 = int_to_ptr.vmem [resolvable:$true] %s508
          %514 = dma.hbm_to_vmem [thread:$0]  %s507, 2048, %s509, [#allocation9], 512, 512, 32
        $region16: #{tpu_custom_call.1} parent=11 // pred_fallthru
          _
        // Predicated region
        $region17: #{tpu_custom_call.1} parent=11 // pred_check
          %p515 = pneg %p103
        $region18: #{tpu_custom_call.1} parent=11 // pred_check_branch
          %517 = sbr.rel (%p515) target = $region20
        $region19: #{tpu_custom_call.1} parent=11 // pred_region
          _
        $region20: #{tpu_custom_call.1} parent=11 // pred_fallthru
          _
        // Predicated region
        $region21: #{tpu_custom_call.1} parent=11 // pred_check
          %p518 = pneg %p124
        $region22: #{tpu_custom_call.1} parent=11 // pred_check_branch
          %520 = sbr.rel (%p518) target = $region24
        $region23: #{tpu_custom_call.1} parent=11 // pred_region
          _
        $region24: #{tpu_custom_call.1} parent=11 // pred_fallthru
          _
        // Predicated region
        $region25: #{tpu_custom_call.1} parent=11 // pred_check
          %p521 = pneg %p145
        $region26: #{tpu_custom_call.1} parent=11 // pred_check_branch
          %523 = sbr.rel (%p521) target = $region28
        $region27: #{tpu_custom_call.1} parent=11 // pred_region
          _
        $region28: #{tpu_custom_call.1} parent=11 // pred_fallthru
          _
        // Predicated region
        $region29: #{tpu_custom_call.1} parent=11 // pred_check
          %p524 = pneg %p166
        $region30: #{tpu_custom_call.1} parent=11 // pred_check_branch
          %526 = sbr.rel (%p524) target = $region32
        $region31: #{tpu_custom_call.1} parent=11 // pred_region
          _
        $region32: #{tpu_custom_call.1} parent=11 // pred_fallthru
          _
        // Predicated region
        $region33: #{tpu_custom_call.1} parent=11 // pred_check
          %p527 = pneg %p187
        $region34: #{tpu_custom_call.1} parent=11 // pred_check_branch
          %529 = sbr.rel (%p527) target = $region36
        $region35: #{tpu_custom_call.1} parent=11 // pred_region
          _
        $region36: #{tpu_custom_call.1} parent=11 // pred_fallthru
          _
        // Predicated region
        $region37: #{tpu_custom_call.1} parent=11 // pred_check
          %p530 = pneg %p208
        $region38: #{tpu_custom_call.1} parent=11 // pred_check_branch
          %532 = sbr.rel (%p530) target = $region40
        $region39: #{tpu_custom_call.1} parent=11 // pred_region
          _
        $region40: #{tpu_custom_call.1} parent=11 // pred_fallthru
          _
        // Predicated region
        $region41: #{tpu_custom_call.1} parent=11 // pred_check
          %p533 = pneg %p229
        $region42: #{tpu_custom_call.1} parent=11 // pred_check_branch
          %535 = sbr.rel (%p533) target = $region44
        $region43: #{tpu_custom_call.1} parent=11 // pred_region
          _
        $region44: #{tpu_custom_call.1} parent=11 // pred_fallthru
          _
        // Predicated region
        $region45: #{tpu_custom_call.1} parent=11 // pred_check
          %p536 = pneg %p250
        $region46: #{tpu_custom_call.1} parent=11 // pred_check_branch
          %538 = sbr.rel (%p536) target = $region48
        $region47: #{tpu_custom_call.1} parent=11 // pred_region
          _
        $region48: #{tpu_custom_call.1} parent=11 // pred_fallthru
          _
        // Predicated region
        $region49: #{tpu_custom_call.1} parent=11 // pred_check
          %p539 = pneg %p271
        $region50: #{tpu_custom_call.1} parent=11 // pred_check_branch
          %541 = sbr.rel (%p539) target = $region52
        $region51: #{tpu_custom_call.1} parent=11 // pred_region
          _
        $region52: #{tpu_custom_call.1} parent=11 // pred_fallthru
          _
        // Predicated region
        $region53: #{tpu_custom_call.1} parent=11 // pred_check
          %p542 = pneg %p292
        $region54: #{tpu_custom_call.1} parent=11 // pred_check_branch
          %544 = sbr.rel (%p542) target = $region56
        $region55: #{tpu_custom_call.1} parent=11 // pred_region
          _
        $region56: #{tpu_custom_call.1} parent=11 // pred_fallthru
          _
        // Predicated region
        $region57: #{tpu_custom_call.1} parent=11 // pred_check
          %p545 = pneg %p313
        $region58: #{tpu_custom_call.1} parent=11 // pred_check_branch
          %547 = sbr.rel (%p545) target = $region60
        $region59: #{tpu_custom_call.1} parent=11 // pred_region
          _
        $region60: #{tpu_custom_call.1} parent=11 // pred_fallthru
          _
        // Predicated region
        $region61: #{tpu_custom_call.1} parent=11 // pred_check
          %p548 = pneg %p334
        $region62: #{tpu_custom_call.1} parent=11 // pred_check_branch
          %550 = sbr.rel (%p548) target = $region64
        $region63: #{tpu_custom_call.1} parent=11 // pred_region
          _
        $region64: #{tpu_custom_call.1} parent=11 // pred_fallthru
          _
        // Predicated region
        $region65: #{tpu_custom_call.1} parent=11 // pred_check
          %p551 = pneg %p355
        $region66: #{tpu_custom_call.1} parent=11 // pred_check_branch
          %553 = sbr.rel (%p551) target = $region68
        $region67: #{tpu_custom_call.1} parent=11 // pred_region
          _
        $region68: #{tpu_custom_call.1} parent=11 // pred_fallthru
          _
        // Predicated region
        $region69: #{tpu_custom_call.1} parent=11 // pred_check
          %p554 = pneg %p376
        $region70: #{tpu_custom_call.1} parent=11 // pred_check_branch
          %556 = sbr.rel (%p554) target = $region72
        $region71: #{tpu_custom_call.1} parent=11 // pred_region
          _
        $region72: #{tpu_custom_call.1} parent=11 // pred_fallthru
          _
        // Predicated region
        $region73: #{tpu_custom_call.1} parent=11 // pred_check
          %p557 = pneg %p397
        $region74: #{tpu_custom_call.1} parent=11 // pred_check_branch
          %559 = sbr.rel (%p557) target = $region76
        $region75: #{tpu_custom_call.1} parent=11 // pred_region
          _
        $region76: #{tpu_custom_call.1} parent=11 // pred_fallthru
          _
        // Predicated region
        $region77: #{tpu_custom_call.1} parent=11 // pred_check
          %p560 = pneg %p418
        $region78: #{tpu_custom_call.1} parent=11 // pred_check_branch
          %562 = sbr.rel (%p560) target = $region80
        $region79: #{tpu_custom_call.1} parent=11 // pred_region
          _
        $region80: #{tpu_custom_call.1} parent=11 // pred_fallthru
          _
        // Predicated region
        $region81: #{tpu_custom_call.1} parent=11 // pred_check
          %p563 = pneg %p439
        $region82: #{tpu_custom_call.1} parent=11 // pred_check_branch
          %565 = sbr.rel (%p563) target = $region84
        $region83: #{tpu_custom_call.1} parent=11 // pred_region
          _
        $region84: #{tpu_custom_call.1} parent=11 // pred_fallthru
          _
        // Predicated region
        $region85: #{tpu_custom_call.1} parent=11 // pred_check
          %p566 = pneg %p460
        $region86: #{tpu_custom_call.1} parent=11 // pred_check_branch
          %568 = sbr.rel (%p566) target = $region88
        $region87: #{tpu_custom_call.1} parent=11 // pred_region
          _
        $region88: #{tpu_custom_call.1} parent=11 // pred_fallthru
          _
      $region12: #{tpu_custom_call.1} parent=5 // pred_fallthru
        _
      %p569 = scmp.lt.s32.totalorder %s35, 2
      // Predicated region
      $region89: #{tpu_custom_call.1} parent=5 // pred_check
        %p570 = pneg %p569
      $region90: #{tpu_custom_call.1} parent=5 // pred_check_branch
        %572 = sbr.rel (%p570) target = $region92
      $region91: #{tpu_custom_call.1} parent=5 // pred_region
        // Predicated region
        $region93: #{tpu_custom_call.1} parent=91 // pred_check
          %p573 = pneg %p55
        $region94: #{tpu_custom_call.1} parent=91 // pred_check_branch
          %575 = sbr.rel (%p573) target = $region96
        $region95: #{tpu_custom_call.1} parent=91 // pred_region
          %s576 = sand.u32 %s45, 1
          %s577 = scalar_lea.sflag [#allocation6], %s576
          %s578 = sand.u32 %s45, 1
          %s579 = smul.addr %s578, 64
          %s580 = scalar_lea.vmem [#allocation5], %s579
          %582 = vsyncadd %s577, 0
          %s583 = smul.addr %s35, 8
          %s584 = smul.addr %s583, 8
          %s585 = scalar_lea.hbm %s0, %s584
          %s586 = sshll.u32 %s585, 4
          %s587 = int_to_ptr.hbm [resolvable:$true] %s586
          %s588 = sshll.u32 %s580, 4
          %s589 = int_to_ptr.vmem [resolvable:$true] %s588
          %594 = dma.hbm_to_vmem [thread:$0]  %s587, 1024, %s589, %s577, 512, 512, 32
        $region96: #{tpu_custom_call.1} parent=91 // pred_fallthru
          _
      $region92: #{tpu_custom_call.1} parent=5 // pred_fallthru
        _
      %p595 = scmp.le.s32.totalorder 1, %s35
      %p596 = scmp.lt.s32.totalorder %s35, 3
      %p597 = pnand %p595, %p596
      %p598 = pneg %p597
      // Predicated region
      $region97: #{tpu_custom_call.1} parent=5 // pred_check
        _
      $region98: #{tpu_custom_call.1} parent=5 // pred_check_branch
        %600 = sbr.rel (%p597) target = $region100
      $region99: #{tpu_custom_call.1} parent=5 // pred_region
        %s601 = ssub.s32 %s35, 1
        %s602 = sand.u32 %s48, 1
        %s603 = scalar_lea.sflag [#allocation6], %s602
        %s604 = sand.u32 %s48, 1
        %s605 = smul.addr %s604, 64
        %s606 = scalar_lea.vmem [#allocation5], %s605
        // Predicated region
        $region101: #{tpu_custom_call.1} parent=99 // pred_check
          %p607 = pneg %p61
        $region102: #{tpu_custom_call.1} parent=99 // pred_check_branch
          %609 = sbr.rel (%p607) target = $region104
        $region103: #{tpu_custom_call.1} parent=99 // pred_region
          %611 = dma.done %s603, 1024
        $region104: #{tpu_custom_call.1} parent=99 // pred_fallthru
          _
        // Predicated region
        $region105: #{tpu_custom_call.1} parent=99 // pred_check
          %p612 = pneg %p82
        $region106: #{tpu_custom_call.1} parent=99 // pred_check_branch
          %614 = sbr.rel (%p612) target = $region108
        $region107: #{tpu_custom_call.1} parent=99 // pred_region
          %616 = dma.done [#allocation9], 2048
        $region108: #{tpu_custom_call.1} parent=99 // pred_fallthru
          _
        %s617 = sand.u32 %s48, 1
        %s618 = scalar_lea.sflag [#allocation6], %s617
        %s619 = sand.u32 %s48, 1
        %s620 = smul.addr %s619, 64
        %s621 = scalar_lea.vmem [#allocation5], %s620
        %p622 = pneg %p61
        %p623 = pneg %p58
        %p624 = pneg %p82
        %p625 = pneg %p79
        %p626 = pneg %p103
        %p627 = pneg %p100
        %p628 = pneg %p124
        %p629 = pneg %p121
        %p630 = pneg %p145
        %p631 = pneg %p142
        %p632 = pneg %p166
        %p633 = pneg %p163
        %p634 = pneg %p187
        %p635 = pneg %p184
        %p636 = pneg %p208
        %p637 = pneg %p205
        %p638 = pneg %p229
        %p639 = pneg %p226
        %p640 = pneg %p250
        %p641 = pneg %p247
        %p642 = pneg %p271
        %p643 = pneg %p268
        %p644 = pneg %p292
        %p645 = pneg %p289
        %p646 = pneg %p313
        %p647 = pneg %p310
        %p648 = pneg %p334
        %p649 = pneg %p331
        %p650 = pneg %p355
        %p651 = pneg %p352
        %p652 = pneg %p376
        %p653 = pneg %p373
        %p654 = pneg %p397
        %p655 = pneg %p394
        %p656 = pneg %p418
        %p657 = pneg %p415
        %p658 = pneg %p439
        %p659 = pneg %p436
        %p660 = pneg %p460
        %p661 = pneg %p457
        %p662 = pneg %p486
        %p663 = pneg %p483
        %s664 = sand.u32 %s473, 1
        %s665 = scalar_lea.sflag [#allocation7], %s664
        %s666 = sand.u32 %s473, 1
        %s667 = smul.addr %s666, 64
        %s668 = scalar_lea.vmem [#allocation10], %s667
        %v670 = vld [vmem:[%s606] sm:$0xff]
        %v671 = vld [vmem:[%s606 + $0x8] sm:$0xff]
        %v672 = vld [vmem:[%s606 + $0x10] sm:$0xff]
        %v673 = vld [vmem:[%s606 + $0x18] sm:$0xff]
        %v674 = vld [vmem:[%s606 + $0x20] sm:$0xff]
        %v675 = vld [vmem:[%s606 + $0x28] sm:$0xff]
        %v676 = vld [vmem:[%s606 + $0x30] sm:$0xff]
        %v677 = vld [vmem:[%s606 + $0x38] sm:$0xff]
        %v678 = vpack.c.bf16 %v674, %v670
        %v679 = vpack.c.bf16 %v675, %v671
        %v680 = vpack.c.bf16 %v676, %v672
        %v681 = vpack.c.bf16 %v677, %v673
        %v682 = vld [vmem:[%s2] sm:$0xf]
        %v683 = vld [vmem:[%s3] sm:$0xff]
        %685 = vset.pattern.permute.xlu0 0
        %686 = vperm.xlu0 %685, %v683
        %v687 = vpop.permute.xlu0 %686
        %vm689 = vcmask 130048
        %v691 = vsel %vm689, %v682, 0
        %693 = vmatpush.bf16.msra.mxu0 0
        %694 = vmatpush.bf16.msra.mxu0 0
        %695 = vmatpush.bf16.msra.mxu0 0
        %696 = vmatpush.bf16.msra.mxu0 0
        %697 = vmatpush.bf16.msra.mxu0 0
        %698 = vmatpush.bf16.msra.mxu0 0
        %699 = vmatpush.bf16.msra.mxu0 0
        %700 = vmatpush.bf16.msra.mxu0 %v678
        %701 = vmatmul.bf16.gmra.mxu0 %v691
        %v702 = vpop.f32.mrf.mxu0
        %v703 = vadd.f32 %v687, %v702
        %v704 = vpop.f32.mrf.mxu0
        %705 = vdwg.mxu0
        %706 = vmatpush.bf16.msra.mxu0 0
        %707 = vmatpush.bf16.msra.mxu0 0
        %708 = vmatpush.bf16.msra.mxu0 0
        %709 = vmatpush.bf16.msra.mxu0 0
        %710 = vmatpush.bf16.msra.mxu0 0
        %711 = vmatpush.bf16.msra.mxu0 0
        %712 = vmatpush.bf16.msra.mxu0 0
        %713 = vmatpush.bf16.msra.mxu0 %v679
        %714 = vmatmul.bf16.gmra.mxu0 %v691
        %v715 = vpop.f32.mrf.mxu0
        %v716 = vadd.f32 %v687, %v715
        %v717 = vpop.f32.mrf.mxu0
        %718 = vdwg.mxu0
        %719 = vmatpush.bf16.msra.mxu0 0
        %720 = vmatpush.bf16.msra.mxu0 0
        %721 = vmatpush.bf16.msra.mxu0 0
        %722 = vmatpush.bf16.msra.mxu0 0
        %723 = vmatpush.bf16.msra.mxu0 0
        %724 = vmatpush.bf16.msra.mxu0 0
        %725 = vmatpush.bf16.msra.mxu0 0
        %726 = vmatpush.bf16.msra.mxu0 %v680
        %727 = vmatmul.bf16.gmra.mxu0 %v691
        %v728 = vpop.f32.mrf.mxu0
        %v729 = vadd.f32 %v687, %v728
        %v730 = vpop.f32.mrf.mxu0
        %731 = vdwg.mxu0
        %732 = vmatpush.bf16.msra.mxu0 0
        %733 = vmatpush.bf16.msra.mxu0 0
        %734 = vmatpush.bf16.msra.mxu0 0
        %735 = vmatpush.bf16.msra.mxu0 0
        %736 = vmatpush.bf16.msra.mxu0 0
        %737 = vmatpush.bf16.msra.mxu0 0
        %738 = vmatpush.bf16.msra.mxu0 0
        %739 = vmatpush.bf16.msra.mxu0 %v681
        %740 = vmatmul.bf16.gmra.mxu0 %v691
        %v741 = vpop.f32.mrf.mxu0
        %v742 = vadd.f32 %v687, %v741
        %v743 = vpop.f32.mrf.mxu0
        %744 = vdwg.mxu0
        %v745 = vsub.f32 0.0, %v703
        %v746 = vsub.f32 0.0, %v716
        %v747 = vsub.f32 0.0, %v729
        %v748 = vsub.f32 0.0, %v742
        %v749 = vmul.f32 %v745, 1.442695
        %v750 = vpow.pop %v749
        %v751 = vmul.f32 %v746, 1.442695
        %v752 = vpow.pop %v751
        %v753 = vmul.f32 %v747, 1.442695
        %v754 = vpow.pop %v753
        %v755 = vmul.f32 %v748, 1.442695
        %v756 = vpow.pop %v755
        %v757 = vadd.f32 %v750, 1.0
        %v758 = vadd.f32 %v752, 1.0
        %v759 = vadd.f32 %v754, 1.0
        %v760 = vadd.f32 %v756, 1.0
        %v761 = vrcp.pop %v757
        %v762 = vmul.f32 %v757, %v761
        %v763 = vsub.f32 1.0, %v762
        %v764 = vmul.f32 %v761, %v763
        %v765 = vadd.f32 %v761, %v764
        %vm766 = vweird.f32 %v757
        %vm767 = vweird.f32 %v761
        %vm768 = vmor %vm766, %vm767
        %v769 = vsel %vm768, %v761, %v765
        %v770 = vand.u32 2147483647, %v757
        %vm771 = vcmp.eq.f32.partialorder %v770, 8.507059e+37
        %v772 = vand.u32 %v757, 2147483648
        %v773 = vor.u32 1.1754944e-38, %v772
        %v774 = vsel %vm771, %v773, %v769
        %v775 = vmul.f32 1.0, %v774
        %v776 = vrcp.pop %v758
        %v777 = vmul.f32 %v758, %v776
        %v778 = vsub.f32 1.0, %v777
        %v779 = vmul.f32 %v776, %v778
        %v780 = vadd.f32 %v776, %v779
        %vm781 = vweird.f32 %v758
        %vm782 = vweird.f32 %v776
        %vm783 = vmor %vm781, %vm782
        %v784 = vsel %vm783, %v776, %v780
        %v785 = vand.u32 2147483647, %v758
        %vm786 = vcmp.eq.f32.partialorder %v785, 8.507059e+37
        %v787 = vand.u32 %v758, 2147483648
        %v788 = vor.u32 1.1754944e-38, %v787
        %v789 = vsel %vm786, %v788, %v784
        %v790 = vmul.f32 1.0, %v789
        %v791 = vrcp.pop %v759
        %v792 = vmul.f32 %v759, %v791
        %v793 = vsub.f32 1.0, %v792
        %v794 = vmul.f32 %v791, %v793
        %v795 = vadd.f32 %v791, %v794
        %vm796 = vweird.f32 %v759
        %vm797 = vweird.f32 %v791
        %vm798 = vmor %vm796, %vm797
        %v799 = vsel %vm798, %v791, %v795
        %v800 = vand.u32 2147483647, %v759
        %vm801 = vcmp.eq.f32.partialorder %v800, 8.507059e+37
        %v802 = vand.u32 %v759, 2147483648
        %v803 = vor.u32 1.1754944e-38, %v802
        %v804 = vsel %vm801, %v803, %v799
        %v805 = vmul.f32 1.0, %v804
        %v806 = vrcp.pop %v760
        %v807 = vmul.f32 %v760, %v806
        %v808 = vsub.f32 1.0, %v807
        %v809 = vmul.f32 %v806, %v808
        %v810 = vadd.f32 %v806, %v809
        %vm811 = vweird.f32 %v760
        %vm812 = vweird.f32 %v806
        %vm813 = vmor %vm811, %vm812
        %v814 = vsel %vm813, %v806, %v810
        %v815 = vand.u32 2147483647, %v760
        %vm816 = vcmp.eq.f32.partialorder %v815, 8.507059e+37
        %v817 = vand.u32 %v760, 2147483648
        %v818 = vor.u32 1.1754944e-38, %v817
        %v819 = vsel %vm816, %v818, %v814
        %v820 = vmul.f32 1.0, %v819
        %v821 = vmul.f32 %v703, %v775
        %v822 = vmul.f32 %v716, %v790
        %v823 = vmul.f32 %v729, %v805
        %v824 = vmul.f32 %v742, %v820
        %v825 = vld [vmem:[%s4] sm:$0xf]
        %v826 = vld [vmem:[%s5] sm:$0xff]
        %828 = vset.pattern.permute.xlu0 0
        %829 = vperm.xlu0 %828, %v826
        %v830 = vpop.permute.xlu0 %829
        %v833 = vsel %vm689, %v825, 0
        %835 = vmatpush.bf16.msra.mxu0 0
        %836 = vmatpush.bf16.msra.mxu0 0
        %837 = vmatpush.bf16.msra.mxu0 0
        %838 = vmatpush.bf16.msra.mxu0 0
        %839 = vmatpush.bf16.msra.mxu0 0
        %840 = vmatpush.bf16.msra.mxu0 0
        %841 = vmatpush.bf16.msra.mxu0 0
        %842 = vmatpush.bf16.msra.mxu0 %v678
        %843 = vmatmul.bf16.gmra.mxu0 %v833
        %v844 = vpop.f32.mrf.mxu0
        %v845 = vadd.f32 %v830, %v844
        %v846 = vpop.f32.mrf.mxu0
        %847 = vdwg.mxu0
        %848 = vmatpush.bf16.msra.mxu0 0
        %849 = vmatpush.bf16.msra.mxu0 0
        %850 = vmatpush.bf16.msra.mxu0 0
        %851 = vmatpush.bf16.msra.mxu0 0
        %852 = vmatpush.bf16.msra.mxu0 0
        %853 = vmatpush.bf16.msra.mxu0 0
        %854 = vmatpush.bf16.msra.mxu0 0
        %855 = vmatpush.bf16.msra.mxu0 %v679
        %856 = vmatmul.bf16.gmra.mxu0 %v833
        %v857 = vpop.f32.mrf.mxu0
        %v858 = vadd.f32 %v830, %v857
        %v859 = vpop.f32.mrf.mxu0
        %860 = vdwg.mxu0
        %861 = vmatpush.bf16.msra.mxu0 0
        %862 = vmatpush.bf16.msra.mxu0 0
        %863 = vmatpush.bf16.msra.mxu0 0
        %864 = vmatpush.bf16.msra.mxu0 0
        %865 = vmatpush.bf16.msra.mxu0 0
        %866 = vmatpush.bf16.msra.mxu0 0
        %867 = vmatpush.bf16.msra.mxu0 0
        %868 = vmatpush.bf16.msra.mxu0 %v680
        %869 = vmatmul.bf16.gmra.mxu0 %v833
        %v870 = vpop.f32.mrf.mxu0
        %v871 = vadd.f32 %v830, %v870
        %v872 = vpop.f32.mrf.mxu0
        %873 = vdwg.mxu0
        %874 = vmatpush.bf16.msra.mxu0 0
        %875 = vmatpush.bf16.msra.mxu0 0
        %876 = vmatpush.bf16.msra.mxu0 0
        %877 = vmatpush.bf16.msra.mxu0 0
        %878 = vmatpush.bf16.msra.mxu0 0
        %879 = vmatpush.bf16.msra.mxu0 0
        %880 = vmatpush.bf16.msra.mxu0 0
        %881 = vmatpush.bf16.msra.mxu0 %v681
        %882 = vmatmul.bf16.gmra.mxu0 %v833
        %v883 = vpop.f32.mrf.mxu0
        %v884 = vadd.f32 %v830, %v883
        %v885 = vpop.f32.mrf.mxu0
        %886 = vdwg.mxu0
        %v887 = vsub.f32 0.0, %v845
        %v888 = vsub.f32 0.0, %v858
        %v889 = vsub.f32 0.0, %v871
        %v890 = vsub.f32 0.0, %v884
        %v891 = vmul.f32 %v887, 1.442695
        %v892 = vpow.pop %v891
        %v893 = vmul.f32 %v888, 1.442695
        %v894 = vpow.pop %v893
        %v895 = vmul.f32 %v889, 1.442695
        %v896 = vpow.pop %v895
        %v897 = vmul.f32 %v890, 1.442695
        %v898 = vpow.pop %v897
        %v899 = vadd.f32 %v892, 1.0
        %v900 = vadd.f32 %v894, 1.0
        %v901 = vadd.f32 %v896, 1.0
        %v902 = vadd.f32 %v898, 1.0
        %v903 = vrcp.pop %v899
        %v904 = vmul.f32 %v899, %v903
        %v905 = vsub.f32 1.0, %v904
        %v906 = vmul.f32 %v903, %v905
        %v907 = vadd.f32 %v903, %v906
        %vm908 = vweird.f32 %v899
        %vm909 = vweird.f32 %v903
        %vm910 = vmor %vm908, %vm909
        %v911 = vsel %vm910, %v903, %v907
        %v912 = vand.u32 2147483647, %v899
        %vm913 = vcmp.eq.f32.partialorder %v912, 8.507059e+37
        %v914 = vand.u32 %v899, 2147483648
        %v915 = vor.u32 1.1754944e-38, %v914
        %v916 = vsel %vm913, %v915, %v911
        %v917 = vmul.f32 1.0, %v916
        %v918 = vrcp.pop %v900
        %v919 = vmul.f32 %v900, %v918
        %v920 = vsub.f32 1.0, %v919
        %v921 = vmul.f32 %v918, %v920
        %v922 = vadd.f32 %v918, %v921
        %vm923 = vweird.f32 %v900
        %vm924 = vweird.f32 %v918
        %vm925 = vmor %vm923, %vm924
        %v926 = vsel %vm925, %v918, %v922
        %v927 = vand.u32 2147483647, %v900
        %vm928 = vcmp.eq.f32.partialorder %v927, 8.507059e+37
        %v929 = vand.u32 %v900, 2147483648
        %v930 = vor.u32 1.1754944e-38, %v929
        %v931 = vsel %vm928, %v930, %v926
        %v932 = vmul.f32 1.0, %v931
        %v933 = vrcp.pop %v901
        %v934 = vmul.f32 %v901, %v933
        %v935 = vsub.f32 1.0, %v934
        %v936 = vmul.f32 %v933, %v935
        %v937 = vadd.f32 %v933, %v936
        %vm938 = vweird.f32 %v901
        %vm939 = vweird.f32 %v933
        %vm940 = vmor %vm938, %vm939
        %v941 = vsel %vm940, %v933, %v937
        %v942 = vand.u32 2147483647, %v901
        %vm943 = vcmp.eq.f32.partialorder %v942, 8.507059e+37
        %v944 = vand.u32 %v901, 2147483648
        %v945 = vor.u32 1.1754944e-38, %v944
        %v946 = vsel %vm943, %v945, %v941
        %v947 = vmul.f32 1.0, %v946
        %v948 = vrcp.pop %v902
        %v949 = vmul.f32 %v902, %v948
        %v950 = vsub.f32 1.0, %v949
        %v951 = vmul.f32 %v948, %v950
        %v952 = vadd.f32 %v948, %v951
        %vm953 = vweird.f32 %v902
        %vm954 = vweird.f32 %v948
        %vm955 = vmor %vm953, %vm954
        %v956 = vsel %vm955, %v948, %v952
        %v957 = vand.u32 2147483647, %v902
        %vm958 = vcmp.eq.f32.partialorder %v957, 8.507059e+37
        %v959 = vand.u32 %v902, 2147483648
        %v960 = vor.u32 1.1754944e-38, %v959
        %v961 = vsel %vm958, %v960, %v956
        %v962 = vmul.f32 1.0, %v961
        %v963 = vmul.f32 %v845, %v917
        %v964 = vmul.f32 %v858, %v932
        %v965 = vmul.f32 %v871, %v947
        %v966 = vmul.f32 %v884, %v962
        %v967 = vld [vmem:[%s8] sm:$0xf]
        %v968 = vld [vmem:[%s14] sm:$0xf]
        %v969 = vld [vmem:[%s10] sm:$0x1]
        %v970 = vld [vmem:[#allocation4] sm:$0x1]
        %v971 = vld [vmem:[%s12] sm:$0xf]
        %v972 = vld [vmem:[%s13] sm:$0xf]
        %v973 = vld [vmem:[%s9] sm:$0xf]
        %975 = vset.pattern.permute.xlu0 0
        %976 = vperm.xlu0 %975, %v973
        %v977 = vpop.permute.xlu0 %976
        %v979 = vld [vmem:[%s15] sm:$0xff]
        %981 = vset.pattern.permute.xlu0 0
        %982 = vperm.xlu0 %981, %v979
        %v983 = vpop.permute.xlu0 %982
        %v985 = vld [vmem:[%s6] sm:$0xff]
        %987 = vset.pattern.permute.xlu0 0
        %988 = vperm.xlu0 %987, %v985
        %v989 = vpop.permute.xlu0 %988
        %v991 = vld [vmem:[%s7] sm:$0xff]
        %993 = vset.pattern.permute.xlu0 0
        %994 = vperm.xlu0 %993, %v991
        %v995 = vpop.permute.xlu0 %994
        %v997 = vmul.f32 %v821, %v989
        %v998 = vmul.f32 %v822, %v989
        %v999 = vmul.f32 %v823, %v989
        %v1000 = vmul.f32 %v824, %v989
        %v1001 = vadd.f32 %v997, %v995
        %v1002 = vadd.f32 %v998, %v995
        %v1003 = vadd.f32 %v999, %v995
        %v1004 = vadd.f32 %v1000, %v995
        %v1005 = vmax.f32 %v1001, 0.0
        %v1006 = vmax.f32 %v1002, 0.0
        %v1007 = vmax.f32 %v1003, 0.0
        %v1008 = vmax.f32 %v1004, 0.0
        %1009 = vrot.lane.b32.xlu0 %v821, 34
        %v1010 = vpop.permute.xlu0 %1009
        %1011 = vrot.lane.b32.xlu0 %v822, 34
        %v1012 = vpop.permute.xlu0 %1011
        %1013 = vrot.lane.b32.xlu0 %v823, 34
        %v1014 = vpop.permute.xlu0 %1013
        %1015 = vrot.lane.b32.xlu0 %v824, 34
        %v1016 = vpop.permute.xlu0 %1015
        %v1017 = vlaneseq
        %v1018 = vand.u32 %v1017, 127
        %vm1019 = vcmp.lt.s32.totalorder %v1018, 34
        %v1020 = vsel %vm1019, %v1014, %v1016
        %v1021 = vsel %vm1019, %v1012, %v1014
        %v1022 = vsel %vm1019, %v1010, %v1012
        %v1023 = vsel %vm1019, %v1016, %v1010
        %v1024 = vld [vmem:[#allocation8] ss:$8 sm:$0xf]
        %v1026 = vperm.slane %v1024, 0
        %v1027 = vperm.slane %v1024, 1
        %v1028 = vperm.slane %v1024, 2
        %v1029 = vperm.slane %v1024, 3
        %v1034 = vmul.f32 %v1023, %v1026
        %v1035 = vmul.f32 %v1022, %v1027
        %v1036 = vmul.f32 %v1021, %v1028
        %v1037 = vmul.f32 %v1020, %v1029
        %v1038 = vpack.c.bf16 %v1035, %v1034
        %v1039 = vpack.c.bf16 %v1037, %v1036
        %1040 = vst [vmem:[#allocation2] sm:$0xff] %v1038
        %1041 = vst [vmem:[#allocation2 + $0x8] sm:$0xff] %v1039
        %1042 = vrot.lane.b32.xlu0 %v821, 33
        %v1043 = vpop.permute.xlu0 %1042
        %1044 = vrot.lane.b32.xlu0 %v822, 33
        %v1045 = vpop.permute.xlu0 %1044
        %1046 = vrot.lane.b32.xlu0 %v823, 33
        %v1047 = vpop.permute.xlu0 %1046
        %1048 = vrot.lane.b32.xlu0 %v824, 33
        %v1049 = vpop.permute.xlu0 %1048
        %vm1050 = vcmp.lt.s32.totalorder %v1018, 33
        %v1051 = vsel %vm1050, %v1047, %v1049
        %v1052 = vsel %vm1050, %v1045, %v1047
        %v1053 = vsel %vm1050, %v1043, %v1045
        %v1054 = vsel %vm1050, %v1049, %v1043
        %s1055 = scalar_lea.vmem [#allocation8], 1
        %v1056 = vld [vmem:[%s1055] ss:$8 sm:$0xf]
        %v1058 = vperm.slane %v1056, 0
        %v1059 = vperm.slane %v1056, 1
        %v1060 = vperm.slane %v1056, 2
        %v1061 = vperm.slane %v1056, 3
        %v1066 = vmul.f32 %v1054, %v1058
        %v1067 = vmul.f32 %v1053, %v1059
        %v1068 = vmul.f32 %v1052, %v1060
        %v1069 = vmul.f32 %v1051, %v1061
        %v1070 = vpack.c.bf16 %v1067, %v1066
        %v1071 = vpack.c.bf16 %v1069, %v1068
        %1072 = vst [vmem:[#allocation2 + $0x10] sm:$0xff] %v1070
        %1073 = vst [vmem:[#allocation2 + $0x18] sm:$0xff] %v1071
        %1074 = vrot.lane.b32.xlu0 %v821, 32
        %v1075 = vpop.permute.xlu0 %1074
        %1076 = vrot.lane.b32.xlu0 %v822, 32
        %v1077 = vpop.permute.xlu0 %1076
        %1078 = vrot.lane.b32.xlu0 %v823, 32
        %v1079 = vpop.permute.xlu0 %1078
        %1080 = vrot.lane.b32.xlu0 %v824, 32
        %v1081 = vpop.permute.xlu0 %1080
        %vm1082 = vcmp.lt.s32.totalorder %v1018, 32
        %v1083 = vsel %vm1082, %v1079, %v1081
        %v1084 = vsel %vm1082, %v1077, %v1079
        %v1085 = vsel %vm1082, %v1075, %v1077
        %v1086 = vsel %vm1082, %v1081, %v1075
        %s1087 = scalar_lea.vmem [#allocation8], 2
        %v1088 = vld [vmem:[%s1087] ss:$8 sm:$0xf]
        %v1090 = vperm.slane %v1088, 0
        %v1091 = vperm.slane %v1088, 1
        %v1092 = vperm.slane %v1088, 2
        %v1093 = vperm.slane %v1088, 3
        %v1098 = vmul.f32 %v1086, %v1090
        %v1099 = vmul.f32 %v1085, %v1091
        %v1100 = vmul.f32 %v1084, %v1092
        %v1101 = vmul.f32 %v1083, %v1093
        %v1102 = vpack.c.bf16 %v1099, %v1098
        %v1103 = vpack.c.bf16 %v1101, %v1100
        %1104 = vst [vmem:[#allocation2 + $0x20] sm:$0xff] %v1102
        %1105 = vst [vmem:[#allocation2 + $0x28] sm:$0xff] %v1103
        %1106 = vrot.lane.b32.xlu0 %v821, 31
        %v1107 = vpop.permute.xlu0 %1106
        %1108 = vrot.lane.b32.xlu0 %v822, 31
        %v1109 = vpop.permute.xlu0 %1108
        %1110 = vrot.lane.b32.xlu0 %v823, 31
        %v1111 = vpop.permute.xlu0 %1110
        %1112 = vrot.lane.b32.xlu0 %v824, 31
        %v1113 = vpop.permute.xlu0 %1112
        %vm1114 = vcmp.lt.s32.totalorder %v1018, 31
        %v1115 = vsel %vm1114, %v1111, %v1113
        %v1116 = vsel %vm1114, %v1109, %v1111
        %v1117 = vsel %vm1114, %v1107, %v1109
        %v1118 = vsel %vm1114, %v1113, %v1107
        %s1119 = scalar_lea.vmem [#allocation8], 3
        %v1120 = vld [vmem:[%s1119] ss:$8 sm:$0xf]
        %v1122 = vperm.slane %v1120, 0
        %v1123 = vperm.slane %v1120, 1
        %v1124 = vperm.slane %v1120, 2
        %v1125 = vperm.slane %v1120, 3
        %v1130 = vmul.f32 %v1118, %v1122
        %v1131 = vmul.f32 %v1117, %v1123
        %v1132 = vmul.f32 %v1116, %v1124
        %v1133 = vmul.f32 %v1115, %v1125
        %v1134 = vpack.c.bf16 %v1131, %v1130
        %v1135 = vpack.c.bf16 %v1133, %v1132
        %1136 = vst [vmem:[#allocation2 + $0x30] sm:$0xff] %v1134
        %1137 = vst [vmem:[#allocation2 + $0x38] sm:$0xff] %v1135
        %1138 = vrot.lane.b32.xlu0 %v821, 30
        %v1139 = vpop.permute.xlu0 %1138
        %1140 = vrot.lane.b32.xlu0 %v822, 30
        %v1141 = vpop.permute.xlu0 %1140
        %1142 = vrot.lane.b32.xlu0 %v823, 30
        %v1143 = vpop.permute.xlu0 %1142
        %1144 = vrot.lane.b32.xlu0 %v824, 30
        %v1145 = vpop.permute.xlu0 %1144
        %vm1146 = vcmp.lt.s32.totalorder %v1018, 30
        %v1147 = vsel %vm1146, %v1143, %v1145
        %v1148 = vsel %vm1146, %v1141, %v1143
        %v1149 = vsel %vm1146, %v1139, %v1141
        %v1150 = vsel %vm1146, %v1145, %v1139
        %s1151 = scalar_lea.vmem [#allocation8], 4
        %v1152 = vld [vmem:[%s1151] ss:$8 sm:$0xf]
        %v1154 = vperm.slane %v1152, 0
        %v1155 = vperm.slane %v1152, 1
        %v1156 = vperm.slane %v1152, 2
        %v1157 = vperm.slane %v1152, 3
        %v1162 = vmul.f32 %v1150, %v1154
        %v1163 = vmul.f32 %v1149, %v1155
        %v1164 = vmul.f32 %v1148, %v1156
        %v1165 = vmul.f32 %v1147, %v1157
        %v1166 = vpack.c.bf16 %v1163, %v1162
        %v1167 = vpack.c.bf16 %v1165, %v1164
        %1168 = vst [vmem:[#allocation2 + $0x40] sm:$0xff] %v1166
        %1169 = vst [vmem:[#allocation2 + $0x48] sm:$0xff] %v1167
        %1170 = vrot.lane.b32.xlu0 %v821, 18
        %v1171 = vpop.permute.xlu0 %1170
        %1172 = vrot.lane.b32.xlu0 %v822, 18
        %v1173 = vpop.permute.xlu0 %1172
        %1174 = vrot.lane.b32.xlu0 %v823, 18
        %v1175 = vpop.permute.xlu0 %1174
        %1176 = vrot.lane.b32.xlu0 %v824, 18
        %v1177 = vpop.permute.xlu0 %1176
        %vm1178 = vcmp.lt.s32.totalorder %v1018, 18
        %v1179 = vsel %vm1178, %v1175, %v1177
        %v1180 = vsel %vm1178, %v1173, %v1175
        %v1181 = vsel %vm1178, %v1171, %v1173
        %v1182 = vsel %vm1178, %v1177, %v1171
        %s1183 = scalar_lea.vmem [#allocation8], 5
        %v1184 = vld [vmem:[%s1183] ss:$8 sm:$0xf]
        %v1186 = vperm.slane %v1184, 0
        %v1187 = vperm.slane %v1184, 1
        %v1188 = vperm.slane %v1184, 2
        %v1189 = vperm.slane %v1184, 3
        %v1194 = vmul.f32 %v1182, %v1186
        %v1195 = vmul.f32 %v1181, %v1187
        %v1196 = vmul.f32 %v1180, %v1188
        %v1197 = vmul.f32 %v1179, %v1189
        %v1198 = vpack.c.bf16 %v1195, %v1194
        %v1199 = vpack.c.bf16 %v1197, %v1196
        %1200 = vst [vmem:[#allocation2 + $0x50] sm:$0xff] %v1198
        %1201 = vst [vmem:[#allocation2 + $0x58] sm:$0xff] %v1199
        %1202 = vrot.lane.b32.xlu0 %v821, 17
        %v1203 = vpop.permute.xlu0 %1202
        %1204 = vrot.lane.b32.xlu0 %v822, 17
        %v1205 = vpop.permute.xlu0 %1204
        %1206 = vrot.lane.b32.xlu0 %v823, 17
        %v1207 = vpop.permute.xlu0 %1206
        %1208 = vrot.lane.b32.xlu0 %v824, 17
        %v1209 = vpop.permute.xlu0 %1208
        %vm1210 = vcmp.lt.s32.totalorder %v1018, 17
        %v1211 = vsel %vm1210, %v1207, %v1209
        %v1212 = vsel %vm1210, %v1205, %v1207
        %v1213 = vsel %vm1210, %v1203, %v1205
        %v1214 = vsel %vm1210, %v1209, %v1203
        %s1215 = scalar_lea.vmem [#allocation8], 6
        %v1216 = vld [vmem:[%s1215] ss:$8 sm:$0xf]
        %v1218 = vperm.slane %v1216, 0
        %v1219 = vperm.slane %v1216, 1
        %v1220 = vperm.slane %v1216, 2
        %v1221 = vperm.slane %v1216, 3
        %v1226 = vmul.f32 %v1214, %v1218
        %v1227 = vmul.f32 %v1213, %v1219
        %v1228 = vmul.f32 %v1212, %v1220
        %v1229 = vmul.f32 %v1211, %v1221
        %v1230 = vpack.c.bf16 %v1227, %v1226
        %v1231 = vpack.c.bf16 %v1229, %v1228
        %1232 = vst [vmem:[#allocation2 + $0x60] sm:$0xff] %v1230
        %1233 = vst [vmem:[#allocation2 + $0x68] sm:$0xff] %v1231
        %1234 = vrot.lane.b32.xlu0 %v821, 16
        %v1235 = vpop.permute.xlu0 %1234
        %1236 = vrot.lane.b32.xlu0 %v822, 16
        %v1237 = vpop.permute.xlu0 %1236
        %1238 = vrot.lane.b32.xlu0 %v823, 16
        %v1239 = vpop.permute.xlu0 %1238
        %1240 = vrot.lane.b32.xlu0 %v824, 16
        %v1241 = vpop.permute.xlu0 %1240
        %vm1242 = vcmp.lt.s32.totalorder %v1018, 16
        %v1243 = vsel %vm1242, %v1239, %v1241
        %v1244 = vsel %vm1242, %v1237, %v1239
        %v1245 = vsel %vm1242, %v1235, %v1237
        %v1246 = vsel %vm1242, %v1241, %v1235
        %s1247 = scalar_lea.vmem [#allocation8], 7
        %v1248 = vld [vmem:[%s1247] ss:$8 sm:$0xf]
        %v1250 = vperm.slane %v1248, 0
        %v1251 = vperm.slane %v1248, 1
        %v1252 = vperm.slane %v1248, 2
        %v1253 = vperm.slane %v1248, 3
        %v1258 = vmul.f32 %v1246, %v1250
        %v1259 = vmul.f32 %v1245, %v1251
        %v1260 = vmul.f32 %v1244, %v1252
        %v1261 = vmul.f32 %v1243, %v1253
        %v1262 = vpack.c.bf16 %v1259, %v1258
        %v1263 = vpack.c.bf16 %v1261, %v1260
        %1264 = vst [vmem:[#allocation2 + $0x70] sm:$0xff] %v1262
        %1265 = vst [vmem:[#allocation2 + $0x78] sm:$0xff] %v1263
        %1266 = vrot.lane.b32.xlu0 %v821, 15
        %v1267 = vpop.permute.xlu0 %1266
        %1268 = vrot.lane.b32.xlu0 %v822, 15
        %v1269 = vpop.permute.xlu0 %1268
        %1270 = vrot.lane.b32.xlu0 %v823, 15
        %v1271 = vpop.permute.xlu0 %1270
        %1272 = vrot.lane.b32.xlu0 %v824, 15
        %v1273 = vpop.permute.xlu0 %1272
        %vm1274 = vcmp.lt.s32.totalorder %v1018, 15
        %v1275 = vsel %vm1274, %v1271, %v1273
        %v1276 = vsel %vm1274, %v1269, %v1271
        %v1277 = vsel %vm1274, %v1267, %v1269
        %v1278 = vsel %vm1274, %v1273, %v1267
        %s1279 = scalar_lea.vmem [#allocation8], 32
        %v1280 = vld [vmem:[%s1279] ss:$8 sm:$0xf]
        %v1282 = vperm.slane %v1280, 0
        %v1283 = vperm.slane %v1280, 1
        %v1284 = vperm.slane %v1280, 2
        %v1285 = vperm.slane %v1280, 3
        %v1290 = vmul.f32 %v1278, %v1282
        %v1291 = vmul.f32 %v1277, %v1283
        %v1292 = vmul.f32 %v1276, %v1284
        %v1293 = vmul.f32 %v1275, %v1285
        %v1294 = vpack.c.bf16 %v1291, %v1290
        %v1295 = vpack.c.bf16 %v1293, %v1292
        %1296 = vst [vmem:[#allocation2 + $0x80] sm:$0xff] %v1294
        %1297 = vst [vmem:[#allocation2 + $0x88] sm:$0xff] %v1295
        %1298 = vrot.lane.b32.xlu0 %v821, 14
        %v1299 = vpop.permute.xlu0 %1298
        %1300 = vrot.lane.b32.xlu0 %v822, 14
        %v1301 = vpop.permute.xlu0 %1300
        %1302 = vrot.lane.b32.xlu0 %v823, 14
        %v1303 = vpop.permute.xlu0 %1302
        %1304 = vrot.lane.b32.xlu0 %v824, 14
        %v1305 = vpop.permute.xlu0 %1304
        %vm1306 = vcmp.lt.s32.totalorder %v1018, 14
        %v1307 = vsel %vm1306, %v1303, %v1305
        %v1308 = vsel %vm1306, %v1301, %v1303
        %v1309 = vsel %vm1306, %v1299, %v1301
        %v1310 = vsel %vm1306, %v1305, %v1299
        %s1311 = scalar_lea.vmem [#allocation8], 33
        %v1312 = vld [vmem:[%s1311] ss:$8 sm:$0xf]
        %v1314 = vperm.slane %v1312, 0
        %v1315 = vperm.slane %v1312, 1
        %v1316 = vperm.slane %v1312, 2
        %v1317 = vperm.slane %v1312, 3
        %v1322 = vmul.f32 %v1310, %v1314
        %v1323 = vmul.f32 %v1309, %v1315
        %v1324 = vmul.f32 %v1308, %v1316
        %v1325 = vmul.f32 %v1307, %v1317
        %v1326 = vpack.c.bf16 %v1323, %v1322
        %v1327 = vpack.c.bf16 %v1325, %v1324
        %1328 = vst [vmem:[#allocation2 + $0x90] sm:$0xff] %v1326
        %1329 = vst [vmem:[#allocation2 + $0x98] sm:$0xff] %v1327
        %1330 = vrot.lane.b32.xlu0 %v821, 2
        %v1331 = vpop.permute.xlu0 %1330
        %1332 = vrot.lane.b32.xlu0 %v822, 2
        %v1333 = vpop.permute.xlu0 %1332
        %1334 = vrot.lane.b32.xlu0 %v823, 2
        %v1335 = vpop.permute.xlu0 %1334
        %1336 = vrot.lane.b32.xlu0 %v824, 2
        %v1337 = vpop.permute.xlu0 %1336
        %vm1338 = vcmp.lt.s32.totalorder %v1018, 2
        %v1339 = vsel %vm1338, %v1335, %v1337
        %v1340 = vsel %vm1338, %v1333, %v1335
        %v1341 = vsel %vm1338, %v1331, %v1333
        %v1342 = vsel %vm1338, %v1337, %v1331
        %s1343 = scalar_lea.vmem [#allocation8], 34
        %v1344 = vld [vmem:[%s1343] ss:$8 sm:$0xf]
        %v1346 = vperm.slane %v1344, 0
        %v1347 = vperm.slane %v1344, 1
        %v1348 = vperm.slane %v1344, 2
        %v1349 = vperm.slane %v1344, 3
        %v1354 = vmul.f32 %v1342, %v1346
        %v1355 = vmul.f32 %v1341, %v1347
        %v1356 = vmul.f32 %v1340, %v1348
        %v1357 = vmul.f32 %v1339, %v1349
        %v1358 = vpack.c.bf16 %v1355, %v1354
        %v1359 = vpack.c.bf16 %v1357, %v1356
        %1360 = vst [vmem:[#allocation2 + $0xa0] sm:$0xff] %v1358
        %1361 = vst [vmem:[#allocation2 + $0xa8] sm:$0xff] %v1359
        %1362 = vrot.lane.b32.xlu0 %v821, 1
        %v1363 = vpop.permute.xlu0 %1362
        %1364 = vrot.lane.b32.xlu0 %v822, 1
        %v1365 = vpop.permute.xlu0 %1364
        %1366 = vrot.lane.b32.xlu0 %v823, 1
        %v1367 = vpop.permute.xlu0 %1366
        %1368 = vrot.lane.b32.xlu0 %v824, 1
        %v1369 = vpop.permute.xlu0 %1368
        %vm1370 = vcmp.lt.s32.totalorder %v1018, 1
        %v1371 = vsel %vm1370, %v1367, %v1369
        %v1372 = vsel %vm1370, %v1365, %v1367
        %v1373 = vsel %vm1370, %v1363, %v1365
        %v1374 = vsel %vm1370, %v1369, %v1363
        %s1375 = scalar_lea.vmem [#allocation8], 35
        %v1376 = vld [vmem:[%s1375] ss:$8 sm:$0xf]
        %v1378 = vperm.slane %v1376, 0
        %v1379 = vperm.slane %v1376, 1
        %v1380 = vperm.slane %v1376, 2
        %v1381 = vperm.slane %v1376, 3
        %v1386 = vmul.f32 %v1374, %v1378
        %v1387 = vmul.f32 %v1373, %v1379
        %v1388 = vmul.f32 %v1372, %v1380
        %v1389 = vmul.f32 %v1371, %v1381
        %v1390 = vpack.c.bf16 %v1387, %v1386
        %v1391 = vpack.c.bf16 %v1389, %v1388
        %1392 = vst [vmem:[#allocation2 + $0xb0] sm:$0xff] %v1390
        %1393 = vst [vmem:[#allocation2 + $0xb8] sm:$0xff] %v1391
        %v1394 = vpack.c.bf16 %v822, %v821
        %v1395 = vpack.c.bf16 %v824, %v823
        %1396 = vst [vmem:[#allocation2 + $0xc0] sm:$0xff] %v1394
        %1397 = vst [vmem:[#allocation2 + $0xc8] sm:$0xff] %v1395
        %1398 = vrot.lane.b32.xlu0 %v821, 127
        %v1399 = vpop.permute.xlu0 %1398
        %1400 = vrot.lane.b32.xlu0 %v822, 127
        %v1401 = vpop.permute.xlu0 %1400
        %1402 = vrot.lane.b32.xlu0 %v823, 127
        %v1403 = vpop.permute.xlu0 %1402
        %1404 = vrot.lane.b32.xlu0 %v824, 127
        %v1405 = vpop.permute.xlu0 %1404
        %vm1406 = vcmp.lt.s32.totalorder %v1018, 127
        %v1407 = vsel %vm1406, %v1403, %v1405
        %v1408 = vsel %vm1406, %v1401, %v1403
        %v1409 = vsel %vm1406, %v1399, %v1401
        %v1410 = vsel %vm1406, %v1405, %v1399
        %s1411 = scalar_lea.vmem [#allocation8], 37
        %v1412 = vld [vmem:[%s1411] ss:$8 sm:$0xf]
        %v1414 = vperm.slane %v1412, 0
        %v1415 = vperm.slane %v1412, 1
        %v1416 = vperm.slane %v1412, 2
        %v1417 = vperm.slane %v1412, 3
        %v1422 = vmul.f32 %v1409, %v1414
        %v1423 = vmul.f32 %v1408, %v1415
        %v1424 = vmul.f32 %v1407, %v1416
        %v1425 = vmul.f32 %v1410, %v1417
        %v1426 = vpack.c.bf16 %v1423, %v1422
        %v1427 = vpack.c.bf16 %v1425, %v1424
        %1428 = vst [vmem:[#allocation2 + $0xd0] sm:$0xff] %v1426
        %1429 = vst [vmem:[#allocation2 + $0xd8] sm:$0xff] %v1427
        %1430 = vrot.lane.b32.xlu0 %v821, 126
        %v1431 = vpop.permute.xlu0 %1430
        %1432 = vrot.lane.b32.xlu0 %v822, 126
        %v1433 = vpop.permute.xlu0 %1432
        %1434 = vrot.lane.b32.xlu0 %v823, 126
        %v1435 = vpop.permute.xlu0 %1434
        %1436 = vrot.lane.b32.xlu0 %v824, 126
        %v1437 = vpop.permute.xlu0 %1436
        %vm1438 = vcmp.lt.s32.totalorder %v1018, 126
        %v1439 = vsel %vm1438, %v1435, %v1437
        %v1440 = vsel %vm1438, %v1433, %v1435
        %v1441 = vsel %vm1438, %v1431, %v1433
        %v1442 = vsel %vm1438, %v1437, %v1431
        %s1443 = scalar_lea.vmem [#allocation8], 38
        %v1444 = vld [vmem:[%s1443] ss:$8 sm:$0xf]
        %v1446 = vperm.slane %v1444, 0
        %v1447 = vperm.slane %v1444, 1
        %v1448 = vperm.slane %v1444, 2
        %v1449 = vperm.slane %v1444, 3
        %v1454 = vmul.f32 %v1441, %v1446
        %v1455 = vmul.f32 %v1440, %v1447
        %v1456 = vmul.f32 %v1439, %v1448
        %v1457 = vmul.f32 %v1442, %v1449
        %v1458 = vpack.c.bf16 %v1455, %v1454
        %v1459 = vpack.c.bf16 %v1457, %v1456
        %1460 = vst [vmem:[#allocation2 + $0xe0] sm:$0xff] %v1458
        %1461 = vst [vmem:[#allocation2 + $0xe8] sm:$0xff] %v1459
        %1462 = vrot.lane.b32.xlu0 %v821, 114
        %v1463 = vpop.permute.xlu0 %1462
        %1464 = vrot.lane.b32.xlu0 %v822, 114
        %v1465 = vpop.permute.xlu0 %1464
        %1466 = vrot.lane.b32.xlu0 %v823, 114
        %v1467 = vpop.permute.xlu0 %1466
        %1468 = vrot.lane.b32.xlu0 %v824, 114
        %v1469 = vpop.permute.xlu0 %1468
        %vm1470 = vcmp.lt.s32.totalorder %v1018, 114
        %v1471 = vsel %vm1470, %v1467, %v1469
        %v1472 = vsel %vm1470, %v1465, %v1467
        %v1473 = vsel %vm1470, %v1463, %v1465
        %v1474 = vsel %vm1470, %v1469, %v1463
        %s1475 = scalar_lea.vmem [#allocation8], 39
        %v1476 = vld [vmem:[%s1475] ss:$8 sm:$0xf]
        %v1478 = vperm.slane %v1476, 0
        %v1479 = vperm.slane %v1476, 1
        %v1480 = vperm.slane %v1476, 2
        %v1481 = vperm.slane %v1476, 3
        %v1486 = vmul.f32 %v1473, %v1478
        %v1487 = vmul.f32 %v1472, %v1479
        %v1488 = vmul.f32 %v1471, %v1480
        %v1489 = vmul.f32 %v1474, %v1481
        %v1490 = vpack.c.bf16 %v1487, %v1486
        %v1491 = vpack.c.bf16 %v1489, %v1488
        %1492 = vst [vmem:[#allocation2 + $0xf0] sm:$0xff] %v1490
        %1493 = vst [vmem:[#allocation2 + $0xf8] sm:$0xff] %v1491
        %1494 = vrot.lane.b32.xlu0 %v821, 113
        %v1495 = vpop.permute.xlu0 %1494
        %1496 = vrot.lane.b32.xlu0 %v822, 113
        %v1497 = vpop.permute.xlu0 %1496
        %1498 = vrot.lane.b32.xlu0 %v823, 113
        %v1499 = vpop.permute.xlu0 %1498
        %1500 = vrot.lane.b32.xlu0 %v824, 113
        %v1501 = vpop.permute.xlu0 %1500
        %vm1502 = vcmp.lt.s32.totalorder %v1018, 113
        %v1503 = vsel %vm1502, %v1499, %v1501
        %v1504 = vsel %vm1502, %v1497, %v1499
        %v1505 = vsel %vm1502, %v1495, %v1497
        %v1506 = vsel %vm1502, %v1501, %v1495
        %s1507 = scalar_lea.vmem [#allocation8], 64
        %v1508 = vld [vmem:[%s1507] ss:$8 sm:$0xf]
        %v1510 = vperm.slane %v1508, 0
        %v1511 = vperm.slane %v1508, 1
        %v1512 = vperm.slane %v1508, 2
        %v1513 = vperm.slane %v1508, 3
        %v1518 = vmul.f32 %v1505, %v1510
        %v1519 = vmul.f32 %v1504, %v1511
        %v1520 = vmul.f32 %v1503, %v1512
        %v1521 = vmul.f32 %v1506, %v1513
        %v1522 = vpack.c.bf16 %v1519, %v1518
        %v1523 = vpack.c.bf16 %v1521, %v1520
        %1524 = vst [vmem:[#allocation2 + $0x100] sm:$0xff] %v1522
        %1525 = vst [vmem:[#allocation2 + $0x108] sm:$0xff] %v1523
        %1526 = vrot.lane.b32.xlu0 %v821, 112
        %v1527 = vpop.permute.xlu0 %1526
        %1528 = vrot.lane.b32.xlu0 %v822, 112
        %v1529 = vpop.permute.xlu0 %1528
        %1530 = vrot.lane.b32.xlu0 %v823, 112
        %v1531 = vpop.permute.xlu0 %1530
        %1532 = vrot.lane.b32.xlu0 %v824, 112
        %v1533 = vpop.permute.xlu0 %1532
        %vm1534 = vcmp.lt.s32.totalorder %v1018, 112
        %v1535 = vsel %vm1534, %v1531, %v1533
        %v1536 = vsel %vm1534, %v1529, %v1531
        %v1537 = vsel %vm1534, %v1527, %v1529
        %v1538 = vsel %vm1534, %v1533, %v1527
        %s1539 = scalar_lea.vmem [#allocation8], 65
        %v1540 = vld [vmem:[%s1539] ss:$8 sm:$0xf]
        %v1542 = vperm.slane %v1540, 0
        %v1543 = vperm.slane %v1540, 1
        %v1544 = vperm.slane %v1540, 2
        %v1545 = vperm.slane %v1540, 3
        %v1550 = vmul.f32 %v1537, %v1542
        %v1551 = vmul.f32 %v1536, %v1543
        %v1552 = vmul.f32 %v1535, %v1544
        %v1553 = vmul.f32 %v1538, %v1545
        %v1554 = vpack.c.bf16 %v1551, %v1550
        %v1555 = vpack.c.bf16 %v1553, %v1552
        %1556 = vst [vmem:[#allocation2 + $0x110] sm:$0xff] %v1554
        %1557 = vst [vmem:[#allocation2 + $0x118] sm:$0xff] %v1555
        %1558 = vrot.lane.b32.xlu0 %v821, 111
        %v1559 = vpop.permute.xlu0 %1558
        %1560 = vrot.lane.b32.xlu0 %v822, 111
        %v1561 = vpop.permute.xlu0 %1560
        %1562 = vrot.lane.b32.xlu0 %v823, 111
        %v1563 = vpop.permute.xlu0 %1562
        %1564 = vrot.lane.b32.xlu0 %v824, 111
        %v1565 = vpop.permute.xlu0 %1564
        %vm1566 = vcmp.lt.s32.totalorder %v1018, 111
        %v1567 = vsel %vm1566, %v1563, %v1565
        %v1568 = vsel %vm1566, %v1561, %v1563
        %v1569 = vsel %vm1566, %v1559, %v1561
        %v1570 = vsel %vm1566, %v1565, %v1559
        %s1571 = scalar_lea.vmem [#allocation8], 66
        %v1572 = vld [vmem:[%s1571] ss:$8 sm:$0xf]
        %v1574 = vperm.slane %v1572, 0
        %v1575 = vperm.slane %v1572, 1
        %v1576 = vperm.slane %v1572, 2
        %v1577 = vperm.slane %v1572, 3
        %v1582 = vmul.f32 %v1569, %v1574
        %v1583 = vmul.f32 %v1568, %v1575
        %v1584 = vmul.f32 %v1567, %v1576
        %v1585 = vmul.f32 %v1570, %v1577
        %v1586 = vpack.c.bf16 %v1583, %v1582
        %v1587 = vpack.c.bf16 %v1585, %v1584
        %1588 = vst [vmem:[#allocation2 + $0x120] sm:$0xff] %v1586
        %1589 = vst [vmem:[#allocation2 + $0x128] sm:$0xff] %v1587
        %1590 = vrot.lane.b32.xlu0 %v821, 110
        %v1591 = vpop.permute.xlu0 %1590
        %1592 = vrot.lane.b32.xlu0 %v822, 110
        %v1593 = vpop.permute.xlu0 %1592
        %1594 = vrot.lane.b32.xlu0 %v823, 110
        %v1595 = vpop.permute.xlu0 %1594
        %1596 = vrot.lane.b32.xlu0 %v824, 110
        %v1597 = vpop.permute.xlu0 %1596
        %vm1598 = vcmp.lt.s32.totalorder %v1018, 110
        %v1599 = vsel %vm1598, %v1595, %v1597
        %v1600 = vsel %vm1598, %v1593, %v1595
        %v1601 = vsel %vm1598, %v1591, %v1593
        %v1602 = vsel %vm1598, %v1597, %v1591
        %s1603 = scalar_lea.vmem [#allocation8], 67
        %v1604 = vld [vmem:[%s1603] ss:$8 sm:$0xf]
        %v1606 = vperm.slane %v1604, 0
        %v1607 = vperm.slane %v1604, 1
        %v1608 = vperm.slane %v1604, 2
        %v1609 = vperm.slane %v1604, 3
        %v1614 = vmul.f32 %v1601, %v1606
        %v1615 = vmul.f32 %v1600, %v1607
        %v1616 = vmul.f32 %v1599, %v1608
        %v1617 = vmul.f32 %v1602, %v1609
        %v1618 = vpack.c.bf16 %v1615, %v1614
        %v1619 = vpack.c.bf16 %v1617, %v1616
        %1620 = vst [vmem:[#allocation2 + $0x130] sm:$0xff] %v1618
        %1621 = vst [vmem:[#allocation2 + $0x138] sm:$0xff] %v1619
        %1622 = vrot.lane.b32.xlu0 %v821, 98
        %v1623 = vpop.permute.xlu0 %1622
        %1624 = vrot.lane.b32.xlu0 %v822, 98
        %v1625 = vpop.permute.xlu0 %1624
        %1626 = vrot.lane.b32.xlu0 %v823, 98
        %v1627 = vpop.permute.xlu0 %1626
        %1628 = vrot.lane.b32.xlu0 %v824, 98
        %v1629 = vpop.permute.xlu0 %1628
        %vm1630 = vcmp.lt.s32.totalorder %v1018, 98
        %v1631 = vsel %vm1630, %v1627, %v1629
        %v1632 = vsel %vm1630, %v1625, %v1627
        %v1633 = vsel %vm1630, %v1623, %v1625
        %v1634 = vsel %vm1630, %v1629, %v1623
        %s1635 = scalar_lea.vmem [#allocation8], 68
        %v1636 = vld [vmem:[%s1635] ss:$8 sm:$0xf]
        %v1638 = vperm.slane %v1636, 0
        %v1639 = vperm.slane %v1636, 1
        %v1640 = vperm.slane %v1636, 2
        %v1641 = vperm.slane %v1636, 3
        %v1646 = vmul.f32 %v1633, %v1638
        %v1647 = vmul.f32 %v1632, %v1639
        %v1648 = vmul.f32 %v1631, %v1640
        %v1649 = vmul.f32 %v1634, %v1641
        %v1650 = vpack.c.bf16 %v1647, %v1646
        %v1651 = vpack.c.bf16 %v1649, %v1648
        %1652 = vst [vmem:[#allocation2 + $0x140] sm:$0xff] %v1650
        %1653 = vst [vmem:[#allocation2 + $0x148] sm:$0xff] %v1651
        %1654 = vrot.lane.b32.xlu0 %v821, 97
        %v1655 = vpop.permute.xlu0 %1654
        %1656 = vrot.lane.b32.xlu0 %v822, 97
        %v1657 = vpop.permute.xlu0 %1656
        %1658 = vrot.lane.b32.xlu0 %v823, 97
        %v1659 = vpop.permute.xlu0 %1658
        %1660 = vrot.lane.b32.xlu0 %v824, 97
        %v1661 = vpop.permute.xlu0 %1660
        %vm1662 = vcmp.lt.s32.totalorder %v1018, 97
        %v1663 = vsel %vm1662, %v1659, %v1661
        %v1664 = vsel %vm1662, %v1657, %v1659
        %v1665 = vsel %vm1662, %v1655, %v1657
        %v1666 = vsel %vm1662, %v1661, %v1655
        %s1667 = scalar_lea.vmem [#allocation8], 69
        %v1668 = vld [vmem:[%s1667] ss:$8 sm:$0xf]
        %v1670 = vperm.slane %v1668, 0
        %v1671 = vperm.slane %v1668, 1
        %v1672 = vperm.slane %v1668, 2
        %v1673 = vperm.slane %v1668, 3
        %v1678 = vmul.f32 %v1665, %v1670
        %v1679 = vmul.f32 %v1664, %v1671
        %v1680 = vmul.f32 %v1663, %v1672
        %v1681 = vmul.f32 %v1666, %v1673
        %v1682 = vpack.c.bf16 %v1679, %v1678
        %v1683 = vpack.c.bf16 %v1681, %v1680
        %1684 = vst [vmem:[#allocation2 + $0x150] sm:$0xff] %v1682
        %1685 = vst [vmem:[#allocation2 + $0x158] sm:$0xff] %v1683
        %1686 = vrot.lane.b32.xlu0 %v821, 96
        %v1687 = vpop.permute.xlu0 %1686
        %1688 = vrot.lane.b32.xlu0 %v822, 96
        %v1689 = vpop.permute.xlu0 %1688
        %1690 = vrot.lane.b32.xlu0 %v823, 96
        %v1691 = vpop.permute.xlu0 %1690
        %1692 = vrot.lane.b32.xlu0 %v824, 96
        %v1693 = vpop.permute.xlu0 %1692
        %vm1694 = vcmp.lt.s32.totalorder %v1018, 96
        %v1695 = vsel %vm1694, %v1691, %v1693
        %v1696 = vsel %vm1694, %v1689, %v1691
        %v1697 = vsel %vm1694, %v1687, %v1689
        %v1698 = vsel %vm1694, %v1693, %v1687
        %s1699 = scalar_lea.vmem [#allocation8], 70
        %v1700 = vld [vmem:[%s1699] ss:$8 sm:$0xf]
        %v1702 = vperm.slane %v1700, 0
        %v1703 = vperm.slane %v1700, 1
        %v1704 = vperm.slane %v1700, 2
        %v1705 = vperm.slane %v1700, 3
        %v1710 = vmul.f32 %v1697, %v1702
        %v1711 = vmul.f32 %v1696, %v1703
        %v1712 = vmul.f32 %v1695, %v1704
        %v1713 = vmul.f32 %v1698, %v1705
        %v1714 = vpack.c.bf16 %v1711, %v1710
        %v1715 = vpack.c.bf16 %v1713, %v1712
        %1716 = vst [vmem:[#allocation2 + $0x160] sm:$0xff] %v1714
        %1717 = vst [vmem:[#allocation2 + $0x168] sm:$0xff] %v1715
        %1718 = vrot.lane.b32.xlu0 %v821, 95
        %v1719 = vpop.permute.xlu0 %1718
        %1720 = vrot.lane.b32.xlu0 %v822, 95
        %v1721 = vpop.permute.xlu0 %1720
        %1722 = vrot.lane.b32.xlu0 %v823, 95
        %v1723 = vpop.permute.xlu0 %1722
        %1724 = vrot.lane.b32.xlu0 %v824, 95
        %v1725 = vpop.permute.xlu0 %1724
        %vm1726 = vcmp.lt.s32.totalorder %v1018, 95
        %v1727 = vsel %vm1726, %v1723, %v1725
        %v1728 = vsel %vm1726, %v1721, %v1723
        %v1729 = vsel %vm1726, %v1719, %v1721
        %v1730 = vsel %vm1726, %v1725, %v1719
        %s1731 = scalar_lea.vmem [#allocation8], 71
        %v1732 = vld [vmem:[%s1731] ss:$8 sm:$0xf]
        %v1734 = vperm.slane %v1732, 0
        %v1735 = vperm.slane %v1732, 1
        %v1736 = vperm.slane %v1732, 2
        %v1737 = vperm.slane %v1732, 3
        %v1742 = vmul.f32 %v1729, %v1734
        %v1743 = vmul.f32 %v1728, %v1735
        %v1744 = vmul.f32 %v1727, %v1736
        %v1745 = vmul.f32 %v1730, %v1737
        %v1746 = vpack.c.bf16 %v1743, %v1742
        %v1747 = vpack.c.bf16 %v1745, %v1744
        %1748 = vst [vmem:[#allocation2 + $0x170] sm:$0xff] %v1746
        %1749 = vst [vmem:[#allocation2 + $0x178] sm:$0xff] %v1747
        %1750 = vrot.lane.b32.xlu0 %v821, 94
        %v1751 = vpop.permute.xlu0 %1750
        %1752 = vrot.lane.b32.xlu0 %v822, 94
        %v1753 = vpop.permute.xlu0 %1752
        %1754 = vrot.lane.b32.xlu0 %v823, 94
        %v1755 = vpop.permute.xlu0 %1754
        %1756 = vrot.lane.b32.xlu0 %v824, 94
        %v1757 = vpop.permute.xlu0 %1756
        %vm1758 = vcmp.lt.s32.totalorder %v1018, 94
        %v1759 = vsel %vm1758, %v1755, %v1757
        %v1760 = vsel %vm1758, %v1753, %v1755
        %v1761 = vsel %vm1758, %v1751, %v1753
        %v1762 = vsel %vm1758, %v1757, %v1751
        %s1763 = scalar_lea.vmem [#allocation8], 96
        %v1764 = vld [vmem:[%s1763] ss:$8 sm:$0xf]
        %v1766 = vperm.slane %v1764, 0
        %v1767 = vperm.slane %v1764, 1
        %v1768 = vperm.slane %v1764, 2
        %v1769 = vperm.slane %v1764, 3
        %v1774 = vmul.f32 %v1761, %v1766
        %v1775 = vmul.f32 %v1760, %v1767
        %v1776 = vmul.f32 %v1759, %v1768
        %v1777 = vmul.f32 %v1762, %v1769
        %v1778 = vpack.c.bf16 %v1775, %v1774
        %v1779 = vpack.c.bf16 %v1777, %v1776
        %1780 = vst [vmem:[#allocation2 + $0x180] sm:$0xff] %v1778
        %1781 = vst [vmem:[#allocation2 + $0x188] sm:$0xff] %v1779
        %v1782 = vld [vmem:[#allocation2] sm:$0xff]
        %v1783 = vld [vmem:[#allocation2 + $0x8] sm:$0xff]
        %v1784 = vld [vmem:[#allocation2 + $0x10] sm:$0xff]
        %v1785 = vld [vmem:[#allocation2 + $0x18] sm:$0xff]
        %v1786 = vld [vmem:[#allocation2 + $0x20] sm:$0xff]
        %v1787 = vld [vmem:[#allocation2 + $0x28] sm:$0xff]
        %v1788 = vld [vmem:[#allocation2 + $0x30] sm:$0xff]
        %v1789 = vld [vmem:[#allocation2 + $0x38] sm:$0xff]
        %v1790 = vld [vmem:[#allocation2 + $0x40] sm:$0xff]
        %v1791 = vld [vmem:[#allocation2 + $0x48] sm:$0xff]
        %v1792 = vld [vmem:[#allocation2 + $0x50] sm:$0xff]
        %v1793 = vld [vmem:[#allocation2 + $0x58] sm:$0xff]
        %v1794 = vld [vmem:[#allocation2 + $0x60] sm:$0xff]
        %v1795 = vld [vmem:[#allocation2 + $0x68] sm:$0xff]
        %v1796 = vld [vmem:[#allocation2 + $0x70] sm:$0xff]
        %v1797 = vld [vmem:[#allocation2 + $0x78] sm:$0xff]
        %v1798 = vld [vmem:[#allocation2 + $0x80] sm:$0xff]
        %v1799 = vld [vmem:[#allocation2 + $0x88] sm:$0xff]
        %v1800 = vld [vmem:[#allocation2 + $0x90] sm:$0xff]
        %v1801 = vld [vmem:[#allocation2 + $0x98] sm:$0xff]
        %v1802 = vld [vmem:[#allocation2 + $0xa0] sm:$0xff]
        %v1803 = vld [vmem:[#allocation2 + $0xa8] sm:$0xff]
        %v1804 = vld [vmem:[#allocation2 + $0xb0] sm:$0xff]
        %v1805 = vld [vmem:[#allocation2 + $0xb8] sm:$0xff]
        %v1806 = vld [vmem:[#allocation2 + $0xc0] sm:$0xff]
        %v1807 = vld [vmem:[#allocation2 + $0xc8] sm:$0xff]
        %v1808 = vld [vmem:[#allocation2 + $0xd0] sm:$0xff]
        %v1809 = vld [vmem:[#allocation2 + $0xd8] sm:$0xff]
        %v1810 = vld [vmem:[#allocation2 + $0xe0] sm:$0xff]
        %v1811 = vld [vmem:[#allocation2 + $0xe8] sm:$0xff]
        %v1812 = vld [vmem:[#allocation2 + $0xf0] sm:$0xff]
        %v1813 = vld [vmem:[#allocation2 + $0xf8] sm:$0xff]
        %v1814 = vld [vmem:[#allocation2 + $0x100] sm:$0xff]
        %v1815 = vld [vmem:[#allocation2 + $0x108] sm:$0xff]
        %v1816 = vld [vmem:[#allocation2 + $0x110] sm:$0xff]
        %v1817 = vld [vmem:[#allocation2 + $0x118] sm:$0xff]
        %v1818 = vld [vmem:[#allocation2 + $0x120] sm:$0xff]
        %v1819 = vld [vmem:[#allocation2 + $0x128] sm:$0xff]
        %v1820 = vld [vmem:[#allocation2 + $0x130] sm:$0xff]
        %v1821 = vld [vmem:[#allocation2 + $0x138] sm:$0xff]
        %v1822 = vld [vmem:[#allocation2 + $0x140] sm:$0xff]
        %v1823 = vld [vmem:[#allocation2 + $0x148] sm:$0xff]
        %v1824 = vld [vmem:[#allocation2 + $0x150] sm:$0xff]
        %v1825 = vld [vmem:[#allocation2 + $0x158] sm:$0xff]
        %v1826 = vld [vmem:[#allocation2 + $0x160] sm:$0xff]
        %v1827 = vld [vmem:[#allocation2 + $0x168] sm:$0xff]
        %v1828 = vld [vmem:[#allocation2 + $0x170] sm:$0xff]
        %v1829 = vld [vmem:[#allocation2 + $0x178] sm:$0xff]
        %v1830 = vld [vmem:[#allocation2 + $0x180] sm:$0xff]
        %v1831 = vld [vmem:[#allocation2 + $0x188] sm:$0xff]
        %1833 = vst [vmem:[#allocation1] ss:$4 sm:$0xff] %v967
        %v1834 = vld.sshfl [vmem:[#allocation1] sm:$0xff pattern:$0x73625140]
        %v1835 = vld.sshfl [vmem:[#allocation1 + $0x8] sm:$0xff pattern:$0x73625140]
        %v1887 = vunpack.c.l.b16 %v1782
        %v1888 = vunpack.c.h.b16 %v1782
        %v1889 = vunpack.c.l.b16 %v1783
        %v1890 = vunpack.c.h.b16 %v1783
        %v1891 = vunpack.c.l.b16 %v1784
        %v1892 = vunpack.c.h.b16 %v1784
        %v1893 = vunpack.c.l.b16 %v1785
        %v1894 = vunpack.c.h.b16 %v1785
        %v1895 = vunpack.c.l.b16 %v1786
        %v1896 = vunpack.c.h.b16 %v1786
        %v1897 = vunpack.c.l.b16 %v1787
        %v1898 = vunpack.c.h.b16 %v1787
        %v1899 = vunpack.c.l.b16 %v1788
        %v1900 = vunpack.c.h.b16 %v1788
        %v1901 = vunpack.c.l.b16 %v1789
        %v1902 = vunpack.c.h.b16 %v1789
        %v1903 = vunpack.c.l.b16 %v1790
        %v1904 = vunpack.c.h.b16 %v1790
        %v1905 = vunpack.c.l.b16 %v1791
        %v1906 = vunpack.c.h.b16 %v1791
        %v1907 = vunpack.c.l.b16 %v1792
        %v1908 = vunpack.c.h.b16 %v1792
        %v1909 = vunpack.c.l.b16 %v1793
        %v1910 = vunpack.c.h.b16 %v1793
        %v1911 = vunpack.c.l.b16 %v1794
        %v1912 = vunpack.c.h.b16 %v1794
        %v1913 = vunpack.c.l.b16 %v1795
        %v1914 = vunpack.c.h.b16 %v1795
        %v1915 = vunpack.c.l.b16 %v1796
        %v1916 = vunpack.c.h.b16 %v1796
        %v1917 = vunpack.c.l.b16 %v1797
        %v1918 = vunpack.c.h.b16 %v1797
        %v1919 = vunpack.c.l.b16 %v1798
        %v1920 = vunpack.c.h.b16 %v1798
        %v1921 = vunpack.c.l.b16 %v1799
        %v1922 = vunpack.c.h.b16 %v1799
        %v1923 = vunpack.c.l.b16 %v1800
        %v1924 = vunpack.c.h.b16 %v1800
        %v1925 = vunpack.c.l.b16 %v1801
        %v1926 = vunpack.c.h.b16 %v1801
        %v1927 = vunpack.c.l.b16 %v1802
        %v1928 = vunpack.c.h.b16 %v1802
        %v1929 = vunpack.c.l.b16 %v1803
        %v1930 = vunpack.c.h.b16 %v1803
        %v1931 = vunpack.c.l.b16 %v1804
        %v1932 = vunpack.c.h.b16 %v1804
        %v1933 = vunpack.c.l.b16 %v1805
        %v1934 = vunpack.c.h.b16 %v1805
        %v1935 = vunpack.c.l.b16 %v1806
        %v1936 = vunpack.c.h.b16 %v1806
        %v1937 = vunpack.c.l.b16 %v1807
        %v1938 = vunpack.c.h.b16 %v1807
        %v1939 = vunpack.c.l.b16 %v1808
        %v1940 = vunpack.c.h.b16 %v1808
        %v1941 = vunpack.c.l.b16 %v1809
        %v1942 = vunpack.c.h.b16 %v1809
        %v1943 = vunpack.c.l.b16 %v1810
        %v1944 = vunpack.c.h.b16 %v1810
        %v1945 = vunpack.c.l.b16 %v1811
        %v1946 = vunpack.c.h.b16 %v1811
        %v1947 = vunpack.c.l.b16 %v1812
        %v1948 = vunpack.c.h.b16 %v1812
        %v1949 = vunpack.c.l.b16 %v1813
        %v1950 = vunpack.c.h.b16 %v1813
        %v1951 = vunpack.c.l.b16 %v1814
        %v1952 = vunpack.c.h.b16 %v1814
        %v1953 = vunpack.c.l.b16 %v1815
        %v1954 = vunpack.c.h.b16 %v1815
        %v1955 = vunpack.c.l.b16 %v1816
        %v1956 = vunpack.c.h.b16 %v1816
        %v1957 = vunpack.c.l.b16 %v1817
        %v1958 = vunpack.c.h.b16 %v1817
        %v1959 = vunpack.c.l.b16 %v1818
        %v1960 = vunpack.c.h.b16 %v1818
        %v1961 = vunpack.c.l.b16 %v1819
        %v1962 = vunpack.c.h.b16 %v1819
        %v1963 = vunpack.c.l.b16 %v1820
        %v1964 = vunpack.c.h.b16 %v1820
        %v1965 = vunpack.c.l.b16 %v1821
        %v1966 = vunpack.c.h.b16 %v1821
        %v1967 = vunpack.c.l.b16 %v1822
        %v1968 = vunpack.c.h.b16 %v1822
        %v1969 = vunpack.c.l.b16 %v1823
        %v1970 = vunpack.c.h.b16 %v1823
        %v1971 = vunpack.c.l.b16 %v1824
        %v1972 = vunpack.c.h.b16 %v1824
        %v1973 = vunpack.c.l.b16 %v1825
        %v1974 = vunpack.c.h.b16 %v1825
        %v1975 = vunpack.c.l.b16 %v1826
        %v1976 = vunpack.c.h.b16 %v1826
        %v1977 = vunpack.c.l.b16 %v1827
        %v1978 = vunpack.c.h.b16 %v1827
        %v1979 = vunpack.c.l.b16 %v1828
        %v1980 = vunpack.c.h.b16 %v1828
        %v1981 = vunpack.c.l.b16 %v1829
        %v1982 = vunpack.c.h.b16 %v1829
        %v1983 = vunpack.c.l.b16 %v1830
        %v1984 = vunpack.c.h.b16 %v1830
        %v1985 = vunpack.c.l.b16 %v1831
        %v1986 = vunpack.c.h.b16 %v1831
        %v1987 = vpack.c.b16 %v1891, %v1887
        %v1988 = vpack.c.b16 %v1892, %v1888
        %v1989 = vpack.c.b16 %v1893, %v1889
        %v1990 = vpack.c.b16 %v1894, %v1890
        %v1991 = vpack.c.b16 %v1899, %v1895
        %v1992 = vpack.c.b16 %v1900, %v1896
        %v1993 = vpack.c.b16 %v1901, %v1897
        %v1994 = vpack.c.b16 %v1902, %v1898
        %v1995 = vpack.c.b16 %v1907, %v1903
        %v1996 = vpack.c.b16 %v1908, %v1904
        %v1997 = vpack.c.b16 %v1909, %v1905
        %v1998 = vpack.c.b16 %v1910, %v1906
        %v1999 = vpack.c.b16 %v1915, %v1911
        %v2000 = vpack.c.b16 %v1916, %v1912
        %v2001 = vpack.c.b16 %v1917, %v1913
        %v2002 = vpack.c.b16 %v1918, %v1914
        %v2003 = vpack.c.b16 %v1923, %v1919
        %v2004 = vpack.c.b16 %v1924, %v1920
        %v2005 = vpack.c.b16 %v1925, %v1921
        %v2006 = vpack.c.b16 %v1926, %v1922
        %v2007 = vpack.c.b16 %v1931, %v1927
        %v2008 = vpack.c.b16 %v1932, %v1928
        %v2009 = vpack.c.b16 %v1933, %v1929
        %v2010 = vpack.c.b16 %v1934, %v1930
        %v2011 = vpack.c.b16 %v1939, %v1935
        %v2012 = vpack.c.b16 %v1940, %v1936
        %v2013 = vpack.c.b16 %v1941, %v1937
        %v2014 = vpack.c.b16 %v1942, %v1938
        %v2015 = vpack.c.b16 %v1947, %v1943
        %v2016 = vpack.c.b16 %v1948, %v1944
        %v2017 = vpack.c.b16 %v1949, %v1945
        %v2018 = vpack.c.b16 %v1950, %v1946
        %v2019 = vpack.c.b16 %v1955, %v1951
        %v2020 = vpack.c.b16 %v1956, %v1952
        %v2021 = vpack.c.b16 %v1957, %v1953
        %v2022 = vpack.c.b16 %v1958, %v1954
        %v2023 = vpack.c.b16 %v1963, %v1959
        %v2024 = vpack.c.b16 %v1964, %v1960
        %v2025 = vpack.c.b16 %v1965, %v1961
        %v2026 = vpack.c.b16 %v1966, %v1962
        %v2027 = vpack.c.b16 %v1971, %v1967
        %v2028 = vpack.c.b16 %v1972, %v1968
        %v2029 = vpack.c.b16 %v1973, %v1969
        %v2030 = vpack.c.b16 %v1974, %v1970
        %v2031 = vpack.c.b16 %v1979, %v1975
        %v2032 = vpack.c.b16 %v1980, %v1976
        %v2033 = vpack.c.b16 %v1981, %v1977
        %v2034 = vpack.c.b16 %v1982, %v1978
        %v2035 = vpack.c.b16 %v1983, %v1983
        %v2036 = vpack.c.b16 %v1984, %v1984
        %v2037 = vpack.c.b16 %v1985, %v1985
        %v2038 = vpack.c.b16 %v1986, %v1986
        %vm2087 = vcmask 588800
        %v2088 = vsel %vm2087, %v1835, 0
        %vm2090 = vcmask 1043456
        %v2092 = vsel %vm2090, %v2035, 0
        %v2095 = vsel %vm2090, %v2036, 0
        %v2098 = vsel %vm2090, %v2037, 0
        %v2101 = vsel %vm2090, %v2038, 0
        %2103 = vmatpush.bf16.msra.mxu0 %v2015
        %2104 = vmatpush.bf16.msra.mxu0 %v2011
        %2105 = vmatpush.bf16.msra.mxu0 %v2007
        %2106 = vmatpush.bf16.msra.mxu0 %v2003
        %2107 = vmatpush.bf16.msra.mxu0 %v1999
        %2108 = vmatpush.bf16.msra.mxu0 %v1995
        %2109 = vmatpush.bf16.msra.mxu0 %v1991
        %2110 = vmatpush.bf16.msra.mxu0 %v1987
        %2111 = vmatmul.bf16.gmra.mxu0 %v1834
        %v2112 = vpop.f32.mrf.mxu0
        %v2113 = vadd.f32 %v977, %v2112
        %v2114 = vpop.f32.mrf.mxu0
        %2115 = vdwg.mxu0
        %2116 = vmatpush.bf16.msra.mxu0 0
        %2117 = vmatpush.bf16.msra.mxu0 0
        %2118 = vmatpush.bf16.msra.mxu0 0
        %2119 = vmatpush.bf16.msra.mxu0 %v2092
        %2120 = vmatpush.bf16.msra.mxu0 %v2031
        %2121 = vmatpush.bf16.msra.mxu0 %v2027
        %2122 = vmatpush.bf16.msra.mxu0 %v2023
        %2123 = vmatpush.bf16.msra.mxu0 %v2019
        %2124 = vmatmul.bf16.gmra.mxu0 %v2088
        %v2125 = vpop.f32.mrf.mxu0
        %v2126 = vadd.f32 %v2113, %v2125
        %v2127 = vpop.f32.mrf.mxu0
        %2128 = vdwg.mxu0
        %2129 = vmatpush.bf16.msra.mxu0 %v2016
        %2130 = vmatpush.bf16.msra.mxu0 %v2012
        %2131 = vmatpush.bf16.msra.mxu0 %v2008
        %2132 = vmatpush.bf16.msra.mxu0 %v2004
        %2133 = vmatpush.bf16.msra.mxu0 %v2000
        %2134 = vmatpush.bf16.msra.mxu0 %v1996
        %2135 = vmatpush.bf16.msra.mxu0 %v1992
        %2136 = vmatpush.bf16.msra.mxu0 %v1988
        %2137 = vmatmul.bf16.gmra.mxu0 %v1834
        %v2138 = vpop.f32.mrf.mxu0
        %v2139 = vadd.f32 %v977, %v2138
        %v2140 = vpop.f32.mrf.mxu0
        %2141 = vdwg.mxu0
        %2142 = vmatpush.bf16.msra.mxu0 0
        %2143 = vmatpush.bf16.msra.mxu0 0
        %2144 = vmatpush.bf16.msra.mxu0 0
        %2145 = vmatpush.bf16.msra.mxu0 %v2095
        %2146 = vmatpush.bf16.msra.mxu0 %v2032
        %2147 = vmatpush.bf16.msra.mxu0 %v2028
        %2148 = vmatpush.bf16.msra.mxu0 %v2024
        %2149 = vmatpush.bf16.msra.mxu0 %v2020
        %2150 = vmatmul.bf16.gmra.mxu0 %v2088
        %v2151 = vpop.f32.mrf.mxu0
        %v2152 = vadd.f32 %v2139, %v2151
        %v2153 = vpop.f32.mrf.mxu0
        %2154 = vdwg.mxu0
        %2155 = vmatpush.bf16.msra.mxu0 %v2017
        %2156 = vmatpush.bf16.msra.mxu0 %v2013
        %2157 = vmatpush.bf16.msra.mxu0 %v2009
        %2158 = vmatpush.bf16.msra.mxu0 %v2005
        %2159 = vmatpush.bf16.msra.mxu0 %v2001
        %2160 = vmatpush.bf16.msra.mxu0 %v1997
        %2161 = vmatpush.bf16.msra.mxu0 %v1993
        %2162 = vmatpush.bf16.msra.mxu0 %v1989
        %2163 = vmatmul.bf16.gmra.mxu0 %v1834
        %v2164 = vpop.f32.mrf.mxu0
        %v2165 = vadd.f32 %v977, %v2164
        %v2166 = vpop.f32.mrf.mxu0
        %2167 = vdwg.mxu0
        %2168 = vmatpush.bf16.msra.mxu0 0
        %2169 = vmatpush.bf16.msra.mxu0 0
        %2170 = vmatpush.bf16.msra.mxu0 0
        %2171 = vmatpush.bf16.msra.mxu0 %v2098
        %2172 = vmatpush.bf16.msra.mxu0 %v2033
        %2173 = vmatpush.bf16.msra.mxu0 %v2029
        %2174 = vmatpush.bf16.msra.mxu0 %v2025
        %2175 = vmatpush.bf16.msra.mxu0 %v2021
        %2176 = vmatmul.bf16.gmra.mxu0 %v2088
        %v2177 = vpop.f32.mrf.mxu0
        %v2178 = vadd.f32 %v2165, %v2177
        %v2179 = vpop.f32.mrf.mxu0
        %2180 = vdwg.mxu0
        %2181 = vmatpush.bf16.msra.mxu0 %v2018
        %2182 = vmatpush.bf16.msra.mxu0 %v2014
        %2183 = vmatpush.bf16.msra.mxu0 %v2010
        %2184 = vmatpush.bf16.msra.mxu0 %v2006
        %2185 = vmatpush.bf16.msra.mxu0 %v2002
        %2186 = vmatpush.bf16.msra.mxu0 %v1998
        %2187 = vmatpush.bf16.msra.mxu0 %v1994
        %2188 = vmatpush.bf16.msra.mxu0 %v1990
        %2189 = vmatmul.bf16.gmra.mxu0 %v1834
        %v2190 = vpop.f32.mrf.mxu0
        %v2191 = vadd.f32 %v977, %v2190
        %v2192 = vpop.f32.mrf.mxu0
        %2193 = vdwg.mxu0
        %2194 = vmatpush.bf16.msra.mxu0 0
        %2195 = vmatpush.bf16.msra.mxu0 0
        %2196 = vmatpush.bf16.msra.mxu0 0
        %2197 = vmatpush.bf16.msra.mxu0 %v2101
        %2198 = vmatpush.bf16.msra.mxu0 %v2034
        %2199 = vmatpush.bf16.msra.mxu0 %v2030
        %2200 = vmatpush.bf16.msra.mxu0 %v2026
        %2201 = vmatpush.bf16.msra.mxu0 %v2022
        %2202 = vmatmul.bf16.gmra.mxu0 %v2088
        %v2203 = vpop.f32.mrf.mxu0
        %v2204 = vadd.f32 %v2191, %v2203
        %v2205 = vpop.f32.mrf.mxu0
        %2206 = vdwg.mxu0
        %v2207 = vsub.f32 0.0, %v2126
        %v2208 = vsub.f32 0.0, %v2152
        %v2209 = vsub.f32 0.0, %v2178
        %v2210 = vsub.f32 0.0, %v2204
        %v2211 = vmul.f32 %v2207, 1.442695
        %v2212 = vpow.pop %v2211
        %v2213 = vmul.f32 %v2208, 1.442695
        %v2214 = vpow.pop %v2213
        %v2215 = vmul.f32 %v2209, 1.442695
        %v2216 = vpow.pop %v2215
        %v2217 = vmul.f32 %v2210, 1.442695
        %v2218 = vpow.pop %v2217
        %v2219 = vadd.f32 %v2212, 1.0
        %v2220 = vadd.f32 %v2214, 1.0
        %v2221 = vadd.f32 %v2216, 1.0
        %v2222 = vadd.f32 %v2218, 1.0
        %v2223 = vrcp.pop %v2219
        %v2224 = vmul.f32 %v2219, %v2223
        %v2225 = vsub.f32 1.0, %v2224
        %v2226 = vmul.f32 %v2223, %v2225
        %v2227 = vadd.f32 %v2223, %v2226
        %vm2228 = vweird.f32 %v2219
        %vm2229 = vweird.f32 %v2223
        %vm2230 = vmor %vm2228, %vm2229
        %v2231 = vsel %vm2230, %v2223, %v2227
        %v2232 = vand.u32 2147483647, %v2219
        %vm2233 = vcmp.eq.f32.partialorder %v2232, 8.507059e+37
        %v2234 = vand.u32 %v2219, 2147483648
        %v2235 = vor.u32 1.1754944e-38, %v2234
        %v2236 = vsel %vm2233, %v2235, %v2231
        %v2237 = vmul.f32 1.0, %v2236
        %v2238 = vrcp.pop %v2220
        %v2239 = vmul.f32 %v2220, %v2238
        %v2240 = vsub.f32 1.0, %v2239
        %v2241 = vmul.f32 %v2238, %v2240
        %v2242 = vadd.f32 %v2238, %v2241
        %vm2243 = vweird.f32 %v2220
        %vm2244 = vweird.f32 %v2238
        %vm2245 = vmor %vm2243, %vm2244
        %v2246 = vsel %vm2245, %v2238, %v2242
        %v2247 = vand.u32 2147483647, %v2220
        %vm2248 = vcmp.eq.f32.partialorder %v2247, 8.507059e+37
        %v2249 = vand.u32 %v2220, 2147483648
        %v2250 = vor.u32 1.1754944e-38, %v2249
        %v2251 = vsel %vm2248, %v2250, %v2246
        %v2252 = vmul.f32 1.0, %v2251
        %v2253 = vrcp.pop %v2221
        %v2254 = vmul.f32 %v2221, %v2253
        %v2255 = vsub.f32 1.0, %v2254
        %v2256 = vmul.f32 %v2253, %v2255
        %v2257 = vadd.f32 %v2253, %v2256
        %vm2258 = vweird.f32 %v2221
        %vm2259 = vweird.f32 %v2253
        %vm2260 = vmor %vm2258, %vm2259
        %v2261 = vsel %vm2260, %v2253, %v2257
        %v2262 = vand.u32 2147483647, %v2221
        %vm2263 = vcmp.eq.f32.partialorder %v2262, 8.507059e+37
        %v2264 = vand.u32 %v2221, 2147483648
        %v2265 = vor.u32 1.1754944e-38, %v2264
        %v2266 = vsel %vm2263, %v2265, %v2261
        %v2267 = vmul.f32 1.0, %v2266
        %v2268 = vrcp.pop %v2222
        %v2269 = vmul.f32 %v2222, %v2268
        %v2270 = vsub.f32 1.0, %v2269
        %v2271 = vmul.f32 %v2268, %v2270
        %v2272 = vadd.f32 %v2268, %v2271
        %vm2273 = vweird.f32 %v2222
        %vm2274 = vweird.f32 %v2268
        %vm2275 = vmor %vm2273, %vm2274
        %v2276 = vsel %vm2275, %v2268, %v2272
        %v2277 = vand.u32 2147483647, %v2222
        %vm2278 = vcmp.eq.f32.partialorder %v2277, 8.507059e+37
        %v2279 = vand.u32 %v2222, 2147483648
        %v2280 = vor.u32 1.1754944e-38, %v2279
        %v2281 = vsel %vm2278, %v2280, %v2276
        %v2282 = vmul.f32 1.0, %v2281
        %v2283 = vmul.f32 %v2126, %v2237
        %v2284 = vmul.f32 %v2152, %v2252
        %v2285 = vmul.f32 %v2178, %v2267
        %v2286 = vmul.f32 %v2204, %v2282
        %v2287 = vsel %vm2090, %v2283, 0.0
        %v2288 = vsel %vm2090, %v2284, 0.0
        %v2289 = vadd.f32 %v2287, %v2288
        %2290 = vadd.xlane.f32.xlu0 %v2289
        %v2291 = vpop.xlane.xlu0 %2290
        %v2292 = vrcp.pop 256.0
        %v2293 = vmul.f32 256.0, %v2292
        %v2294 = vsub.f32 1.0, %v2293
        %v2295 = vmul.f32 %v2292, %v2294
        %v2296 = vadd.f32 %v2292, %v2295
        %vm2297 = vweird.f32 %v2292
        %v2298 = vsel %vm2297, %v2292, %v2296
        %v2299 = vmul.f32 %v2291, %v2298
        %v2300 = vsel %vm2090, %v2285, 0.0
        %v2301 = vsel %vm2090, %v2286, 0.0
        %v2302 = vadd.f32 %v2300, %v2301
        %2303 = vadd.xlane.f32.xlu0 %v2302
        %v2304 = vpop.xlane.xlu0 %2303
        %v2305 = vmul.f32 %v2304, %v2298
        %vm2306 = vcmask 7168
        %v2307 = vsel %vm2306, %v2299, %v2305
        %2309 = vset.pattern.permute.xlu0 0
        %2310 = vperm.xlu0 %2309, %v970
        %v2311 = vpop.permute.xlu0 %2310
        %v2313 = vperm.slane %v2311, 0
        %vm2314 = vcmask 31744
        %v2316 = vsel %vm2314, %v969, 0
        %v2319 = vsel %vm2090, %v2307, 0
        %2321 = vmatpush.msra.mxu0 0.0
        %2322 = vmatpush.msra.mxu0 0.0
        %2323 = vmatpush.msra.mxu0 0.0
        %2324 = vmatpush.msra.mxu0 0.0
        %2325 = vmatpush.msra.mxu0 0.0
        %2326 = vmatpush.msra.mxu0 0.0
        %2327 = vmatpush.msra.mxu0 0.0
        %2328 = vmatpush.msra.mxu0 0.0
        %2329 = vmatpush.msra.mxu0 0.0
        %2330 = vmatpush.msra.mxu0 0.0
        %2331 = vmatpush.msra.mxu0 0.0
        %2332 = vmatpush.msra.mxu0 0.0
        %2333 = vmatpush.msra.mxu0 0.0
        %2334 = vmatpush.msra.mxu0 0.0
        %2335 = vmatpush.msra.mxu0 0.0
        %2336 = vmatpush.msra.mxu0 %v2319
        %2337 = vmatmul.f32.gmra.mxu0 %v2316
        %v2338 = vpop.f32.mrf.mxu0
        %v2339 = vadd.f32 %v2313, %v2338
        %2340 = vdwg.mxu0
        %v2341 = vmax.f32 %v2339, 0.0
        %2343 = vset.pattern.permute.xlu0 0
        %2344 = vperm.xlu0 %2343, %v972
        %v2345 = vpop.permute.xlu0 %2344
        %v2348 = vsel %vm2306, %v971, 0
        %vm2350 = vcmask 1040384
        %v2352 = vsel %vm2350, %v2341, 0
        %2354 = vmatpush.msra.mxu0 0.0
        %2355 = vmatpush.msra.mxu0 0.0
        %2356 = vmatpush.msra.mxu0 0.0
        %2357 = vmatpush.msra.mxu0 0.0
        %2358 = vmatpush.msra.mxu0 0.0
        %2359 = vmatpush.msra.mxu0 0.0
        %2360 = vmatpush.msra.mxu0 0.0
        %2361 = vmatpush.msra.mxu0 0.0
        %2362 = vmatpush.msra.mxu0 0.0
        %2363 = vmatpush.msra.mxu0 0.0
        %2364 = vmatpush.msra.mxu0 0.0
        %2365 = vmatpush.msra.mxu0 0.0
        %2366 = vmatpush.msra.mxu0 0.0
        %2367 = vmatpush.msra.mxu0 0.0
        %2368 = vmatpush.msra.mxu0 0.0
        %2369 = vmatpush.msra.mxu0 %v2352
        %2370 = vmatmul.f32.gmra.mxu0 %v2348
        %v2371 = vpop.f32.mrf.mxu0
        %v2372 = vadd.f32 %v2345, %v2371
        %2373 = vdwg.mxu0
        %v2374 = vsub.f32 0.0, %v2372
        %v2375 = vmul.f32 %v2374, 1.442695
        %v2376 = vpow.pop %v2375
        %v2377 = vadd.f32 %v2376, 1.0
        %v2378 = vrcp.pop %v2377
        %v2379 = vmul.f32 %v2377, %v2378
        %v2380 = vsub.f32 1.0, %v2379
        %v2381 = vmul.f32 %v2378, %v2380
        %v2382 = vadd.f32 %v2378, %v2381
        %vm2383 = vweird.f32 %v2377
        %vm2384 = vweird.f32 %v2378
        %vm2385 = vmor %vm2383, %vm2384
        %v2386 = vsel %vm2385, %v2378, %v2382
        %v2387 = vand.u32 2147483647, %v2377
        %vm2388 = vcmp.eq.f32.partialorder %v2387, 8.507059e+37
        %v2389 = vand.u32 %v2377, 2147483648
        %v2390 = vor.u32 1.1754944e-38, %v2389
        %v2391 = vsel %vm2388, %v2390, %v2386
        %v2392 = vmul.f32 1.0, %v2391
        %2394 = vset.pattern.permute.xlu0 0
        %2395 = vperm.xlu0 %2394, %v2392
        %v2396 = vpop.permute.xlu0 %2395
        %2398 = vset.pattern.permute.xlu0 1
        %2399 = vperm.xlu0 %2398, %v2392
        %v2400 = vpop.permute.xlu0 %2399
        %v2402 = vmul.f32 %v2283, %v2396
        %v2403 = vmul.f32 %v2284, %v2396
        %v2404 = vmul.f32 %v2285, %v2400
        %v2405 = vmul.f32 %v2286, %v2400
        %2406 = vrot.lane.b32.xlu0 %v2402, 34
        %v2407 = vpop.permute.xlu0 %2406
        %2408 = vrot.lane.b32.xlu0 %v2403, 34
        %v2409 = vpop.permute.xlu0 %2408
        %2410 = vrot.lane.b32.xlu0 %v2404, 34
        %v2411 = vpop.permute.xlu0 %2410
        %2412 = vrot.lane.b32.xlu0 %v2405, 34
        %v2413 = vpop.permute.xlu0 %2412
        %v2414 = vsel %vm1019, %v2411, %v2413
        %v2415 = vsel %vm1019, %v2409, %v2411
        %v2416 = vsel %vm1019, %v2407, %v2409
        %v2417 = vsel %vm1019, %v2413, %v2407
        %v2418 = vld [vmem:[#allocation8] ss:$8 sm:$0xf]
        %v2420 = vperm.slane %v2418, 0
        %v2421 = vperm.slane %v2418, 1
        %v2422 = vperm.slane %v2418, 2
        %v2423 = vperm.slane %v2418, 3
        %v2428 = vmul.f32 %v2417, %v2420
        %v2429 = vmul.f32 %v2416, %v2421
        %v2430 = vmul.f32 %v2415, %v2422
        %v2431 = vmul.f32 %v2414, %v2423
        %v2432 = vpack.c.bf16 %v2429, %v2428
        %v2433 = vpack.c.bf16 %v2431, %v2430
        %2434 = vst [vmem:[#allocation3] sm:$0x33] %v2432
        %2435 = vst [vmem:[#allocation3 + $0x8] sm:$0x33] %v2433
        %2436 = vrot.lane.b32.xlu0 %v2402, 33
        %v2437 = vpop.permute.xlu0 %2436
        %2438 = vrot.lane.b32.xlu0 %v2403, 33
        %v2439 = vpop.permute.xlu0 %2438
        %2440 = vrot.lane.b32.xlu0 %v2404, 33
        %v2441 = vpop.permute.xlu0 %2440
        %2442 = vrot.lane.b32.xlu0 %v2405, 33
        %v2443 = vpop.permute.xlu0 %2442
        %v2444 = vsel %vm1050, %v2441, %v2443
        %v2445 = vsel %vm1050, %v2439, %v2441
        %v2446 = vsel %vm1050, %v2437, %v2439
        %v2447 = vsel %vm1050, %v2443, %v2437
        %v2448 = vld [vmem:[%s1055] ss:$8 sm:$0xf]
        %v2450 = vperm.slane %v2448, 0
        %v2451 = vperm.slane %v2448, 1
        %v2452 = vperm.slane %v2448, 2
        %v2453 = vperm.slane %v2448, 3
        %v2458 = vmul.f32 %v2447, %v2450
        %v2459 = vmul.f32 %v2446, %v2451
        %v2460 = vmul.f32 %v2445, %v2452
        %v2461 = vmul.f32 %v2444, %v2453
        %v2462 = vpack.c.bf16 %v2459, %v2458
        %v2463 = vpack.c.bf16 %v2461, %v2460
        %v2466 = vrot.slane %v2462, 6
        %v2467 = vrot.slane %v2463, 6
        %2470 = vst [vmem:[#allocation3] sm:$0xcc] %v2466
        %2471 = vst [vmem:[#allocation3 + $0x8] sm:$0xcc] %v2467
        %2472 = vrot.lane.b32.xlu0 %v2402, 32
        %v2473 = vpop.permute.xlu0 %2472
        %2474 = vrot.lane.b32.xlu0 %v2403, 32
        %v2475 = vpop.permute.xlu0 %2474
        %2476 = vrot.lane.b32.xlu0 %v2404, 32
        %v2477 = vpop.permute.xlu0 %2476
        %2478 = vrot.lane.b32.xlu0 %v2405, 32
        %v2479 = vpop.permute.xlu0 %2478
        %v2480 = vsel %vm1082, %v2477, %v2479
        %v2481 = vsel %vm1082, %v2475, %v2477
        %v2482 = vsel %vm1082, %v2473, %v2475
        %v2483 = vsel %vm1082, %v2479, %v2473
        %v2484 = vld [vmem:[%s1087] ss:$8 sm:$0xf]
        %v2486 = vperm.slane %v2484, 0
        %v2487 = vperm.slane %v2484, 1
        %v2488 = vperm.slane %v2484, 2
        %v2489 = vperm.slane %v2484, 3
        %v2494 = vmul.f32 %v2483, %v2486
        %v2495 = vmul.f32 %v2482, %v2487
        %v2496 = vmul.f32 %v2481, %v2488
        %v2497 = vmul.f32 %v2480, %v2489
        %v2498 = vpack.c.bf16 %v2495, %v2494
        %v2499 = vpack.c.bf16 %v2497, %v2496
        %2500 = vst [vmem:[#allocation3 + $0x10] sm:$0x33] %v2498
        %2501 = vst [vmem:[#allocation3 + $0x18] sm:$0x33] %v2499
        %2502 = vrot.lane.b32.xlu0 %v2402, 31
        %v2503 = vpop.permute.xlu0 %2502
        %2504 = vrot.lane.b32.xlu0 %v2403, 31
        %v2505 = vpop.permute.xlu0 %2504
        %2506 = vrot.lane.b32.xlu0 %v2404, 31
        %v2507 = vpop.permute.xlu0 %2506
        %2508 = vrot.lane.b32.xlu0 %v2405, 31
        %v2509 = vpop.permute.xlu0 %2508
        %v2510 = vsel %vm1114, %v2507, %v2509
        %v2511 = vsel %vm1114, %v2505, %v2507
        %v2512 = vsel %vm1114, %v2503, %v2505
        %v2513 = vsel %vm1114, %v2509, %v2503
        %v2514 = vld [vmem:[%s1119] ss:$8 sm:$0xf]
        %v2516 = vperm.slane %v2514, 0
        %v2517 = vperm.slane %v2514, 1
        %v2518 = vperm.slane %v2514, 2
        %v2519 = vperm.slane %v2514, 3
        %v2524 = vmul.f32 %v2513, %v2516
        %v2525 = vmul.f32 %v2512, %v2517
        %v2526 = vmul.f32 %v2511, %v2518
        %v2527 = vmul.f32 %v2510, %v2519
        %v2528 = vpack.c.bf16 %v2525, %v2524
        %v2529 = vpack.c.bf16 %v2527, %v2526
        %v2532 = vrot.slane %v2528, 6
        %v2533 = vrot.slane %v2529, 6
        %2536 = vst [vmem:[#allocation3 + $0x10] sm:$0xcc] %v2532
        %2537 = vst [vmem:[#allocation3 + $0x18] sm:$0xcc] %v2533
        %2538 = vrot.lane.b32.xlu0 %v2402, 30
        %v2539 = vpop.permute.xlu0 %2538
        %2540 = vrot.lane.b32.xlu0 %v2403, 30
        %v2541 = vpop.permute.xlu0 %2540
        %2542 = vrot.lane.b32.xlu0 %v2404, 30
        %v2543 = vpop.permute.xlu0 %2542
        %2544 = vrot.lane.b32.xlu0 %v2405, 30
        %v2545 = vpop.permute.xlu0 %2544
        %v2546 = vsel %vm1146, %v2543, %v2545
        %v2547 = vsel %vm1146, %v2541, %v2543
        %v2548 = vsel %vm1146, %v2539, %v2541
        %v2549 = vsel %vm1146, %v2545, %v2539
        %v2550 = vld [vmem:[%s1151] ss:$8 sm:$0xf]
        %v2552 = vperm.slane %v2550, 0
        %v2553 = vperm.slane %v2550, 1
        %v2554 = vperm.slane %v2550, 2
        %v2555 = vperm.slane %v2550, 3
        %v2560 = vmul.f32 %v2549, %v2552
        %v2561 = vmul.f32 %v2548, %v2553
        %v2562 = vmul.f32 %v2547, %v2554
        %v2563 = vmul.f32 %v2546, %v2555
        %v2564 = vpack.c.bf16 %v2561, %v2560
        %v2565 = vpack.c.bf16 %v2563, %v2562
        %2566 = vst [vmem:[#allocation3 + $0x20] sm:$0x33] %v2564
        %2567 = vst [vmem:[#allocation3 + $0x28] sm:$0x33] %v2565
        %2568 = vrot.lane.b32.xlu0 %v2402, 18
        %v2569 = vpop.permute.xlu0 %2568
        %2570 = vrot.lane.b32.xlu0 %v2403, 18
        %v2571 = vpop.permute.xlu0 %2570
        %2572 = vrot.lane.b32.xlu0 %v2404, 18
        %v2573 = vpop.permute.xlu0 %2572
        %2574 = vrot.lane.b32.xlu0 %v2405, 18
        %v2575 = vpop.permute.xlu0 %2574
        %v2576 = vsel %vm1178, %v2573, %v2575
        %v2577 = vsel %vm1178, %v2571, %v2573
        %v2578 = vsel %vm1178, %v2569, %v2571
        %v2579 = vsel %vm1178, %v2575, %v2569
        %v2580 = vld [vmem:[%s1183] ss:$8 sm:$0xf]
        %v2582 = vperm.slane %v2580, 0
        %v2583 = vperm.slane %v2580, 1
        %v2584 = vperm.slane %v2580, 2
        %v2585 = vperm.slane %v2580, 3
        %v2590 = vmul.f32 %v2579, %v2582
        %v2591 = vmul.f32 %v2578, %v2583
        %v2592 = vmul.f32 %v2577, %v2584
        %v2593 = vmul.f32 %v2576, %v2585
        %v2594 = vpack.c.bf16 %v2591, %v2590
        %v2595 = vpack.c.bf16 %v2593, %v2592
        %v2598 = vrot.slane %v2594, 6
        %v2599 = vrot.slane %v2595, 6
        %2602 = vst [vmem:[#allocation3 + $0x20] sm:$0xcc] %v2598
        %2603 = vst [vmem:[#allocation3 + $0x28] sm:$0xcc] %v2599
        %2604 = vrot.lane.b32.xlu0 %v2402, 17
        %v2605 = vpop.permute.xlu0 %2604
        %2606 = vrot.lane.b32.xlu0 %v2403, 17
        %v2607 = vpop.permute.xlu0 %2606
        %2608 = vrot.lane.b32.xlu0 %v2404, 17
        %v2609 = vpop.permute.xlu0 %2608
        %2610 = vrot.lane.b32.xlu0 %v2405, 17
        %v2611 = vpop.permute.xlu0 %2610
        %v2612 = vsel %vm1210, %v2609, %v2611
        %v2613 = vsel %vm1210, %v2607, %v2609
        %v2614 = vsel %vm1210, %v2605, %v2607
        %v2615 = vsel %vm1210, %v2611, %v2605
        %v2616 = vld [vmem:[%s1215] ss:$8 sm:$0xf]
        %v2618 = vperm.slane %v2616, 0
        %v2619 = vperm.slane %v2616, 1
        %v2620 = vperm.slane %v2616, 2
        %v2621 = vperm.slane %v2616, 3
        %v2626 = vmul.f32 %v2615, %v2618
        %v2627 = vmul.f32 %v2614, %v2619
        %v2628 = vmul.f32 %v2613, %v2620
        %v2629 = vmul.f32 %v2612, %v2621
        %v2630 = vpack.c.bf16 %v2627, %v2626
        %v2631 = vpack.c.bf16 %v2629, %v2628
        %2632 = vst [vmem:[#allocation3 + $0x30] sm:$0x33] %v2630
        %2633 = vst [vmem:[#allocation3 + $0x38] sm:$0x33] %v2631
        %2634 = vrot.lane.b32.xlu0 %v2402, 16
        %v2635 = vpop.permute.xlu0 %2634
        %2636 = vrot.lane.b32.xlu0 %v2403, 16
        %v2637 = vpop.permute.xlu0 %2636
        %2638 = vrot.lane.b32.xlu0 %v2404, 16
        %v2639 = vpop.permute.xlu0 %2638
        %2640 = vrot.lane.b32.xlu0 %v2405, 16
        %v2641 = vpop.permute.xlu0 %2640
        %v2642 = vsel %vm1242, %v2639, %v2641
        %v2643 = vsel %vm1242, %v2637, %v2639
        %v2644 = vsel %vm1242, %v2635, %v2637
        %v2645 = vsel %vm1242, %v2641, %v2635
        %v2646 = vld [vmem:[%s1247] ss:$8 sm:$0xf]
        %v2648 = vperm.slane %v2646, 0
        %v2649 = vperm.slane %v2646, 1
        %v2650 = vperm.slane %v2646, 2
        %v2651 = vperm.slane %v2646, 3
        %v2656 = vmul.f32 %v2645, %v2648
        %v2657 = vmul.f32 %v2644, %v2649
        %v2658 = vmul.f32 %v2643, %v2650
        %v2659 = vmul.f32 %v2642, %v2651
        %v2660 = vpack.c.bf16 %v2657, %v2656
        %v2661 = vpack.c.bf16 %v2659, %v2658
        %v2664 = vrot.slane %v2660, 6
        %v2665 = vrot.slane %v2661, 6
        %2668 = vst [vmem:[#allocation3 + $0x30] sm:$0xcc] %v2664
        %2669 = vst [vmem:[#allocation3 + $0x38] sm:$0xcc] %v2665
        %2670 = vrot.lane.b32.xlu0 %v2402, 15
        %v2671 = vpop.permute.xlu0 %2670
        %2672 = vrot.lane.b32.xlu0 %v2403, 15
        %v2673 = vpop.permute.xlu0 %2672
        %2674 = vrot.lane.b32.xlu0 %v2404, 15
        %v2675 = vpop.permute.xlu0 %2674
        %2676 = vrot.lane.b32.xlu0 %v2405, 15
        %v2677 = vpop.permute.xlu0 %2676
        %v2678 = vsel %vm1274, %v2675, %v2677
        %v2679 = vsel %vm1274, %v2673, %v2675
        %v2680 = vsel %vm1274, %v2671, %v2673
        %v2681 = vsel %vm1274, %v2677, %v2671
        %v2682 = vld [vmem:[%s1279] ss:$8 sm:$0xf]
        %v2684 = vperm.slane %v2682, 0
        %v2685 = vperm.slane %v2682, 1
        %v2686 = vperm.slane %v2682, 2
        %v2687 = vperm.slane %v2682, 3
        %v2692 = vmul.f32 %v2681, %v2684
        %v2693 = vmul.f32 %v2680, %v2685
        %v2694 = vmul.f32 %v2679, %v2686
        %v2695 = vmul.f32 %v2678, %v2687
        %v2696 = vpack.c.bf16 %v2693, %v2692
        %v2697 = vpack.c.bf16 %v2695, %v2694
        %2698 = vst [vmem:[#allocation3 + $0x40] sm:$0x33] %v2696
        %2699 = vst [vmem:[#allocation3 + $0x48] sm:$0x33] %v2697
        %2700 = vrot.lane.b32.xlu0 %v2402, 14
        %v2701 = vpop.permute.xlu0 %2700
        %2702 = vrot.lane.b32.xlu0 %v2403, 14
        %v2703 = vpop.permute.xlu0 %2702
        %2704 = vrot.lane.b32.xlu0 %v2404, 14
        %v2705 = vpop.permute.xlu0 %2704
        %2706 = vrot.lane.b32.xlu0 %v2405, 14
        %v2707 = vpop.permute.xlu0 %2706
        %v2708 = vsel %vm1306, %v2705, %v2707
        %v2709 = vsel %vm1306, %v2703, %v2705
        %v2710 = vsel %vm1306, %v2701, %v2703
        %v2711 = vsel %vm1306, %v2707, %v2701
        %v2712 = vld [vmem:[%s1311] ss:$8 sm:$0xf]
        %v2714 = vperm.slane %v2712, 0
        %v2715 = vperm.slane %v2712, 1
        %v2716 = vperm.slane %v2712, 2
        %v2717 = vperm.slane %v2712, 3
        %v2722 = vmul.f32 %v2711, %v2714
        %v2723 = vmul.f32 %v2710, %v2715
        %v2724 = vmul.f32 %v2709, %v2716
        %v2725 = vmul.f32 %v2708, %v2717
        %v2726 = vpack.c.bf16 %v2723, %v2722
        %v2727 = vpack.c.bf16 %v2725, %v2724
        %v2730 = vrot.slane %v2726, 6
        %v2731 = vrot.slane %v2727, 6
        %2734 = vst [vmem:[#allocation3 + $0x40] sm:$0xcc] %v2730
        %2735 = vst [vmem:[#allocation3 + $0x48] sm:$0xcc] %v2731
        %2736 = vrot.lane.b32.xlu0 %v2402, 2
        %v2737 = vpop.permute.xlu0 %2736
        %2738 = vrot.lane.b32.xlu0 %v2403, 2
        %v2739 = vpop.permute.xlu0 %2738
        %2740 = vrot.lane.b32.xlu0 %v2404, 2
        %v2741 = vpop.permute.xlu0 %2740
        %2742 = vrot.lane.b32.xlu0 %v2405, 2
        %v2743 = vpop.permute.xlu0 %2742
        %v2744 = vsel %vm1338, %v2741, %v2743
        %v2745 = vsel %vm1338, %v2739, %v2741
        %v2746 = vsel %vm1338, %v2737, %v2739
        %v2747 = vsel %vm1338, %v2743, %v2737
        %v2748 = vld [vmem:[%s1343] ss:$8 sm:$0xf]
        %v2750 = vperm.slane %v2748, 0
        %v2751 = vperm.slane %v2748, 1
        %v2752 = vperm.slane %v2748, 2
        %v2753 = vperm.slane %v2748, 3
        %v2758 = vmul.f32 %v2747, %v2750
        %v2759 = vmul.f32 %v2746, %v2751
        %v2760 = vmul.f32 %v2745, %v2752
        %v2761 = vmul.f32 %v2744, %v2753
        %v2762 = vpack.c.bf16 %v2759, %v2758
        %v2763 = vpack.c.bf16 %v2761, %v2760
        %2764 = vst [vmem:[#allocation3 + $0x50] sm:$0x33] %v2762
        %2765 = vst [vmem:[#allocation3 + $0x58] sm:$0x33] %v2763
        %2766 = vrot.lane.b32.xlu0 %v2402, 1
        %v2767 = vpop.permute.xlu0 %2766
        %2768 = vrot.lane.b32.xlu0 %v2403, 1
        %v2769 = vpop.permute.xlu0 %2768
        %2770 = vrot.lane.b32.xlu0 %v2404, 1
        %v2771 = vpop.permute.xlu0 %2770
        %2772 = vrot.lane.b32.xlu0 %v2405, 1
        %v2773 = vpop.permute.xlu0 %2772
        %v2774 = vsel %vm1370, %v2771, %v2773
        %v2775 = vsel %vm1370, %v2769, %v2771
        %v2776 = vsel %vm1370, %v2767, %v2769
        %v2777 = vsel %vm1370, %v2773, %v2767
        %v2778 = vld [vmem:[%s1375] ss:$8 sm:$0xf]
        %v2780 = vperm.slane %v2778, 0
        %v2781 = vperm.slane %v2778, 1
        %v2782 = vperm.slane %v2778, 2
        %v2783 = vperm.slane %v2778, 3
        %v2788 = vmul.f32 %v2777, %v2780
        %v2789 = vmul.f32 %v2776, %v2781
        %v2790 = vmul.f32 %v2775, %v2782
        %v2791 = vmul.f32 %v2774, %v2783
        %v2792 = vpack.c.bf16 %v2789, %v2788
        %v2793 = vpack.c.bf16 %v2791, %v2790
        %v2796 = vrot.slane %v2792, 6
        %v2797 = vrot.slane %v2793, 6
        %2800 = vst [vmem:[#allocation3 + $0x50] sm:$0xcc] %v2796
        %2801 = vst [vmem:[#allocation3 + $0x58] sm:$0xcc] %v2797
        %v2802 = vpack.c.bf16 %v2403, %v2402
        %v2803 = vpack.c.bf16 %v2405, %v2404
        %2804 = vst [vmem:[#allocation3 + $0x60] sm:$0x33] %v2802
        %2805 = vst [vmem:[#allocation3 + $0x68] sm:$0x33] %v2803
        %2806 = vrot.lane.b32.xlu0 %v2402, 127
        %v2807 = vpop.permute.xlu0 %2806
        %2808 = vrot.lane.b32.xlu0 %v2403, 127
        %v2809 = vpop.permute.xlu0 %2808
        %2810 = vrot.lane.b32.xlu0 %v2404, 127
        %v2811 = vpop.permute.xlu0 %2810
        %2812 = vrot.lane.b32.xlu0 %v2405, 127
        %v2813 = vpop.permute.xlu0 %2812
        %v2814 = vsel %vm1406, %v2811, %v2813
        %v2815 = vsel %vm1406, %v2809, %v2811
        %v2816 = vsel %vm1406, %v2807, %v2809
        %v2817 = vsel %vm1406, %v2813, %v2807
        %v2818 = vld [vmem:[%s1411] ss:$8 sm:$0xf]
        %v2820 = vperm.slane %v2818, 0
        %v2821 = vperm.slane %v2818, 1
        %v2822 = vperm.slane %v2818, 2
        %v2823 = vperm.slane %v2818, 3
        %v2828 = vmul.f32 %v2816, %v2820
        %v2829 = vmul.f32 %v2815, %v2821
        %v2830 = vmul.f32 %v2814, %v2822
        %v2831 = vmul.f32 %v2817, %v2823
        %v2832 = vpack.c.bf16 %v2829, %v2828
        %v2833 = vpack.c.bf16 %v2831, %v2830
        %v2836 = vrot.slane %v2832, 6
        %v2837 = vrot.slane %v2833, 6
        %2840 = vst [vmem:[#allocation3 + $0x60] sm:$0xcc] %v2836
        %2841 = vst [vmem:[#allocation3 + $0x68] sm:$0xcc] %v2837
        %2842 = vrot.lane.b32.xlu0 %v2402, 126
        %v2843 = vpop.permute.xlu0 %2842
        %2844 = vrot.lane.b32.xlu0 %v2403, 126
        %v2845 = vpop.permute.xlu0 %2844
        %2846 = vrot.lane.b32.xlu0 %v2404, 126
        %v2847 = vpop.permute.xlu0 %2846
        %2848 = vrot.lane.b32.xlu0 %v2405, 126
        %v2849 = vpop.permute.xlu0 %2848
        %v2850 = vsel %vm1438, %v2847, %v2849
        %v2851 = vsel %vm1438, %v2845, %v2847
        %v2852 = vsel %vm1438, %v2843, %v2845
        %v2853 = vsel %vm1438, %v2849, %v2843
        %v2854 = vld [vmem:[%s1443] ss:$8 sm:$0xf]
        %v2856 = vperm.slane %v2854, 0
        %v2857 = vperm.slane %v2854, 1
        %v2858 = vperm.slane %v2854, 2
        %v2859 = vperm.slane %v2854, 3
        %v2864 = vmul.f32 %v2852, %v2856
        %v2865 = vmul.f32 %v2851, %v2857
        %v2866 = vmul.f32 %v2850, %v2858
        %v2867 = vmul.f32 %v2853, %v2859
        %v2868 = vpack.c.bf16 %v2865, %v2864
        %v2869 = vpack.c.bf16 %v2867, %v2866
        %2870 = vst [vmem:[#allocation3 + $0x70] sm:$0x33] %v2868
        %2871 = vst [vmem:[#allocation3 + $0x78] sm:$0x33] %v2869
        %2872 = vrot.lane.b32.xlu0 %v2402, 114
        %v2873 = vpop.permute.xlu0 %2872
        %2874 = vrot.lane.b32.xlu0 %v2403, 114
        %v2875 = vpop.permute.xlu0 %2874
        %2876 = vrot.lane.b32.xlu0 %v2404, 114
        %v2877 = vpop.permute.xlu0 %2876
        %2878 = vrot.lane.b32.xlu0 %v2405, 114
        %v2879 = vpop.permute.xlu0 %2878
        %v2880 = vsel %vm1470, %v2877, %v2879
        %v2881 = vsel %vm1470, %v2875, %v2877
        %v2882 = vsel %vm1470, %v2873, %v2875
        %v2883 = vsel %vm1470, %v2879, %v2873
        %v2884 = vld [vmem:[%s1475] ss:$8 sm:$0xf]
        %v2886 = vperm.slane %v2884, 0
        %v2887 = vperm.slane %v2884, 1
        %v2888 = vperm.slane %v2884, 2
        %v2889 = vperm.slane %v2884, 3
        %v2894 = vmul.f32 %v2882, %v2886
        %v2895 = vmul.f32 %v2881, %v2887
        %v2896 = vmul.f32 %v2880, %v2888
        %v2897 = vmul.f32 %v2883, %v2889
        %v2898 = vpack.c.bf16 %v2895, %v2894
        %v2899 = vpack.c.bf16 %v2897, %v2896
        %v2902 = vrot.slane %v2898, 6
        %v2903 = vrot.slane %v2899, 6
        %2906 = vst [vmem:[#allocation3 + $0x70] sm:$0xcc] %v2902
        %2907 = vst [vmem:[#allocation3 + $0x78] sm:$0xcc] %v2903
        %2908 = vrot.lane.b32.xlu0 %v2402, 113
        %v2909 = vpop.permute.xlu0 %2908
        %2910 = vrot.lane.b32.xlu0 %v2403, 113
        %v2911 = vpop.permute.xlu0 %2910
        %2912 = vrot.lane.b32.xlu0 %v2404, 113
        %v2913 = vpop.permute.xlu0 %2912
        %2914 = vrot.lane.b32.xlu0 %v2405, 113
        %v2915 = vpop.permute.xlu0 %2914
        %v2916 = vsel %vm1502, %v2913, %v2915
        %v2917 = vsel %vm1502, %v2911, %v2913
        %v2918 = vsel %vm1502, %v2909, %v2911
        %v2919 = vsel %vm1502, %v2915, %v2909
        %v2920 = vld [vmem:[%s1507] ss:$8 sm:$0xf]
        %v2922 = vperm.slane %v2920, 0
        %v2923 = vperm.slane %v2920, 1
        %v2924 = vperm.slane %v2920, 2
        %v2925 = vperm.slane %v2920, 3
        %v2930 = vmul.f32 %v2918, %v2922
        %v2931 = vmul.f32 %v2917, %v2923
        %v2932 = vmul.f32 %v2916, %v2924
        %v2933 = vmul.f32 %v2919, %v2925
        %v2934 = vpack.c.bf16 %v2931, %v2930
        %v2935 = vpack.c.bf16 %v2933, %v2932
        %2936 = vst [vmem:[#allocation3 + $0x80] sm:$0x33] %v2934
        %2937 = vst [vmem:[#allocation3 + $0x88] sm:$0x33] %v2935
        %2938 = vrot.lane.b32.xlu0 %v2402, 112
        %v2939 = vpop.permute.xlu0 %2938
        %2940 = vrot.lane.b32.xlu0 %v2403, 112
        %v2941 = vpop.permute.xlu0 %2940
        %2942 = vrot.lane.b32.xlu0 %v2404, 112
        %v2943 = vpop.permute.xlu0 %2942
        %2944 = vrot.lane.b32.xlu0 %v2405, 112
        %v2945 = vpop.permute.xlu0 %2944
        %v2946 = vsel %vm1534, %v2943, %v2945
        %v2947 = vsel %vm1534, %v2941, %v2943
        %v2948 = vsel %vm1534, %v2939, %v2941
        %v2949 = vsel %vm1534, %v2945, %v2939
        %v2950 = vld [vmem:[%s1539] ss:$8 sm:$0xf]
        %v2952 = vperm.slane %v2950, 0
        %v2953 = vperm.slane %v2950, 1
        %v2954 = vperm.slane %v2950, 2
        %v2955 = vperm.slane %v2950, 3
        %v2960 = vmul.f32 %v2948, %v2952
        %v2961 = vmul.f32 %v2947, %v2953
        %v2962 = vmul.f32 %v2946, %v2954
        %v2963 = vmul.f32 %v2949, %v2955
        %v2964 = vpack.c.bf16 %v2961, %v2960
        %v2965 = vpack.c.bf16 %v2963, %v2962
        %v2968 = vrot.slane %v2964, 6
        %v2969 = vrot.slane %v2965, 6
        %2972 = vst [vmem:[#allocation3 + $0x80] sm:$0xcc] %v2968
        %2973 = vst [vmem:[#allocation3 + $0x88] sm:$0xcc] %v2969
        %2974 = vrot.lane.b32.xlu0 %v2402, 111
        %v2975 = vpop.permute.xlu0 %2974
        %2976 = vrot.lane.b32.xlu0 %v2403, 111
        %v2977 = vpop.permute.xlu0 %2976
        %2978 = vrot.lane.b32.xlu0 %v2404, 111
        %v2979 = vpop.permute.xlu0 %2978
        %2980 = vrot.lane.b32.xlu0 %v2405, 111
        %v2981 = vpop.permute.xlu0 %2980
        %v2982 = vsel %vm1566, %v2979, %v2981
        %v2983 = vsel %vm1566, %v2977, %v2979
        %v2984 = vsel %vm1566, %v2975, %v2977
        %v2985 = vsel %vm1566, %v2981, %v2975
        %v2986 = vld [vmem:[%s1571] ss:$8 sm:$0xf]
        %v2988 = vperm.slane %v2986, 0
        %v2989 = vperm.slane %v2986, 1
        %v2990 = vperm.slane %v2986, 2
        %v2991 = vperm.slane %v2986, 3
        %v2996 = vmul.f32 %v2984, %v2988
        %v2997 = vmul.f32 %v2983, %v2989
        %v2998 = vmul.f32 %v2982, %v2990
        %v2999 = vmul.f32 %v2985, %v2991
        %v3000 = vpack.c.bf16 %v2997, %v2996
        %v3001 = vpack.c.bf16 %v2999, %v2998
        %3002 = vst [vmem:[#allocation3 + $0x90] sm:$0x33] %v3000
        %3003 = vst [vmem:[#allocation3 + $0x98] sm:$0x33] %v3001
        %3004 = vrot.lane.b32.xlu0 %v2402, 110
        %v3005 = vpop.permute.xlu0 %3004
        %3006 = vrot.lane.b32.xlu0 %v2403, 110
        %v3007 = vpop.permute.xlu0 %3006
        %3008 = vrot.lane.b32.xlu0 %v2404, 110
        %v3009 = vpop.permute.xlu0 %3008
        %3010 = vrot.lane.b32.xlu0 %v2405, 110
        %v3011 = vpop.permute.xlu0 %3010
        %v3012 = vsel %vm1598, %v3009, %v3011
        %v3013 = vsel %vm1598, %v3007, %v3009
        %v3014 = vsel %vm1598, %v3005, %v3007
        %v3015 = vsel %vm1598, %v3011, %v3005
        %v3016 = vld [vmem:[%s1603] ss:$8 sm:$0xf]
        %v3018 = vperm.slane %v3016, 0
        %v3019 = vperm.slane %v3016, 1
        %v3020 = vperm.slane %v3016, 2
        %v3021 = vperm.slane %v3016, 3
        %v3026 = vmul.f32 %v3014, %v3018
        %v3027 = vmul.f32 %v3013, %v3019
        %v3028 = vmul.f32 %v3012, %v3020
        %v3029 = vmul.f32 %v3015, %v3021
        %v3030 = vpack.c.bf16 %v3027, %v3026
        %v3031 = vpack.c.bf16 %v3029, %v3028
        %v3034 = vrot.slane %v3030, 6
        %v3035 = vrot.slane %v3031, 6
        %3038 = vst [vmem:[#allocation3 + $0x90] sm:$0xcc] %v3034
        %3039 = vst [vmem:[#allocation3 + $0x98] sm:$0xcc] %v3035
        %3040 = vrot.lane.b32.xlu0 %v2402, 98
        %v3041 = vpop.permute.xlu0 %3040
        %3042 = vrot.lane.b32.xlu0 %v2403, 98
        %v3043 = vpop.permute.xlu0 %3042
        %3044 = vrot.lane.b32.xlu0 %v2404, 98
        %v3045 = vpop.permute.xlu0 %3044
        %3046 = vrot.lane.b32.xlu0 %v2405, 98
        %v3047 = vpop.permute.xlu0 %3046
        %v3048 = vsel %vm1630, %v3045, %v3047
        %v3049 = vsel %vm1630, %v3043, %v3045
        %v3050 = vsel %vm1630, %v3041, %v3043
        %v3051 = vsel %vm1630, %v3047, %v3041
        %v3052 = vld [vmem:[%s1635] ss:$8 sm:$0xf]
        %v3054 = vperm.slane %v3052, 0
        %v3055 = vperm.slane %v3052, 1
        %v3056 = vperm.slane %v3052, 2
        %v3057 = vperm.slane %v3052, 3
        %v3062 = vmul.f32 %v3050, %v3054
        %v3063 = vmul.f32 %v3049, %v3055
        %v3064 = vmul.f32 %v3048, %v3056
        %v3065 = vmul.f32 %v3051, %v3057
        %v3066 = vpack.c.bf16 %v3063, %v3062
        %v3067 = vpack.c.bf16 %v3065, %v3064
        %3068 = vst [vmem:[#allocation3 + $0xa0] sm:$0x33] %v3066
        %3069 = vst [vmem:[#allocation3 + $0xa8] sm:$0x33] %v3067
        %3070 = vrot.lane.b32.xlu0 %v2402, 97
        %v3071 = vpop.permute.xlu0 %3070
        %3072 = vrot.lane.b32.xlu0 %v2403, 97
        %v3073 = vpop.permute.xlu0 %3072
        %3074 = vrot.lane.b32.xlu0 %v2404, 97
        %v3075 = vpop.permute.xlu0 %3074
        %3076 = vrot.lane.b32.xlu0 %v2405, 97
        %v3077 = vpop.permute.xlu0 %3076
        %v3078 = vsel %vm1662, %v3075, %v3077
        %v3079 = vsel %vm1662, %v3073, %v3075
        %v3080 = vsel %vm1662, %v3071, %v3073
        %v3081 = vsel %vm1662, %v3077, %v3071
        %v3082 = vld [vmem:[%s1667] ss:$8 sm:$0xf]
        %v3084 = vperm.slane %v3082, 0
        %v3085 = vperm.slane %v3082, 1
        %v3086 = vperm.slane %v3082, 2
        %v3087 = vperm.slane %v3082, 3
        %v3092 = vmul.f32 %v3080, %v3084
        %v3093 = vmul.f32 %v3079, %v3085
        %v3094 = vmul.f32 %v3078, %v3086
        %v3095 = vmul.f32 %v3081, %v3087
        %v3096 = vpack.c.bf16 %v3093, %v3092
        %v3097 = vpack.c.bf16 %v3095, %v3094
        %v3100 = vrot.slane %v3096, 6
        %v3101 = vrot.slane %v3097, 6
        %3104 = vst [vmem:[#allocation3 + $0xa0] sm:$0xcc] %v3100
        %3105 = vst [vmem:[#allocation3 + $0xa8] sm:$0xcc] %v3101
        %3106 = vrot.lane.b32.xlu0 %v2402, 96
        %v3107 = vpop.permute.xlu0 %3106
        %3108 = vrot.lane.b32.xlu0 %v2403, 96
        %v3109 = vpop.permute.xlu0 %3108
        %3110 = vrot.lane.b32.xlu0 %v2404, 96
        %v3111 = vpop.permute.xlu0 %3110
        %3112 = vrot.lane.b32.xlu0 %v2405, 96
        %v3113 = vpop.permute.xlu0 %3112
        %v3114 = vsel %vm1694, %v3111, %v3113
        %v3115 = vsel %vm1694, %v3109, %v3111
        %v3116 = vsel %vm1694, %v3107, %v3109
        %v3117 = vsel %vm1694, %v3113, %v3107
        %v3118 = vld [vmem:[%s1699] ss:$8 sm:$0xf]
        %v3120 = vperm.slane %v3118, 0
        %v3121 = vperm.slane %v3118, 1
        %v3122 = vperm.slane %v3118, 2
        %v3123 = vperm.slane %v3118, 3
        %v3128 = vmul.f32 %v3116, %v3120
        %v3129 = vmul.f32 %v3115, %v3121
        %v3130 = vmul.f32 %v3114, %v3122
        %v3131 = vmul.f32 %v3117, %v3123
        %v3132 = vpack.c.bf16 %v3129, %v3128
        %v3133 = vpack.c.bf16 %v3131, %v3130
        %3134 = vst [vmem:[#allocation3 + $0xb0] sm:$0x33] %v3132
        %3135 = vst [vmem:[#allocation3 + $0xb8] sm:$0x33] %v3133
        %3136 = vrot.lane.b32.xlu0 %v2402, 95
        %v3137 = vpop.permute.xlu0 %3136
        %3138 = vrot.lane.b32.xlu0 %v2403, 95
        %v3139 = vpop.permute.xlu0 %3138
        %3140 = vrot.lane.b32.xlu0 %v2404, 95
        %v3141 = vpop.permute.xlu0 %3140
        %3142 = vrot.lane.b32.xlu0 %v2405, 95
        %v3143 = vpop.permute.xlu0 %3142
        %v3144 = vsel %vm1726, %v3141, %v3143
        %v3145 = vsel %vm1726, %v3139, %v3141
        %v3146 = vsel %vm1726, %v3137, %v3139
        %v3147 = vsel %vm1726, %v3143, %v3137
        %v3148 = vld [vmem:[%s1731] ss:$8 sm:$0xf]
        %v3150 = vperm.slane %v3148, 0
        %v3151 = vperm.slane %v3148, 1
        %v3152 = vperm.slane %v3148, 2
        %v3153 = vperm.slane %v3148, 3
        %v3158 = vmul.f32 %v3146, %v3150
        %v3159 = vmul.f32 %v3145, %v3151
        %v3160 = vmul.f32 %v3144, %v3152
        %v3161 = vmul.f32 %v3147, %v3153
        %v3162 = vpack.c.bf16 %v3159, %v3158
        %v3163 = vpack.c.bf16 %v3161, %v3160
        %v3166 = vrot.slane %v3162, 6
        %v3167 = vrot.slane %v3163, 6
        %3170 = vst [vmem:[#allocation3 + $0xb0] sm:$0xcc] %v3166
        %3171 = vst [vmem:[#allocation3 + $0xb8] sm:$0xcc] %v3167
        %3172 = vrot.lane.b32.xlu0 %v2402, 94
        %v3173 = vpop.permute.xlu0 %3172
        %3174 = vrot.lane.b32.xlu0 %v2403, 94
        %v3175 = vpop.permute.xlu0 %3174
        %3176 = vrot.lane.b32.xlu0 %v2404, 94
        %v3177 = vpop.permute.xlu0 %3176
        %3178 = vrot.lane.b32.xlu0 %v2405, 94
        %v3179 = vpop.permute.xlu0 %3178
        %v3180 = vsel %vm1758, %v3177, %v3179
        %v3181 = vsel %vm1758, %v3175, %v3177
        %v3182 = vsel %vm1758, %v3173, %v3175
        %v3183 = vsel %vm1758, %v3179, %v3173
        %v3184 = vld [vmem:[%s1763] ss:$8 sm:$0xf]
        %v3186 = vperm.slane %v3184, 0
        %v3187 = vperm.slane %v3184, 1
        %v3188 = vperm.slane %v3184, 2
        %v3189 = vperm.slane %v3184, 3
        %v3194 = vmul.f32 %v3182, %v3186
        %v3195 = vmul.f32 %v3181, %v3187
        %v3196 = vmul.f32 %v3180, %v3188
        %v3197 = vmul.f32 %v3183, %v3189
        %v3198 = vpack.c.bf16 %v3195, %v3194
        %v3199 = vpack.c.bf16 %v3197, %v3196
        %3200 = vst [vmem:[#allocation3 + $0xc0] sm:$0x33] %v3198
        %3201 = vst [vmem:[#allocation3 + $0xc8] sm:$0x33] %v3199
        %v3202 = vld [vmem:[#allocation3] sm:$0xff]
        %v3203 = vld [vmem:[#allocation3 + $0x8] sm:$0xff]
        %v3204 = vld [vmem:[#allocation3 + $0x10] sm:$0xff]
        %v3205 = vld [vmem:[#allocation3 + $0x18] sm:$0xff]
        %v3206 = vld [vmem:[#allocation3 + $0x20] sm:$0xff]
        %v3207 = vld [vmem:[#allocation3 + $0x28] sm:$0xff]
        %v3208 = vld [vmem:[#allocation3 + $0x30] sm:$0xff]
        %v3209 = vld [vmem:[#allocation3 + $0x38] sm:$0xff]
        %v3210 = vld [vmem:[#allocation3 + $0x40] sm:$0xff]
        %v3211 = vld [vmem:[#allocation3 + $0x48] sm:$0xff]
        %v3212 = vld [vmem:[#allocation3 + $0x50] sm:$0xff]
        %v3213 = vld [vmem:[#allocation3 + $0x58] sm:$0xff]
        %v3214 = vld [vmem:[#allocation3 + $0x60] sm:$0xff]
        %v3215 = vld [vmem:[#allocation3 + $0x68] sm:$0xff]
        %v3216 = vld [vmem:[#allocation3 + $0x70] sm:$0xff]
        %v3217 = vld [vmem:[#allocation3 + $0x78] sm:$0xff]
        %v3218 = vld [vmem:[#allocation3 + $0x80] sm:$0xff]
        %v3219 = vld [vmem:[#allocation3 + $0x88] sm:$0xff]
        %v3220 = vld [vmem:[#allocation3 + $0x90] sm:$0xff]
        %v3221 = vld [vmem:[#allocation3 + $0x98] sm:$0xff]
        %v3222 = vld [vmem:[#allocation3 + $0xa0] sm:$0xff]
        %v3223 = vld [vmem:[#allocation3 + $0xa8] sm:$0xff]
        %v3224 = vld [vmem:[#allocation3 + $0xb0] sm:$0xff]
        %v3225 = vld [vmem:[#allocation3 + $0xb8] sm:$0xff]
        %v3226 = vld [vmem:[#allocation3 + $0xc0] sm:$0x33]
        %v3227 = vld [vmem:[#allocation3 + $0xc8] sm:$0x33]
        %v3254 = vunpack.c.l.b16 %v3202
        %v3255 = vunpack.c.h.b16 %v3202
        %v3256 = vunpack.c.l.b16 %v3203
        %v3257 = vunpack.c.h.b16 %v3203
        %v3258 = vunpack.c.l.b16 %v3204
        %v3259 = vunpack.c.h.b16 %v3204
        %v3260 = vunpack.c.l.b16 %v3205
        %v3261 = vunpack.c.h.b16 %v3205
        %v3262 = vunpack.c.l.b16 %v3206
        %v3263 = vunpack.c.h.b16 %v3206
        %v3264 = vunpack.c.l.b16 %v3207
        %v3265 = vunpack.c.h.b16 %v3207
        %v3266 = vunpack.c.l.b16 %v3208
        %v3267 = vunpack.c.h.b16 %v3208
        %v3268 = vunpack.c.l.b16 %v3209
        %v3269 = vunpack.c.h.b16 %v3209
        %v3270 = vunpack.c.l.b16 %v3210
        %v3271 = vunpack.c.h.b16 %v3210
        %v3272 = vunpack.c.l.b16 %v3211
        %v3273 = vunpack.c.h.b16 %v3211
        %v3274 = vunpack.c.l.b16 %v3212
        %v3275 = vunpack.c.h.b16 %v3212
        %v3276 = vunpack.c.l.b16 %v3213
        %v3277 = vunpack.c.h.b16 %v3213
        %v3278 = vunpack.c.l.b16 %v3214
        %v3279 = vunpack.c.h.b16 %v3214
        %v3280 = vunpack.c.l.b16 %v3215
        %v3281 = vunpack.c.h.b16 %v3215
        %v3282 = vunpack.c.l.b16 %v3216
        %v3283 = vunpack.c.h.b16 %v3216
        %v3284 = vunpack.c.l.b16 %v3217
        %v3285 = vunpack.c.h.b16 %v3217
        %v3286 = vunpack.c.l.b16 %v3218
        %v3287 = vunpack.c.h.b16 %v3218
        %v3288 = vunpack.c.l.b16 %v3219
        %v3289 = vunpack.c.h.b16 %v3219
        %v3290 = vunpack.c.l.b16 %v3220
        %v3291 = vunpack.c.h.b16 %v3220
        %v3292 = vunpack.c.l.b16 %v3221
        %v3293 = vunpack.c.h.b16 %v3221
        %v3294 = vunpack.c.l.b16 %v3222
        %v3295 = vunpack.c.h.b16 %v3222
        %v3296 = vunpack.c.l.b16 %v3223
        %v3297 = vunpack.c.h.b16 %v3223
        %v3298 = vunpack.c.l.b16 %v3224
        %v3299 = vunpack.c.h.b16 %v3224
        %v3300 = vunpack.c.l.b16 %v3225
        %v3301 = vunpack.c.h.b16 %v3225
        %v3302 = vunpack.c.l.b16 %v3226
        %v3303 = vunpack.c.h.b16 %v3226
        %v3304 = vunpack.c.l.b16 %v3227
        %v3305 = vunpack.c.h.b16 %v3227
        %v3306 = vpack.c.b16 %v3258, %v3254
        %v3307 = vpack.c.b16 %v3259, %v3255
        %v3308 = vpack.c.b16 %v3260, %v3256
        %v3309 = vpack.c.b16 %v3261, %v3257
        %v3310 = vpack.c.b16 %v3266, %v3262
        %v3311 = vpack.c.b16 %v3267, %v3263
        %v3312 = vpack.c.b16 %v3268, %v3264
        %v3313 = vpack.c.b16 %v3269, %v3265
        %v3314 = vpack.c.b16 %v3274, %v3270
        %v3315 = vpack.c.b16 %v3275, %v3271
        %v3316 = vpack.c.b16 %v3276, %v3272
        %v3317 = vpack.c.b16 %v3277, %v3273
        %v3318 = vpack.c.b16 %v3282, %v3278
        %v3319 = vpack.c.b16 %v3283, %v3279
        %v3320 = vpack.c.b16 %v3284, %v3280
        %v3321 = vpack.c.b16 %v3285, %v3281
        %v3322 = vpack.c.b16 %v3290, %v3286
        %v3323 = vpack.c.b16 %v3291, %v3287
        %v3324 = vpack.c.b16 %v3292, %v3288
        %v3325 = vpack.c.b16 %v3293, %v3289
        %v3326 = vpack.c.b16 %v3298, %v3294
        %v3327 = vpack.c.b16 %v3299, %v3295
        %v3328 = vpack.c.b16 %v3300, %v3296
        %v3329 = vpack.c.b16 %v3301, %v3297
        %v3330 = vpack.c.b16 %v3302, %v3302
        %v3331 = vpack.c.b16 %v3303, %v3303
        %v3332 = vpack.c.b16 %v3304, %v3304
        %v3333 = vpack.c.b16 %v3305, %v3305
        %vm3358 = vcmask 818176
        %v3360 = vsel %vm3358, %v968, 0
        %vm3362 = vcmask 1041408
        %v3364 = vsel %vm3362, %v3330, 0
        %v3367 = vsel %vm3362, %v3331, 0
        %v3370 = vsel %vm3362, %v3332, 0
        %v3373 = vsel %vm3362, %v3333, 0
        %3375 = vmatpush.bf16.msra.mxu0 0
        %3376 = vmatpush.bf16.msra.mxu0 %v3364
        %3377 = vmatpush.bf16.msra.mxu0 %v3326
        %3378 = vmatpush.bf16.msra.mxu0 %v3322
        %3379 = vmatpush.bf16.msra.mxu0 %v3318
        %3380 = vmatpush.bf16.msra.mxu0 %v3314
        %3381 = vmatpush.bf16.msra.mxu0 %v3310
        %3382 = vmatpush.bf16.msra.mxu0 %v3306
        %3383 = vmatmul.bf16.gmra.mxu0 %v3360
        %v3384 = vpop.f32.mrf.mxu0
        %v3385 = vadd.f32 %v983, %v3384
        %v3386 = vpop.f32.mrf.mxu0
        %3387 = vdwg.mxu0
        %3388 = vmatpush.bf16.msra.mxu0 0
        %3389 = vmatpush.bf16.msra.mxu0 %v3367
        %3390 = vmatpush.bf16.msra.mxu0 %v3327
        %3391 = vmatpush.bf16.msra.mxu0 %v3323
        %3392 = vmatpush.bf16.msra.mxu0 %v3319
        %3393 = vmatpush.bf16.msra.mxu0 %v3315
        %3394 = vmatpush.bf16.msra.mxu0 %v3311
        %3395 = vmatpush.bf16.msra.mxu0 %v3307
        %3396 = vmatmul.bf16.gmra.mxu0 %v3360
        %v3397 = vpop.f32.mrf.mxu0
        %v3398 = vadd.f32 %v983, %v3397
        %v3399 = vpop.f32.mrf.mxu0
        %3400 = vdwg.mxu0
        %3401 = vmatpush.bf16.msra.mxu0 0
        %3402 = vmatpush.bf16.msra.mxu0 %v3370
        %3403 = vmatpush.bf16.msra.mxu0 %v3328
        %3404 = vmatpush.bf16.msra.mxu0 %v3324
        %3405 = vmatpush.bf16.msra.mxu0 %v3320
        %3406 = vmatpush.bf16.msra.mxu0 %v3316
        %3407 = vmatpush.bf16.msra.mxu0 %v3312
        %3408 = vmatpush.bf16.msra.mxu0 %v3308
        %3409 = vmatmul.bf16.gmra.mxu0 %v3360
        %v3410 = vpop.f32.mrf.mxu0
        %v3411 = vadd.f32 %v983, %v3410
        %v3412 = vpop.f32.mrf.mxu0
        %3413 = vdwg.mxu0
        %3414 = vmatpush.bf16.msra.mxu0 0
        %3415 = vmatpush.bf16.msra.mxu0 %v3373
        %3416 = vmatpush.bf16.msra.mxu0 %v3329
        %3417 = vmatpush.bf16.msra.mxu0 %v3325
        %3418 = vmatpush.bf16.msra.mxu0 %v3321
        %3419 = vmatpush.bf16.msra.mxu0 %v3317
        %3420 = vmatpush.bf16.msra.mxu0 %v3313
        %3421 = vmatpush.bf16.msra.mxu0 %v3309
        %3422 = vmatmul.bf16.gmra.mxu0 %v3360
        %v3423 = vpop.f32.mrf.mxu0
        %v3424 = vadd.f32 %v983, %v3423
        %v3425 = vpop.f32.mrf.mxu0
        %3426 = vdwg.mxu0
        %v3427 = vsub.f32 0.0, %v3385
        %v3428 = vsub.f32 0.0, %v3398
        %v3429 = vsub.f32 0.0, %v3411
        %v3430 = vsub.f32 0.0, %v3424
        %v3431 = vmul.f32 %v3427, 1.442695
        %v3432 = vpow.pop %v3431
        %v3433 = vmul.f32 %v3428, 1.442695
        %v3434 = vpow.pop %v3433
        %v3435 = vmul.f32 %v3429, 1.442695
        %v3436 = vpow.pop %v3435
        %v3437 = vmul.f32 %v3430, 1.442695
        %v3438 = vpow.pop %v3437
        %v3439 = vadd.f32 %v3432, 1.0
        %v3440 = vadd.f32 %v3434, 1.0
        %v3441 = vadd.f32 %v3436, 1.0
        %v3442 = vadd.f32 %v3438, 1.0
        %v3443 = vrcp.pop %v3439
        %v3444 = vmul.f32 %v3439, %v3443
        %v3445 = vsub.f32 1.0, %v3444
        %v3446 = vmul.f32 %v3443, %v3445
        %v3447 = vadd.f32 %v3443, %v3446
        %vm3448 = vweird.f32 %v3439
        %vm3449 = vweird.f32 %v3443
        %vm3450 = vmor %vm3448, %vm3449
        %v3451 = vsel %vm3450, %v3443, %v3447
        %v3452 = vand.u32 2147483647, %v3439
        %vm3453 = vcmp.eq.f32.partialorder %v3452, 8.507059e+37
        %v3454 = vand.u32 %v3439, 2147483648
        %v3455 = vor.u32 1.1754944e-38, %v3454
        %v3456 = vsel %vm3453, %v3455, %v3451
        %v3457 = vmul.f32 1.0, %v3456
        %v3458 = vrcp.pop %v3440
        %v3459 = vmul.f32 %v3440, %v3458
        %v3460 = vsub.f32 1.0, %v3459
        %v3461 = vmul.f32 %v3458, %v3460
        %v3462 = vadd.f32 %v3458, %v3461
        %vm3463 = vweird.f32 %v3440
        %vm3464 = vweird.f32 %v3458
        %vm3465 = vmor %vm3463, %vm3464
        %v3466 = vsel %vm3465, %v3458, %v3462
        %v3467 = vand.u32 2147483647, %v3440
        %vm3468 = vcmp.eq.f32.partialorder %v3467, 8.507059e+37
        %v3469 = vand.u32 %v3440, 2147483648
        %v3470 = vor.u32 1.1754944e-38, %v3469
        %v3471 = vsel %vm3468, %v3470, %v3466
        %v3472 = vmul.f32 1.0, %v3471
        %v3473 = vrcp.pop %v3441
        %v3474 = vmul.f32 %v3441, %v3473
        %v3475 = vsub.f32 1.0, %v3474
        %v3476 = vmul.f32 %v3473, %v3475
        %v3477 = vadd.f32 %v3473, %v3476
        %vm3478 = vweird.f32 %v3441
        %vm3479 = vweird.f32 %v3473
        %vm3480 = vmor %vm3478, %vm3479
        %v3481 = vsel %vm3480, %v3473, %v3477
        %v3482 = vand.u32 2147483647, %v3441
        %vm3483 = vcmp.eq.f32.partialorder %v3482, 8.507059e+37
        %v3484 = vand.u32 %v3441, 2147483648
        %v3485 = vor.u32 1.1754944e-38, %v3484
        %v3486 = vsel %vm3483, %v3485, %v3481
        %v3487 = vmul.f32 1.0, %v3486
        %v3488 = vrcp.pop %v3442
        %v3489 = vmul.f32 %v3442, %v3488
        %v3490 = vsub.f32 1.0, %v3489
        %v3491 = vmul.f32 %v3488, %v3490
        %v3492 = vadd.f32 %v3488, %v3491
        %vm3493 = vweird.f32 %v3442
        %vm3494 = vweird.f32 %v3488
        %vm3495 = vmor %vm3493, %vm3494
        %v3496 = vsel %vm3495, %v3488, %v3492
        %v3497 = vand.u32 2147483647, %v3442
        %vm3498 = vcmp.eq.f32.partialorder %v3497, 8.507059e+37
        %v3499 = vand.u32 %v3442, 2147483648
        %v3500 = vor.u32 1.1754944e-38, %v3499
        %v3501 = vsel %vm3498, %v3500, %v3496
        %v3502 = vmul.f32 1.0, %v3501
        %v3503 = vmul.f32 %v3385, %v3457
        %v3504 = vmul.f32 %v3398, %v3472
        %v3505 = vmul.f32 %v3411, %v3487
        %v3506 = vmul.f32 %v3424, %v3502
        %v3507 = vadd.f32 %v3503, %v1005
        %v3508 = vadd.f32 %v3504, %v1006
        %v3509 = vadd.f32 %v3505, %v1007
        %v3510 = vadd.f32 %v3506, %v1008
        %v3511 = vpack.c.bf16 %v963, %v3507
        %v3512 = vpack.c.bf16 %v964, %v3508
        %v3513 = vpack.c.bf16 %v965, %v3509
        %v3514 = vpack.c.bf16 %v966, %v3510
        %v3515 = vld [vmem:[%s16] sm:$0xf]
        %v3516 = vld [vmem:[%s16 + $0x4] sm:$0xf]
        %v3517 = vld [vmem:[%s17] sm:$0xff]
        %v3518 = vld [vmem:[%s17 + $0x8] sm:$0xff]
        %3520 = vset.pattern.permute.xlu0 0
        %3521 = vperm.xlu0 %3520, %v3517
        %v3522 = vpop.permute.xlu0 %3521
        %3525 = vset.pattern.permute.xlu0 0
        %3526 = vperm.xlu0 %3525, %v3518
        %v3527 = vpop.permute.xlu0 %3526
        %v3531 = vunpack.c.l.b16 %v3515
        %v3532 = vunpack.c.l.b16 %v3516
        %v3533 = vpack.c.b16 %v3532, %v3531
        %v3535 = vsel %vm689, %v3533, 0
        %3537 = vmatpush.bf16.msra.mxu0 0
        %3538 = vmatpush.bf16.msra.mxu0 0
        %3539 = vmatpush.bf16.msra.mxu0 0
        %3540 = vmatpush.bf16.msra.mxu0 0
        %3541 = vmatpush.bf16.msra.mxu0 0
        %3542 = vmatpush.bf16.msra.mxu0 0
        %3543 = vmatpush.bf16.msra.mxu0 0
        %3544 = vmatpush.bf16.msra.mxu0 %v3511
        %3545 = vmatmul.bf16.gmra.mxu0 %v3535
        %v3546 = vpop.f32.mrf.mxu0
        %v3547 = vadd.f32 %v3522, %v3546
        %v3548 = vpop.f32.mrf.mxu0
        %v3549 = vadd.f32 %v3527, %v3548
        %3550 = vdwg.mxu0
        %3551 = vmatpush.bf16.msra.mxu0 0
        %3552 = vmatpush.bf16.msra.mxu0 0
        %3553 = vmatpush.bf16.msra.mxu0 0
        %3554 = vmatpush.bf16.msra.mxu0 0
        %3555 = vmatpush.bf16.msra.mxu0 0
        %3556 = vmatpush.bf16.msra.mxu0 0
        %3557 = vmatpush.bf16.msra.mxu0 0
        %3558 = vmatpush.bf16.msra.mxu0 %v3512
        %3559 = vmatmul.bf16.gmra.mxu0 %v3535
        %v3560 = vpop.f32.mrf.mxu0
        %v3561 = vadd.f32 %v3522, %v3560
        %v3562 = vpop.f32.mrf.mxu0
        %v3563 = vadd.f32 %v3527, %v3562
        %3564 = vdwg.mxu0
        %3565 = vmatpush.bf16.msra.mxu0 0
        %3566 = vmatpush.bf16.msra.mxu0 0
        %3567 = vmatpush.bf16.msra.mxu0 0
        %3568 = vmatpush.bf16.msra.mxu0 0
        %3569 = vmatpush.bf16.msra.mxu0 0
        %3570 = vmatpush.bf16.msra.mxu0 0
        %3571 = vmatpush.bf16.msra.mxu0 0
        %3572 = vmatpush.bf16.msra.mxu0 %v3513
        %3573 = vmatmul.bf16.gmra.mxu0 %v3535
        %v3574 = vpop.f32.mrf.mxu0
        %v3575 = vadd.f32 %v3522, %v3574
        %v3576 = vpop.f32.mrf.mxu0
        %v3577 = vadd.f32 %v3527, %v3576
        %3578 = vdwg.mxu0
        %3579 = vmatpush.bf16.msra.mxu0 0
        %3580 = vmatpush.bf16.msra.mxu0 0
        %3581 = vmatpush.bf16.msra.mxu0 0
        %3582 = vmatpush.bf16.msra.mxu0 0
        %3583 = vmatpush.bf16.msra.mxu0 0
        %3584 = vmatpush.bf16.msra.mxu0 0
        %3585 = vmatpush.bf16.msra.mxu0 0
        %3586 = vmatpush.bf16.msra.mxu0 %v3514
        %3587 = vmatmul.bf16.gmra.mxu0 %v3535
        %v3588 = vpop.f32.mrf.mxu0
        %v3589 = vadd.f32 %v3522, %v3588
        %v3590 = vpop.f32.mrf.mxu0
        %v3591 = vadd.f32 %v3527, %v3590
        %3592 = vdwg.mxu0
        %v3593 = vsub.f32 0.0, %v3547
        %v3594 = vsub.f32 0.0, %v3561
        %v3595 = vsub.f32 0.0, %v3575
        %v3596 = vsub.f32 0.0, %v3589
        %v3597 = vsub.f32 0.0, %v3549
        %v3598 = vsub.f32 0.0, %v3563
        %v3599 = vsub.f32 0.0, %v3577
        %v3600 = vsub.f32 0.0, %v3591
        %v3601 = vmul.f32 %v3593, 1.442695
        %v3602 = vpow.pop %v3601
        %v3603 = vmul.f32 %v3594, 1.442695
        %v3604 = vpow.pop %v3603
        %v3605 = vmul.f32 %v3595, 1.442695
        %v3606 = vpow.pop %v3605
        %v3607 = vmul.f32 %v3596, 1.442695
        %v3608 = vpow.pop %v3607
        %v3609 = vmul.f32 %v3597, 1.442695
        %v3610 = vpow.pop %v3609
        %v3611 = vmul.f32 %v3598, 1.442695
        %v3612 = vpow.pop %v3611
        %v3613 = vmul.f32 %v3599, 1.442695
        %v3614 = vpow.pop %v3613
        %v3615 = vmul.f32 %v3600, 1.442695
        %v3616 = vpow.pop %v3615
        %v3617 = vadd.f32 %v3602, 1.0
        %v3618 = vadd.f32 %v3604, 1.0
        %v3619 = vadd.f32 %v3606, 1.0
        %v3620 = vadd.f32 %v3608, 1.0
        %v3621 = vadd.f32 %v3610, 1.0
        %v3622 = vadd.f32 %v3612, 1.0
        %v3623 = vadd.f32 %v3614, 1.0
        %v3624 = vadd.f32 %v3616, 1.0
        %v3625 = vrcp.pop %v3617
        %v3626 = vmul.f32 %v3617, %v3625
        %v3627 = vsub.f32 1.0, %v3626
        %v3628 = vmul.f32 %v3625, %v3627
        %v3629 = vadd.f32 %v3625, %v3628
        %vm3630 = vweird.f32 %v3617
        %vm3631 = vweird.f32 %v3625
        %vm3632 = vmor %vm3630, %vm3631
        %v3633 = vsel %vm3632, %v3625, %v3629
        %v3634 = vand.u32 2147483647, %v3617
        %vm3635 = vcmp.eq.f32.partialorder %v3634, 8.507059e+37
        %v3636 = vand.u32 %v3617, 2147483648
        %v3637 = vor.u32 1.1754944e-38, %v3636
        %v3638 = vsel %vm3635, %v3637, %v3633
        %v3639 = vmul.f32 1.0, %v3638
        %v3640 = vrcp.pop %v3618
        %v3641 = vmul.f32 %v3618, %v3640
        %v3642 = vsub.f32 1.0, %v3641
        %v3643 = vmul.f32 %v3640, %v3642
        %v3644 = vadd.f32 %v3640, %v3643
        %vm3645 = vweird.f32 %v3618
        %vm3646 = vweird.f32 %v3640
        %vm3647 = vmor %vm3645, %vm3646
        %v3648 = vsel %vm3647, %v3640, %v3644
        %v3649 = vand.u32 2147483647, %v3618
        %vm3650 = vcmp.eq.f32.partialorder %v3649, 8.507059e+37
        %v3651 = vand.u32 %v3618, 2147483648
        %v3652 = vor.u32 1.1754944e-38, %v3651
        %v3653 = vsel %vm3650, %v3652, %v3648
        %v3654 = vmul.f32 1.0, %v3653
        %v3655 = vrcp.pop %v3619
        %v3656 = vmul.f32 %v3619, %v3655
        %v3657 = vsub.f32 1.0, %v3656
        %v3658 = vmul.f32 %v3655, %v3657
        %v3659 = vadd.f32 %v3655, %v3658
        %vm3660 = vweird.f32 %v3619
        %vm3661 = vweird.f32 %v3655
        %vm3662 = vmor %vm3660, %vm3661
        %v3663 = vsel %vm3662, %v3655, %v3659
        %v3664 = vand.u32 2147483647, %v3619
        %vm3665 = vcmp.eq.f32.partialorder %v3664, 8.507059e+37
        %v3666 = vand.u32 %v3619, 2147483648
        %v3667 = vor.u32 1.1754944e-38, %v3666
        %v3668 = vsel %vm3665, %v3667, %v3663
        %v3669 = vmul.f32 1.0, %v3668
        %v3670 = vrcp.pop %v3620
        %v3671 = vmul.f32 %v3620, %v3670
        %v3672 = vsub.f32 1.0, %v3671
        %v3673 = vmul.f32 %v3670, %v3672
        %v3674 = vadd.f32 %v3670, %v3673
        %vm3675 = vweird.f32 %v3620
        %vm3676 = vweird.f32 %v3670
        %vm3677 = vmor %vm3675, %vm3676
        %v3678 = vsel %vm3677, %v3670, %v3674
        %v3679 = vand.u32 2147483647, %v3620
        %vm3680 = vcmp.eq.f32.partialorder %v3679, 8.507059e+37
        %v3681 = vand.u32 %v3620, 2147483648
        %v3682 = vor.u32 1.1754944e-38, %v3681
        %v3683 = vsel %vm3680, %v3682, %v3678
        %v3684 = vmul.f32 1.0, %v3683
        %v3685 = vrcp.pop %v3621
        %v3686 = vmul.f32 %v3621, %v3685
        %v3687 = vsub.f32 1.0, %v3686
        %v3688 = vmul.f32 %v3685, %v3687
        %v3689 = vadd.f32 %v3685, %v3688
        %vm3690 = vweird.f32 %v3621
        %vm3691 = vweird.f32 %v3685
        %vm3692 = vmor %vm3690, %vm3691
        %v3693 = vsel %vm3692, %v3685, %v3689
        %v3694 = vand.u32 2147483647, %v3621
        %vm3695 = vcmp.eq.f32.partialorder %v3694, 8.507059e+37
        %v3696 = vand.u32 %v3621, 2147483648
        %v3697 = vor.u32 1.1754944e-38, %v3696
        %v3698 = vsel %vm3695, %v3697, %v3693
        %v3699 = vmul.f32 1.0, %v3698
        %v3700 = vrcp.pop %v3622
        %v3701 = vmul.f32 %v3622, %v3700
        %v3702 = vsub.f32 1.0, %v3701
        %v3703 = vmul.f32 %v3700, %v3702
        %v3704 = vadd.f32 %v3700, %v3703
        %vm3705 = vweird.f32 %v3622
        %vm3706 = vweird.f32 %v3700
        %vm3707 = vmor %vm3705, %vm3706
        %v3708 = vsel %vm3707, %v3700, %v3704
        %v3709 = vand.u32 2147483647, %v3622
        %vm3710 = vcmp.eq.f32.partialorder %v3709, 8.507059e+37
        %v3711 = vand.u32 %v3622, 2147483648
        %v3712 = vor.u32 1.1754944e-38, %v3711
        %v3713 = vsel %vm3710, %v3712, %v3708
        %v3714 = vmul.f32 1.0, %v3713
        %v3715 = vrcp.pop %v3623
        %v3716 = vmul.f32 %v3623, %v3715
        %v3717 = vsub.f32 1.0, %v3716
        %v3718 = vmul.f32 %v3715, %v3717
        %v3719 = vadd.f32 %v3715, %v3718
        %vm3720 = vweird.f32 %v3623
        %vm3721 = vweird.f32 %v3715
        %vm3722 = vmor %vm3720, %vm3721
        %v3723 = vsel %vm3722, %v3715, %v3719
        %v3724 = vand.u32 2147483647, %v3623
        %vm3725 = vcmp.eq.f32.partialorder %v3724, 8.507059e+37
        %v3726 = vand.u32 %v3623, 2147483648
        %v3727 = vor.u32 1.1754944e-38, %v3726
        %v3728 = vsel %vm3725, %v3727, %v3723
        %v3729 = vmul.f32 1.0, %v3728
        %v3730 = vrcp.pop %v3624
        %v3731 = vmul.f32 %v3624, %v3730
        %v3732 = vsub.f32 1.0, %v3731
        %v3733 = vmul.f32 %v3730, %v3732
        %v3734 = vadd.f32 %v3730, %v3733
        %vm3735 = vweird.f32 %v3624
        %vm3736 = vweird.f32 %v3730
        %vm3737 = vmor %vm3735, %vm3736
        %v3738 = vsel %vm3737, %v3730, %v3734
        %v3739 = vand.u32 2147483647, %v3624
        %vm3740 = vcmp.eq.f32.partialorder %v3739, 8.507059e+37
        %v3741 = vand.u32 %v3624, 2147483648
        %v3742 = vor.u32 1.1754944e-38, %v3741
        %v3743 = vsel %vm3740, %v3742, %v3738
        %v3744 = vmul.f32 1.0, %v3743
        %v3745 = vmul.f32 %v3547, %v3639
        %v3746 = vmul.f32 %v3561, %v3654
        %v3747 = vmul.f32 %v3575, %v3669
        %v3748 = vmul.f32 %v3589, %v3684
        %v3749 = vmul.f32 %v3549, %v3699
        %v3750 = vmul.f32 %v3563, %v3714
        %v3751 = vmul.f32 %v3577, %v3729
        %v3752 = vmul.f32 %v3591, %v3744
        %v3753 = vld [vmem:[%s18] sm:$0xff]
        %v3754 = vld [vmem:[%s18 + $0x8] sm:$0xff]
        %3756 = vset.pattern.permute.xlu0 0
        %3757 = vperm.xlu0 %3756, %v3753
        %v3758 = vpop.permute.xlu0 %3757
        %3761 = vset.pattern.permute.xlu0 0
        %3762 = vperm.xlu0 %3761, %v3754
        %v3763 = vpop.permute.xlu0 %3762
        %v3765 = vmul.f32 %v3745, %v3758
        %v3766 = vmul.f32 %v3746, %v3758
        %v3767 = vmul.f32 %v3747, %v3758
        %v3768 = vmul.f32 %v3748, %v3758
        %v3769 = vmul.f32 %v3749, %v3763
        %v3770 = vmul.f32 %v3750, %v3763
        %v3771 = vmul.f32 %v3751, %v3763
        %v3772 = vmul.f32 %v3752, %v3763
        %v3773 = vld [vmem:[%s19] sm:$0xff]
        %v3774 = vld [vmem:[%s19 + $0x8] sm:$0xff]
        %3776 = vset.pattern.permute.xlu0 0
        %3777 = vperm.xlu0 %3776, %v3773
        %v3778 = vpop.permute.xlu0 %3777
        %3781 = vset.pattern.permute.xlu0 0
        %3782 = vperm.xlu0 %3781, %v3774
        %v3783 = vpop.permute.xlu0 %3782
        %v3785 = vadd.f32 %v3765, %v3778
        %v3786 = vadd.f32 %v3766, %v3778
        %v3787 = vadd.f32 %v3767, %v3778
        %v3788 = vadd.f32 %v3768, %v3778
        %v3789 = vadd.f32 %v3769, %v3783
        %v3790 = vadd.f32 %v3770, %v3783
        %v3791 = vadd.f32 %v3771, %v3783
        %v3792 = vadd.f32 %v3772, %v3783
        %v3793 = vmax.f32 %v3785, 0.0
        %v3794 = vmax.f32 %v3786, 0.0
        %v3795 = vmax.f32 %v3787, 0.0
        %v3796 = vmax.f32 %v3788, 0.0
        %v3797 = vmax.f32 %v3789, 0.0
        %v3798 = vmax.f32 %v3790, 0.0
        %v3799 = vmax.f32 %v3791, 0.0
        %v3800 = vmax.f32 %v3792, 0.0
        %3801 = vst [vmem:[%s668] sm:$0xff] %v3793
        %3802 = vst [vmem:[%s668 + $0x8] sm:$0xff] %v3794
        %3803 = vst [vmem:[%s668 + $0x10] sm:$0xff] %v3795
        %3804 = vst [vmem:[%s668 + $0x18] sm:$0xff] %v3796
        %3805 = vst [vmem:[%s668 + $0x20] sm:$0xff] %v3797
        %3806 = vst [vmem:[%s668 + $0x28] sm:$0xff] %v3798
        %3807 = vst [vmem:[%s668 + $0x30] sm:$0xff] %v3799
        %3808 = vst [vmem:[%s668 + $0x38] sm:$0xff] %v3800
        %s3809 = sand.u32 %s473, 1
        %s3810 = scalar_lea.sflag [#allocation7], %s3809
        %s3811 = sand.u32 %s473, 1
        %s3812 = smul.addr %s3811, 64
        %s3813 = scalar_lea.vmem [#allocation10], %s3812
        // Predicated region
        $region109: #{tpu_custom_call.1} parent=99 // pred_check
          %p3814 = pneg %p483
        $region110: #{tpu_custom_call.1} parent=99 // pred_check_branch
          %3816 = sbr.rel (%p3814) target = $region112
        $region111: #{tpu_custom_call.1} parent=99 // pred_region
          %3818 = vsyncadd %s3810, 0
          %s3819 = smul.addr %s40, 8
          %s3820 = smul.addr %s3819, 8
          %s3821 = scalar_lea.hbm %s20, %s3820
          %s3822 = sshll.u32 %s3813, 4
          %s3823 = int_to_ptr.vmem [resolvable:$true] %s3822
          %s3824 = sshll.u32 %s3821, 4
          %s3825 = int_to_ptr.hbm [resolvable:$true] %s3824
          %3830 = dma.vmem_to_hbm [thread:$0]  %s3823, 1024, %s3825, %s3810, 512, 512, 32
        $region112: #{tpu_custom_call.1} parent=99 // pred_fallthru
          _
      $region100: #{tpu_custom_call.1} parent=5 // pred_fallthru
        _
      %p3831 = scmp.le.s32.totalorder 2, %s35
      // Predicated region
      $region113: #{tpu_custom_call.1} parent=5 // pred_check
        %p3832 = pneg %p3831
      $region114: #{tpu_custom_call.1} parent=5 // pred_check_branch
        %3834 = sbr.rel (%p3832) target = $region116
      $region115: #{tpu_custom_call.1} parent=5 // pred_region
        %s3835 = ssub.s32 %s35, 2
        // Predicated region
        $region117: #{tpu_custom_call.1} parent=115 // pred_check
          %p3836 = pneg %p489
        $region118: #{tpu_custom_call.1} parent=115 // pred_check_branch
          %3838 = sbr.rel (%p3836) target = $region120
        $region119: #{tpu_custom_call.1} parent=115 // pred_region
          %s3839 = sand.u32 %s474, 1
          %s3840 = scalar_lea.sflag [#allocation7], %s3839
          %s3841 = sand.u32 %s474, 1
          %s3842 = smul.addr %s3841, 64
          %s3843 = scalar_lea.vmem [#allocation10], %s3842
          %3845 = dma.done %s3840, 1024
        $region120: #{tpu_custom_call.1} parent=115 // pred_fallthru
          _
      $region116: #{tpu_custom_call.1} parent=5 // pred_fallthru
        _
    $region6: #{tpu_custom_call.1} parent=1 // loop_footer
      %s39 = sadd.s32 1, %s35
    $region7: #{tpu_custom_call.1} parent=1 // loop_footer_branch
      %34 = sbr.rel target = $region3
    $region8: #{tpu_custom_call.1} parent=1 // loop_exit
      _
    %3846 = vsyncpa [#allocation6], 1
    %s3847 = scalar_lea.sflag [#allocation6], 1
    %3848 = vsyncpa %s3847, 1
    %3849 = vsyncpa [#allocation9], 1
    %3850 = vsyncpa [#allocation7], 1
    %s3851 = scalar_lea.sflag [#allocation7], 1
    %3852 = vsyncpa %s3851, 1

</llo_original>
